<compile_context>
chip_gen: v7x
topology: tpu7x:2x2x1
jax: 0.10.0
libtpu: 0.0.40
codegen_flags: <defaults>
</compile_context>

<pallas_src>
import jax
import jax.numpy as jnp
from jax import lax
from jax.experimental import pallas as pl
from jax.experimental.pallas import tpu as pltpu


def bottleneck_kernel(x_ref, halo_ref, w1_ref, s1_ref, b1_ref,
                      w2_ref, s2_ref, b2_ref, w3_ref, s3_ref, b3_ref,
                      out_ref, h1p_ref):
    hb = pl.program_id(1)
    n_hb = pl.num_programs(1)

    TH = x_ref.shape[1]          # rows in this tile
    W = x_ref.shape[2]
    P = w1_ref.shape[1]          # planes

    def conv1_bn_relu(rows_bf16):                       # (R, W, Cin) bf16 -> (R, W, P) f32
        y = jnp.einsum('hwc,cp->hwp', rows_bf16, w1_ref[...],
                       preferred_element_type=jnp.float32)
        return jnp.maximum(y * s1_ref[...] + b1_ref[...], 0.0)

    # ---- conv1 (1x1) + bn1 + relu on the TH centre rows ---------------------
    h1 = conv1_bn_relu(x_ref[0].astype(jnp.bfloat16))   # (TH, W, P) f32
    h1p_ref[pl.ds(1, TH)] = h1.astype(h1p_ref.dtype)    # aligned interior store

    # ---- halo rows: one 2-row conv1 matmul; rows outside the image are forced
    # to zero, so the 3x3 conv's zero padding applies to the conv1 *output*,
    # exactly as in the PyTorch module -----------------------------------------
    halo = conv1_bn_relu(halo_ref[0, 0].astype(jnp.bfloat16))   # (2, W, P)
    top_valid = (hb > 0).astype(jnp.float32)
    bot_valid = (hb < n_hb - 1).astype(jnp.float32)
    h1p_ref[0] = (halo[0] * top_valid).astype(h1p_ref.dtype)
    h1p_ref[TH + 1] = (halo[1] * bot_valid).astype(h1p_ref.dtype)

    # ---- conv2 (3x3, stride=1, pad=1): 9 accumulated MXU matmuls (K = P) -----
    # dy shifts = row-contiguous slices of the H-padded scratch; the dx = +-1
    # column shift is realised once as two zero-filled shifted slabs.
    # TODO(synk): on v5e a dy-grouped K=3P variant would fill the 128-deep MXU
    #             better for small P, at the cost of a 3P-wide temporary.
    h1p = h1p_ref[...]                                  # (TH+2, W, P) bf16
    zcol = jnp.zeros((TH + 2, 1, P), h1p.dtype)
    slab_l = jnp.concatenate([zcol, h1p[:, :W - 1, :]], axis=1)  # col w -> h1p col w-1
    slab_r = jnp.concatenate([h1p[:, 1:, :], zcol], axis=1)      # col w -> h1p col w+1
    slabs = (slab_l, h1p, slab_r)                                # dx = 0, 1, 2

    acc = None
    for dy in range(3):
        for dx in range(3):
            t = jnp.einsum('hwp,pq->hwq', slabs[dx][dy:dy + TH],
                           w2_ref[3 * dy + dx],
                           preferred_element_type=jnp.float32)
            acc = t if acc is None else acc + t
    h2 = jnp.maximum(acc * s2_ref[...] + b2_ref[...], 0.0).astype(jnp.bfloat16)

    # ---- conv3 (1x1) + bn3 ---------------------------------------------------
    h3 = jnp.einsum('hwc,cp->hwp', h2, w3_ref[...],
                    preferred_element_type=jnp.float32)
    h3 = h3 * s3_ref[...] + b3_ref[...]

    # ---- identity residual (downsample=None) + final relu --------------------
    res = x_ref[0].astype(jnp.float32)                  # lazy re-read of the tile
    out_ref[0] = jnp.maximum(h3 + res, 0.0).astype(out_ref.dtype)


def _vmem_budget_and_limit():
    """Generation-aware VMEM sizing: budget = 3/8 of physical VMEM (48 MiB on
    v5e/v6e's 128 MiB, 24 MiB on v7x's 64 MiB/TC); vmem_limit = half of it."""
    try:
        cap = int(pltpu.get_tpu_info().vmem_capacity_bytes)
    except Exception:
        cap = 64 * 1024 * 1024          # conservative: v7x per-TensorCore VMEM
    return (cap * 3) // 8, cap // 2


def _choose_h_tile(H, W, cin, cout, planes, act_itemsize, budget_bytes):
    """Largest divisor of H whose per-block VMEM footprint fits budget_bytes.
    Counts double-buffered activation tiles (in/out/halo), single-buffered
    weight & BN blocks, the conv2 scratch and the dominant temporaries."""
    weights = ((cin * planes + 9 * planes * planes + planes * cout) * 2  # bf16 conv weights
               + (4 * planes + 2 * cout) * 4)                            # f32 BN scale/bias

    def footprint(th):
        act = 2 * (th * W * (cin + cout) + 2 * W * cin) * act_itemsize   # dbl-buffered tiles
        scratch = (th + 2) * W * planes * 2                              # bf16 conv1 output
        temps = (th * W * planes * 4 * 2            # h1 + conv2 accumulator (f32)
                 + 2 * (th + 2) * W * planes * 2    # dx-shifted bf16 slabs
                 + th * W * planes * 2              # h2 (bf16)
                 + th * W * cout * 4 * 2)           # h3 + residual (f32)
        return weights + act + scratch + temps

    for th in sorted((d for d in range(1, H + 1) if H % d == 0), reverse=True):
        if footprint(th) <= budget_bytes:
            return th
    return 1


def bottleneck_pallas_nhwc(x, params, h_tile=None):
    """NHWC Bottleneck forward.  params = (w1, w2, w3, s1, b1, s2, b2, s3, b3):
    w1 (Cin, P), w2 (3, 3, P, P) HWIO, w3 (P, Cout), scales/biases (1, C) f32."""
    w1, w2, w3, s1, b1, s2, b2, s3, b3 = params
    N, H, W, Cin = x.shape
    P = w1.shape[1]
    Cout = w3.shape[1]
    assert Cin == Cout, "identity residual requires inplanes == planes*expansion"

    budget, vmem_limit = _vmem_budget_and_limit()
    if h_tile is None:
        h_tile = _choose_h_tile(H, W, Cin, Cout, P, x.dtype.itemsize, budget)
    assert H % h_tile == 0, "h_tile must divide H"
    TH = h_tile
    nH = H // TH

    # bf16 MXU operands; BN scale/bias stay f32 for the VPU epilogue.
    w1b = w1.astype(jnp.bfloat16)
    w2b = w2.astype(jnp.bfloat16).reshape(9, P, P)        # tap index = 3*dy + dx
    w3b = w3.astype(jnp.bfloat16)

    # Halo rows for the 3x3 conv: block h needs x rows h*TH-1 and (h+1)*TH.
    zrow = jnp.zeros((N, 1, W, Cin), x.dtype)
    tops = jnp.concatenate([zrow, x[:, TH - 1:H - 1:TH]], axis=1)   # (N, nH, W, Cin)
    bots = jnp.concatenate([x[:, TH:H:TH], zrow], axis=1)           # (N, nH, W, Cin)
    halos = jnp.stack([tops, bots], axis=2)                         # (N, nH, 2, W, Cin)

    flops = 2 * N * H * W * (Cin * P + 9 * P * P + P * Cout)
    bytes_accessed = (
        x.size * x.dtype.itemsize
        + N * H * W * Cout * x.dtype.itemsize
        + halos.size * halos.dtype.itemsize
        + sum(int(a.size) * a.dtype.itemsize
              for a in (w1b, w2b, w3b, s1, b1, s2, b2, s3, b3)))

    def call(single_buffer_weights):
        if single_buffer_weights and hasattr(pl, "Buffered"):
            def const_spec(shape):
                return pl.BlockSpec(shape, lambda n, h: (0,) * len(shape),
                                    pipeline_mode=pl.Buffered(1))
        else:
            def const_spec(shape):
                return pl.BlockSpec(shape, lambda n, h: (0,) * len(shape))

        grid_spec = pltpu.PrefetchScalarGridSpec(
            num_scalar_prefetch=0,
            grid=(N, nH),
            in_specs=[
                pl.BlockSpec((1, TH, W, Cin), lambda n, h: (n, h, 0, 0)),
                pl.BlockSpec((1, 1, 2, W, Cin), lambda n, h: (n, h, 0, 0, 0)),
                const_spec(w1b.shape), const_spec(s1.shape), const_spec(b1.shape),
                const_spec(w2b.shape), const_spec(s2.shape), const_spec(b2.shape),
                const_spec(w3b.shape), const_spec(s3.shape), const_spec(b3.shape),
            ],
            out_specs=pl.BlockSpec((1, TH, W, Cout), lambda n, h: (n, h, 0, 0)),
            scratch_shapes=[pltpu.VMEM((TH + 2, W, P), jnp.bfloat16)],
        )
        return pl.pallas_call(
            bottleneck_kernel,
            out_shape=jax.ShapeDtypeStruct((N, H, W, Cout), x.dtype),
            grid_spec=grid_spec,
            compiler_params=pltpu.CompilerParams(
                dimension_semantics=("parallel", "parallel"),
                vmem_limit_bytes=vmem_limit),
            cost_estimate=pl.CostEstimate(flops=flops, transcendentals=0,
                                          bytes_accessed=bytes_accessed),
        )(x, halos, w1b, s1, b1, w2b, s2, b2, w3b, s3, b3)

    try:
        return call(True)
    except Exception:
        # Fallback for jax versions where single-buffered (pl.Buffered(1))
        # weight blocks are rejected; genuine bugs re-raise on this attempt.
        return call(False)


def bottleneck_pallas(x_nchw, params, h_tile=None):
    """NCHW wrapper matching the PyTorch module's layout."""
    # TODO(synk): keep activations NHWC end-to-end across the network so these
    # two transposes (full HBM round trips) disappear.
    x = jnp.transpose(x_nchw, (0, 2, 3, 1))
    out = bottleneck_pallas_nhwc(x, params, h_tile=h_tile)
    return jnp.transpose(out, (0, 3, 1, 2))


def fold_bn(gamma, beta, mean, var, eps=1e-5):
    scale = gamma / jnp.sqrt(var + eps)
    bias = beta - mean * scale
    return scale.reshape(1, -1), bias.reshape(1, -1)


def bottleneck_reference(x_nchw, params):
    """Pure-JAX reference mirroring the kernel's bf16-operand / f32-accumulate
    numerics (folded-BN, eval-mode, identity residual)."""
    w1, w2, w3, s1, b1, s2, b2, s3, b3 = params
    x = jnp.transpose(x_nchw, (0, 2, 3, 1))
    xb = x.astype(jnp.bfloat16)
    h1 = jnp.einsum('nhwc,cp->nhwp', xb, w1.astype(jnp.bfloat16),
                    preferred_element_type=jnp.float32)
    h1 = jnp.maximum(h1 * s1 + b1, 0.0).astype(jnp.bfloat16)
    h1c = lax.conv_general_dilated(
        h1, w2.astype(jnp.bfloat16), window_strides=(1, 1), padding='SAME',
        dimension_numbers=('NHWC', 'HWIO', 'NHWC'),
        preferred_element_type=jnp.float32)
    h2 = jnp.maximum(h1c * s2 + b2, 0.0).astype(jnp.bfloat16)
    h3 = jnp.einsum('nhwc,cp->nhwp', h2, w3.astype(jnp.bfloat16),
                    preferred_element_type=jnp.float32)
    h3 = h3 * s3 + b3
    out = jnp.maximum(h3 + x.astype(jnp.float32), 0.0)
    return jnp.transpose(out, (0, 3, 1, 2)).astype(x_nchw.dtype)


if __name__ == "__main__":
    # Bottleneck(inplanes=16, planes=4): identity residual (16 == 4*4).
    N, H, W = 2, 16, 16
    inplanes, planes = 16, 4
    expansion = 4
    outplanes = planes * expansion

    key = jax.random.PRNGKey(0)
    ks = jax.random.split(key, 16)

    x = jax.random.normal(ks[0], (N, inplanes, H, W), jnp.float32)   # NCHW input

    # Conv weights stored channels-last (equivalent to the transposed PyTorch
    # conv1 (P,Cin,1,1), conv2 (P,P,3,3), conv3 (4P,P,1,1) weights).
    w1 = jax.random.normal(ks[1], (inplanes, planes), jnp.float32) * 0.1
    w2 = jax.random.normal(ks[2], (3, 3, planes, planes), jnp.float32) * 0.1
    w3 = jax.random.normal(ks[3], (planes, outplanes), jnp.float32) * 0.1

    def bn_params(kg, kb, km, kv, c):
        gamma = 1.0 + 0.1 * jax.random.normal(kg, (c,), jnp.float32)
        beta = 0.1 * jax.random.normal(kb, (c,), jnp.float32)
        mean = 0.1 * jax.random.normal(km, (c,), jnp.float32)
        var = jnp.abs(jax.random.normal(kv, (c,), jnp.float32)) + 0.5
        return fold_bn(gamma, beta, mean, var)

    s1, b1 = bn_params(ks[4], ks[5], ks[6], ks[7], planes)
    s2, b2 = bn_params(ks[8], ks[9], ks[10], ks[11], planes)
    s3, b3 = bn_params(ks[12], ks[13], ks[14], ks[15], outplanes)

    params = (w1, w2, w3, s1, b1, s2, b2, s3, b3)

    # h_tile=8 -> grid (2, 2): exercises both interior and boundary halo paths.
    out = jax.block_until_ready(bottleneck_pallas(x, params, h_tile=8))
    ref = jax.block_until_ready(bottleneck_reference(x, params))

    assert out.shape == (N, outplanes, H, W)
    err = float(jnp.max(jnp.abs(out - ref)))
    assert jnp.allclose(out, ref, atol=2e-2, rtol=2e-2), f"max abs err = {err}"

    print("KERNEL_OK")
</pallas_src>

<mosaic_0001>
module attributes {stable_mosaic.version = 11 : i64} {
  func.func @bottleneck_kernel(%arg0: i32, %arg1: i32, %arg2: memref<1x8x16x16xf32, #tpu.memory_space<vmem>>, %arg3: memref<1x1x2x16x16xf32, #tpu.memory_space<vmem>>, %arg4: memref<16x4xbf16, #tpu.memory_space<vmem>>, %arg5: memref<1x4xf32, #tpu.memory_space<vmem>>, %arg6: memref<1x4xf32, #tpu.memory_space<vmem>>, %arg7: memref<9x4x4xbf16, #tpu.memory_space<vmem>>, %arg8: memref<1x4xf32, #tpu.memory_space<vmem>>, %arg9: memref<1x4xf32, #tpu.memory_space<vmem>>, %arg10: memref<4x16xbf16, #tpu.memory_space<vmem>>, %arg11: memref<1x16xf32, #tpu.memory_space<vmem>>, %arg12: memref<1x16xf32, #tpu.memory_space<vmem>>, %arg13: memref<1x8x16x16xf32, #tpu.memory_space<vmem>>, %arg14: memref<10x16x4xbf16, #tpu.memory_space<vmem>>) attributes {dimension_semantics = [#tpu.dimension_semantics<parallel>, #tpu.dimension_semantics<parallel>], iteration_bounds = array<i64: 2, 2>, scalar_prefetch = 0 : i64, scratch_operands = 1 : i64, tpu.core_type = #tpu.core_type<tc>, window_params = [{transform_indices = @transform_0, window_bounds = array<i64: 1, 8, 16, 16>}, {transform_indices = @transform_1, window_bounds = array<i64: 1, 1, 2, 16, 16>}, {pipeline_mode = #tpu.pipeline_mode<synchronous>, transform_indices = @transform_2, window_bounds = array<i64: 16, 4>}, {pipeline_mode = #tpu.pipeline_mode<synchronous>, transform_indices = @transform_3, window_bounds = array<i64: 1, 4>}, {pipeline_mode = #tpu.pipeline_mode<synchronous>, transform_indices = @transform_4, window_bounds = array<i64: 1, 4>}, {pipeline_mode = #tpu.pipeline_mode<synchronous>, transform_indices = @transform_5, window_bounds = array<i64: 9, 4, 4>}, {pipeline_mode = #tpu.pipeline_mode<synchronous>, transform_indices = @transform_6, window_bounds = array<i64: 1, 4>}, {pipeline_mode = #tpu.pipeline_mode<synchronous>, transform_indices = @transform_7, window_bounds = array<i64: 1, 4>}, {pipeline_mode = #tpu.pipeline_mode<synchronous>, transform_indices = @transform_8, window_bounds = array<i64: 4, 16>}, {pipeline_mode = #tpu.pipeline_mode<synchronous>, transform_indices = @transform_9, window_bounds = array<i64: 1, 16>}, {pipeline_mode = #tpu.pipeline_mode<synchronous>, transform_indices = @transform_10, window_bounds = array<i64: 1, 16>}, {transform_indices = @transform_11, window_bounds = array<i64: 1, 8, 16, 16>}]} {
    %c0 = arith.constant 0 : index
    %c0_0 = arith.constant 0 : index
    %c0_1 = arith.constant 0 : index
    %c0_2 = arith.constant 0 : index
    %0 = vector.load %arg2[%c0, %c0_0, %c0_1, %c0_2] : memref<1x8x16x16xf32, #tpu.memory_space<vmem>>, vector<1x8x16x16xf32>
    %1 = vector.shape_cast %0 : vector<1x8x16x16xf32> to vector<8x16x16xf32>
    %2 = arith.truncf %1 : vector<8x16x16xf32> to vector<8x16x16xbf16>
    %c0_3 = arith.constant 0 : index
    %c0_4 = arith.constant 0 : index
    %3 = vector.load %arg4[%c0_3, %c0_4] : memref<16x4xbf16, #tpu.memory_space<vmem>>, vector<16x4xbf16>
    "tpu.trace_start"() <{level = 10 : i32, message = "hwc,cp->hwp"}> : () -> ()
    %cst = arith.constant dense<0.000000e+00> : vector<8x16x4xf32>
    %4 = tpu.matmul %2, %3, %cst {dimension_numbers = #tpu.dot_dimension_numbers<[2], [0], [0, 1], [1], [0, 0, 0, 1, 1, 1], [], []>} : vector<8x16x16xbf16>, vector<16x4xbf16>, vector<8x16x4xf32> -> vector<8x16x4xf32>
    "tpu.trace_stop"() : () -> ()
    %c0_5 = arith.constant 0 : index
    %c0_6 = arith.constant 0 : index
    %5 = vector.load %arg5[%c0_5, %c0_6] : memref<1x4xf32, #tpu.memory_space<vmem>>, vector<1x4xf32>
    %6 = vector.shape_cast %5 : vector<1x4xf32> to vector<1x1x4xf32>
    %7 = vector.broadcast %6 : vector<1x1x4xf32> to vector<8x16x4xf32>
    %8 = arith.mulf %4, %7 : vector<8x16x4xf32>
    %c0_7 = arith.constant 0 : index
    %c0_8 = arith.constant 0 : index
    %9 = vector.load %arg6[%c0_7, %c0_8] : memref<1x4xf32, #tpu.memory_space<vmem>>, vector<1x4xf32>
    %10 = vector.shape_cast %9 : vector<1x4xf32> to vector<1x1x4xf32>
    %11 = vector.broadcast %10 : vector<1x1x4xf32> to vector<8x16x4xf32>
    %12 = arith.addf %8, %11 : vector<8x16x4xf32>
    %cst_9 = arith.constant 0.000000e+00 : f32
    %13 = vector.broadcast %cst_9 : f32 to vector<8x16x4xf32>
    %14 = arith.maximumf %12, %13 : vector<8x16x4xf32>
    %15 = arith.truncf %14 : vector<8x16x4xf32> to vector<8x16x4xbf16>
    %c1 = arith.constant 1 : index
    %c0_10 = arith.constant 0 : index
    %c0_11 = arith.constant 0 : index
    %16 = vector.load %arg14[%c1, %c0_10, %c0_11] : memref<10x16x4xbf16, #tpu.memory_space<vmem>>, vector<8x16x4xbf16>
    tpu.vector_store %arg14[%c1, %c0_10, %c0_11], %15 {strides = array<i32>} : memref<10x16x4xbf16, #tpu.memory_space<vmem>>, vector<8x16x4xbf16>,
    %c0_12 = arith.constant 0 : index
    %c0_13 = arith.constant 0 : index
    %c0_14 = arith.constant 0 : index
    %c0_15 = arith.constant 0 : index
    %c0_16 = arith.constant 0 : index
    %17 = vector.load %arg3[%c0_12, %c0_13, %c0_14, %c0_15, %c0_16] : memref<1x1x2x16x16xf32, #tpu.memory_space<vmem>>, vector<1x1x2x16x16xf32>
    %18 = vector.shape_cast %17 : vector<1x1x2x16x16xf32> to vector<2x16x16xf32>
    %19 = arith.truncf %18 : vector<2x16x16xf32> to vector<2x16x16xbf16>
    %c0_17 = arith.constant 0 : index
    %c0_18 = arith.constant 0 : index
    %20 = vector.load %arg4[%c0_17, %c0_18] : memref<16x4xbf16, #tpu.memory_space<vmem>>, vector<16x4xbf16>
    "tpu.trace_start"() <{level = 10 : i32, message = "hwc,cp->hwp"}> : () -> ()
    %cst_19 = arith.constant dense<0.000000e+00> : vector<2x16x4xf32>
    %21 = tpu.matmul %19, %20, %cst_19 {dimension_numbers = #tpu.dot_dimension_numbers<[2], [0], [0, 1], [1], [0, 0, 0, 1, 1, 1], [], []>} : vector<2x16x16xbf16>, vector<16x4xbf16>, vector<2x16x4xf32> -> vector<2x16x4xf32>
    "tpu.trace_stop"() : () -> ()
    %c0_20 = arith.constant 0 : index
    %c0_21 = arith.constant 0 : index
    %22 = vector.load %arg5[%c0_20, %c0_21] : memref<1x4xf32, #tpu.memory_space<vmem>>, vector<1x4xf32>
    %23 = vector.shape_cast %22 : vector<1x4xf32> to vector<1x1x4xf32>
    %24 = vector.broadcast %23 : vector<1x1x4xf32> to vector<2x16x4xf32>
    %25 = arith.mulf %21, %24 : vector<2x16x4xf32>
    %c0_22 = arith.constant 0 : index
    %c0_23 = arith.constant 0 : index
    %26 = vector.load %arg6[%c0_22, %c0_23] : memref<1x4xf32, #tpu.memory_space<vmem>>, vector<1x4xf32>
    %27 = vector.shape_cast %26 : vector<1x4xf32> to vector<1x1x4xf32>
    %28 = vector.broadcast %27 : vector<1x1x4xf32> to vector<2x16x4xf32>
    %29 = arith.addf %25, %28 : vector<2x16x4xf32>
    %cst_24 = arith.constant 0.000000e+00 : f32
    %30 = vector.broadcast %cst_24 : f32 to vector<2x16x4xf32>
    %31 = arith.maximumf %29, %30 : vector<2x16x4xf32>
    %c0_i32 = arith.constant 0 : i32
    %32 = arith.cmpi sgt, %arg1, %c0_i32 : i32
    %33 = arith.extui %32 : i1 to i32
    %34 = arith.sitofp %33 : i32 to f32
    %c1_i32 = arith.constant 1 : i32
    %35 = arith.cmpi slt, %arg1, %c1_i32 : i32
    %36 = arith.extui %35 : i1 to i32
    %37 = arith.sitofp %36 : i32 to f32
    %38 = vector.extract_strided_slice %31 {offsets = [0, 0, 0], sizes = [1, 16, 4], strides = [1, 1, 1]} : vector<2x16x4xf32> to vector<1x16x4xf32>
    %39 = vector.shape_cast %38 : vector<1x16x4xf32> to vector<16x4xf32>
    %40 = vector.broadcast %34 : f32 to vector<16x4xf32>
    %41 = arith.mulf %39, %40 : vector<16x4xf32>
    %42 = arith.truncf %41 : vector<16x4xf32> to vector<16x4xbf16>
    %c0_25 = arith.constant 0 : index
    %c0_26 = arith.constant 0 : index
    %c0_27 = arith.constant 0 : index
    %43 = vector.load %arg14[%c0_25, %c0_26, %c0_27] : memref<10x16x4xbf16, #tpu.memory_space<vmem>>, vector<1x16x4xbf16>
    %44 = vector.shape_cast %43 : vector<1x16x4xbf16> to vector<16x4xbf16>
    %45 = vector.shape_cast %42 : vector<16x4xbf16> to vector<1x16x4xbf16>
    tpu.vector_store %arg14[%c0_25, %c0_26, %c0_27], %45 {strides = array<i32>} : memref<10x16x4xbf16, #tpu.memory_space<vmem>>, vector<1x16x4xbf16>,
    %46 = vector.extract_strided_slice %31 {offsets = [1, 0, 0], sizes = [1, 16, 4], strides = [1, 1, 1]} : vector<2x16x4xf32> to vector<1x16x4xf32>
    %47 = vector.shape_cast %46 : vector<1x16x4xf32> to vector<16x4xf32>
    %48 = vector.broadcast %37 : f32 to vector<16x4xf32>
    %49 = arith.mulf %47, %48 : vector<16x4xf32>
    %50 = arith.truncf %49 : vector<16x4xf32> to vector<16x4xbf16>
    %c9 = arith.constant 9 : index
    %c0_28 = arith.constant 0 : index
    %c0_29 = arith.constant 0 : index
    %51 = vector.load %arg14[%c9, %c0_28, %c0_29] : memref<10x16x4xbf16, #tpu.memory_space<vmem>>, vector<1x16x4xbf16>
    %52 = vector.shape_cast %51 : vector<1x16x4xbf16> to vector<16x4xbf16>
    %53 = vector.shape_cast %50 : vector<16x4xbf16> to vector<1x16x4xbf16>
    tpu.vector_store %arg14[%c9, %c0_28, %c0_29], %53 {strides = array<i32>} : memref<10x16x4xbf16, #tpu.memory_space<vmem>>, vector<1x16x4xbf16>,
    %c0_30 = arith.constant 0 : index
    %c0_31 = arith.constant 0 : index
    %c0_32 = arith.constant 0 : index
    %54 = vector.load %arg14[%c0_30, %c0_31, %c0_32] : memref<10x16x4xbf16, #tpu.memory_space<vmem>>, vector<10x16x4xbf16>
    %cst_33 = arith.constant 0.000000e+00 : bf16
    %55 = vector.broadcast %cst_33 : bf16 to vector<10x1x4xbf16>
    %56 = vector.extract_strided_slice %54 {offsets = [0, 0, 0], sizes = [10, 15, 4], strides = [1, 1, 1]} : vector<10x16x4xbf16> to vector<10x15x4xbf16>
    %57 = tpu.concatenate %55, %56 in 1 : vector<10x1x4xbf16>, vector<10x15x4xbf16> -> vector<10x16x4xbf16>
    %58 = vector.extract_strided_slice %54 {offsets = [0, 1, 0], sizes = [10, 15, 4], strides = [1, 1, 1]} : vector<10x16x4xbf16> to vector<10x15x4xbf16>
    %59 = tpu.concatenate %58, %55 in 1 : vector<10x15x4xbf16>, vector<10x1x4xbf16> -> vector<10x16x4xbf16>
    %60 = vector.extract_strided_slice %57 {offsets = [0, 0, 0], sizes = [8, 16, 4], strides = [1, 1, 1]} : vector<10x16x4xbf16> to vector<8x16x4xbf16>
    %c0_34 = arith.constant 0 : index
    %c0_35 = arith.constant 0 : index
    %c0_36 = arith.constant 0 : index
    %61 = vector.load %arg7[%c0_34, %c0_35, %c0_36] : memref<9x4x4xbf16, #tpu.memory_space<vmem>>, vector<1x4x4xbf16>
    %62 = vector.shape_cast %61 : vector<1x4x4xbf16> to vector<4x4xbf16>
    "tpu.trace_start"() <{level = 10 : i32, message = "hwp,pq->hwq"}> : () -> ()
    %cst_37 = arith.constant dense<0.000000e+00> : vector<8x16x4xf32>
    %63 = tpu.matmul %60, %62, %cst_37 {dimension_numbers = #tpu.dot_dimension_numbers<[2], [0], [0, 1], [1], [0, 0, 0, 1, 1, 1], [], []>} : vector<8x16x4xbf16>, vector<4x4xbf16>, vector<8x16x4xf32> -> vector<8x16x4xf32>
    "tpu.trace_stop"() : () -> ()
    %64 = vector.extract_strided_slice %54 {offsets = [0, 0, 0], sizes = [8, 16, 4], strides = [1, 1, 1]} : vector<10x16x4xbf16> to vector<8x16x4xbf16>
    %c1_38 = arith.constant 1 : index
    %c0_39 = arith.constant 0 : index
    %c0_40 = arith.constant 0 : index
    %65 = vector.load %arg7[%c1_38, %c0_39, %c0_40] : memref<9x4x4xbf16, #tpu.memory_space<vmem>>, vector<1x4x4xbf16>
    %66 = vector.shape_cast %65 : vector<1x4x4xbf16> to vector<4x4xbf16>
    "tpu.trace_start"() <{level = 10 : i32, message = "hwp,pq->hwq"}> : () -> ()
    %cst_41 = arith.constant dense<0.000000e+00> : vector<8x16x4xf32>
    %67 = tpu.matmul %64, %66, %cst_41 {dimension_numbers = #tpu.dot_dimension_numbers<[2], [0], [0, 1], [1], [0, 0, 0, 1, 1, 1], [], []>} : vector<8x16x4xbf16>, vector<4x4xbf16>, vector<8x16x4xf32> -> vector<8x16x4xf32>
    "tpu.trace_stop"() : () -> ()
    %68 = arith.addf %63, %67 : vector<8x16x4xf32>
    %69 = vector.extract_strided_slice %59 {offsets = [0, 0, 0], sizes = [8, 16, 4], strides = [1, 1, 1]} : vector<10x16x4xbf16> to vector<8x16x4xbf16>
    %c2 = arith.constant 2 : index
    %c0_42 = arith.constant 0 : index
    %c0_43 = arith.constant 0 : index
    %70 = vector.load %arg7[%c2, %c0_42, %c0_43] : memref<9x4x4xbf16, #tpu.memory_space<vmem>>, vector<1x4x4xbf16>
    %71 = vector.shape_cast %70 : vector<1x4x4xbf16> to vector<4x4xbf16>
    "tpu.trace_start"() <{level = 10 : i32, message = "hwp,pq->hwq"}> : () -> ()
    %cst_44 = arith.constant dense<0.000000e+00> : vector<8x16x4xf32>
    %72 = tpu.matmul %69, %71, %cst_44 {dimension_numbers = #tpu.dot_dimension_numbers<[2], [0], [0, 1], [1], [0, 0, 0, 1, 1, 1], [], []>} : vector<8x16x4xbf16>, vector<4x4xbf16>, vector<8x16x4xf32> -> vector<8x16x4xf32>
    "tpu.trace_stop"() : () -> ()
    %73 = arith.addf %68, %72 : vector<8x16x4xf32>
    %74 = vector.extract_strided_slice %57 {offsets = [1, 0, 0], sizes = [8, 16, 4], strides = [1, 1, 1]} : vector<10x16x4xbf16> to vector<8x16x4xbf16>
    %c3 = arith.constant 3 : index
    %c0_45 = arith.constant 0 : index
    %c0_46 = arith.constant 0 : index
    %75 = vector.load %arg7[%c3, %c0_45, %c0_46] : memref<9x4x4xbf16, #tpu.memory_space<vmem>>, vector<1x4x4xbf16>
    %76 = vector.shape_cast %75 : vector<1x4x4xbf16> to vector<4x4xbf16>
    "tpu.trace_start"() <{level = 10 : i32, message = "hwp,pq->hwq"}> : () -> ()
    %cst_47 = arith.constant dense<0.000000e+00> : vector<8x16x4xf32>
    %77 = tpu.matmul %74, %76, %cst_47 {dimension_numbers = #tpu.dot_dimension_numbers<[2], [0], [0, 1], [1], [0, 0, 0, 1, 1, 1], [], []>} : vector<8x16x4xbf16>, vector<4x4xbf16>, vector<8x16x4xf32> -> vector<8x16x4xf32>
    "tpu.trace_stop"() : () -> ()
    %78 = arith.addf %73, %77 : vector<8x16x4xf32>
    %79 = vector.extract_strided_slice %54 {offsets = [1, 0, 0], sizes = [8, 16, 4], strides = [1, 1, 1]} : vector<10x16x4xbf16> to vector<8x16x4xbf16>
    %c4 = arith.constant 4 : index
    %c0_48 = arith.constant 0 : index
    %c0_49 = arith.constant 0 : index
    %80 = vector.load %arg7[%c4, %c0_48, %c0_49] : memref<9x4x4xbf16, #tpu.memory_space<vmem>>, vector<1x4x4xbf16>
    %81 = vector.shape_cast %80 : vector<1x4x4xbf16> to vector<4x4xbf16>
    "tpu.trace_start"() <{level = 10 : i32, message = "hwp,pq->hwq"}> : () -> ()
    %cst_50 = arith.constant dense<0.000000e+00> : vector<8x16x4xf32>
    %82 = tpu.matmul %79, %81, %cst_50 {dimension_numbers = #tpu.dot_dimension_numbers<[2], [0], [0, 1], [1], [0, 0, 0, 1, 1, 1], [], []>} : vector<8x16x4xbf16>, vector<4x4xbf16>, vector<8x16x4xf32> -> vector<8x16x4xf32>
    "tpu.trace_stop"() : () -> ()
    %83 = arith.addf %78, %82 : vector<8x16x4xf32>
    %84 = vector.extract_strided_slice %59 {offsets = [1, 0, 0], sizes = [8, 16, 4], strides = [1, 1, 1]} : vector<10x16x4xbf16> to vector<8x16x4xbf16>
    %c5 = arith.constant 5 : index
    %c0_51 = arith.constant 0 : index
    %c0_52 = arith.constant 0 : index
    %85 = vector.load %arg7[%c5, %c0_51, %c0_52] : memref<9x4x4xbf16, #tpu.memory_space<vmem>>, vector<1x4x4xbf16>
    %86 = vector.shape_cast %85 : vector<1x4x4xbf16> to vector<4x4xbf16>
    "tpu.trace_start"() <{level = 10 : i32, message = "hwp,pq->hwq"}> : () -> ()
    %cst_53 = arith.constant dense<0.000000e+00> : vector<8x16x4xf32>
    %87 = tpu.matmul %84, %86, %cst_53 {dimension_numbers = #tpu.dot_dimension_numbers<[2], [0], [0, 1], [1], [0, 0, 0, 1, 1, 1], [], []>} : vector<8x16x4xbf16>, vector<4x4xbf16>, vector<8x16x4xf32> -> vector<8x16x4xf32>
    "tpu.trace_stop"() : () -> ()
    %88 = arith.addf %83, %87 : vector<8x16x4xf32>
    %89 = vector.extract_strided_slice %57 {offsets = [2, 0, 0], sizes = [8, 16, 4], strides = [1, 1, 1]} : vector<10x16x4xbf16> to vector<8x16x4xbf16>
    %c6 = arith.constant 6 : index
    %c0_54 = arith.constant 0 : index
    %c0_55 = arith.constant 0 : index
    %90 = vector.load %arg7[%c6, %c0_54, %c0_55] : memref<9x4x4xbf16, #tpu.memory_space<vmem>>, vector<1x4x4xbf16>
    %91 = vector.shape_cast %90 : vector<1x4x4xbf16> to vector<4x4xbf16>
    "tpu.trace_start"() <{level = 10 : i32, message = "hwp,pq->hwq"}> : () -> ()
    %cst_56 = arith.constant dense<0.000000e+00> : vector<8x16x4xf32>
    %92 = tpu.matmul %89, %91, %cst_56 {dimension_numbers = #tpu.dot_dimension_numbers<[2], [0], [0, 1], [1], [0, 0, 0, 1, 1, 1], [], []>} : vector<8x16x4xbf16>, vector<4x4xbf16>, vector<8x16x4xf32> -> vector<8x16x4xf32>
    "tpu.trace_stop"() : () -> ()
    %93 = arith.addf %88, %92 : vector<8x16x4xf32>
    %94 = vector.extract_strided_slice %54 {offsets = [2, 0, 0], sizes = [8, 16, 4], strides = [1, 1, 1]} : vector<10x16x4xbf16> to vector<8x16x4xbf16>
    %c7 = arith.constant 7 : index
    %c0_57 = arith.constant 0 : index
    %c0_58 = arith.constant 0 : index
    %95 = vector.load %arg7[%c7, %c0_57, %c0_58] : memref<9x4x4xbf16, #tpu.memory_space<vmem>>, vector<1x4x4xbf16>
    %96 = vector.shape_cast %95 : vector<1x4x4xbf16> to vector<4x4xbf16>
    "tpu.trace_start"() <{level = 10 : i32, message = "hwp,pq->hwq"}> : () -> ()
    %cst_59 = arith.constant dense<0.000000e+00> : vector<8x16x4xf32>
    %97 = tpu.matmul %94, %96, %cst_59 {dimension_numbers = #tpu.dot_dimension_numbers<[2], [0], [0, 1], [1], [0, 0, 0, 1, 1, 1], [], []>} : vector<8x16x4xbf16>, vector<4x4xbf16>, vector<8x16x4xf32> -> vector<8x16x4xf32>
    "tpu.trace_stop"() : () -> ()
    %98 = arith.addf %93, %97 : vector<8x16x4xf32>
    %99 = vector.extract_strided_slice %59 {offsets = [2, 0, 0], sizes = [8, 16, 4], strides = [1, 1, 1]} : vector<10x16x4xbf16> to vector<8x16x4xbf16>
    %c8 = arith.constant 8 : index
    %c0_60 = arith.constant 0 : index
    %c0_61 = arith.constant 0 : index
    %100 = vector.load %arg7[%c8, %c0_60, %c0_61] : memref<9x4x4xbf16, #tpu.memory_space<vmem>>, vector<1x4x4xbf16>
    %101 = vector.shape_cast %100 : vector<1x4x4xbf16> to vector<4x4xbf16>
    "tpu.trace_start"() <{level = 10 : i32, message = "hwp,pq->hwq"}> : () -> ()
    %cst_62 = arith.constant dense<0.000000e+00> : vector<8x16x4xf32>
    %102 = tpu.matmul %99, %101, %cst_62 {dimension_numbers = #tpu.dot_dimension_numbers<[2], [0], [0, 1], [1], [0, 0, 0, 1, 1, 1], [], []>} : vector<8x16x4xbf16>, vector<4x4xbf16>, vector<8x16x4xf32> -> vector<8x16x4xf32>
    "tpu.trace_stop"() : () -> ()
    %103 = arith.addf %98, %102 : vector<8x16x4xf32>
    %c0_63 = arith.constant 0 : index
    %c0_64 = arith.constant 0 : index
    %104 = vector.load %arg8[%c0_63, %c0_64] : memref<1x4xf32, #tpu.memory_space<vmem>>, vector<1x4xf32>
    %105 = vector.shape_cast %104 : vector<1x4xf32> to vector<1x1x4xf32>
    %106 = vector.broadcast %105 : vector<1x1x4xf32> to vector<8x16x4xf32>
    %107 = arith.mulf %103, %106 : vector<8x16x4xf32>
    %c0_65 = arith.constant 0 : index
    %c0_66 = arith.constant 0 : index
    %108 = vector.load %arg9[%c0_65, %c0_66] : memref<1x4xf32, #tpu.memory_space<vmem>>, vector<1x4xf32>
    %109 = vector.shape_cast %108 : vector<1x4xf32> to vector<1x1x4xf32>
    %110 = vector.broadcast %109 : vector<1x1x4xf32> to vector<8x16x4xf32>
    %111 = arith.addf %107, %110 : vector<8x16x4xf32>
    %cst_67 = arith.constant 0.000000e+00 : f32
    %112 = vector.broadcast %cst_67 : f32 to vector<8x16x4xf32>
    %113 = arith.maximumf %111, %112 : vector<8x16x4xf32>
    %114 = arith.truncf %113 : vector<8x16x4xf32> to vector<8x16x4xbf16>
    %c0_68 = arith.constant 0 : index
    %c0_69 = arith.constant 0 : index
    %115 = vector.load %arg10[%c0_68, %c0_69] : memref<4x16xbf16, #tpu.memory_space<vmem>>, vector<4x16xbf16>
    "tpu.trace_start"() <{level = 10 : i32, message = "hwc,cp->hwp"}> : () -> ()
    %cst_70 = arith.constant dense<0.000000e+00> : vector<8x16x16xf32>
    %116 = tpu.matmul %114, %115, %cst_70 {dimension_numbers = #tpu.dot_dimension_numbers<[2], [0], [0, 1], [1], [0, 0, 0, 1, 1, 1], [], []>} : vector<8x16x4xbf16>, vector<4x16xbf16>, vector<8x16x16xf32> -> vector<8x16x16xf32>
    "tpu.trace_stop"() : () -> ()
    %c0_71 = arith.constant 0 : index
    %c0_72 = arith.constant 0 : index
    %117 = vector.load %arg11[%c0_71, %c0_72] : memref<1x16xf32, #tpu.memory_space<vmem>>, vector<1x16xf32>
    %118 = vector.shape_cast %117 : vector<1x16xf32> to vector<1x1x16xf32>
    %119 = vector.broadcast %118 : vector<1x1x16xf32> to vector<8x16x16xf32>
    %120 = arith.mulf %116, %119 : vector<8x16x16xf32>
    %c0_73 = arith.constant 0 : index
    %c0_74 = arith.constant 0 : index
    %121 = vector.load %arg12[%c0_73, %c0_74] : memref<1x16xf32, #tpu.memory_space<vmem>>, vector<1x16xf32>
    %122 = vector.shape_cast %121 : vector<1x16xf32> to vector<1x1x16xf32>
    %123 = vector.broadcast %122 : vector<1x1x16xf32> to vector<8x16x16xf32>
    %124 = arith.addf %120, %123 : vector<8x16x16xf32>
    %c0_75 = arith.constant 0 : index
    %c0_76 = arith.constant 0 : index
    %c0_77 = arith.constant 0 : index
    %c0_78 = arith.constant 0 : index
    %125 = vector.load %arg2[%c0_75, %c0_76, %c0_77, %c0_78] : memref<1x8x16x16xf32, #tpu.memory_space<vmem>>, vector<1x8x16x16xf32>
    %126 = vector.shape_cast %125 : vector<1x8x16x16xf32> to vector<8x16x16xf32>
    %127 = arith.addf %124, %126 : vector<8x16x16xf32>
    %cst_79 = arith.constant 0.000000e+00 : f32
    %128 = vector.broadcast %cst_79 : f32 to vector<8x16x16xf32>
    %129 = arith.maximumf %127, %128 : vector<8x16x16xf32>
    %c0_80 = arith.constant 0 : index
    %c0_81 = arith.constant 0 : index
    %c0_82 = arith.constant 0 : index
    %c0_83 = arith.constant 0 : index
    %130 = vector.load %arg13[%c0_80, %c0_81, %c0_82, %c0_83] : memref<1x8x16x16xf32, #tpu.memory_space<vmem>>, vector<1x8x16x16xf32>
    %131 = vector.shape_cast %130 : vector<1x8x16x16xf32> to vector<8x16x16xf32>
    %132 = vector.shape_cast %129 : vector<8x16x16xf32> to vector<1x8x16x16xf32>
    tpu.vector_store %arg13[%c0_80, %c0_81, %c0_82, %c0_83], %132 {strides = array<i32>} : memref<1x8x16x16xf32, #tpu.memory_space<vmem>>, vector<1x8x16x16xf32>,
    return
  }
  func.func @transform_0(%arg0: i32, %arg1: i32) -> (i32, i32, i32, i32) {
    %c0_i32 = arith.constant 0 : i32
    %c0_i32_0 = arith.constant 0 : i32
    %c0_i32_1 = arith.constant 0 : i32
    return %arg0, %arg1, %c0_i32, %c0_i32_0 : i32, i32, i32, i32
  }
  func.func @transform_1(%arg0: i32, %arg1: i32) -> (i32, i32, i32, i32, i32) {
    %c0_i32 = arith.constant 0 : i32
    %c0_i32_0 = arith.constant 0 : i32
    %c0_i32_1 = arith.constant 0 : i32
    %c0_i32_2 = arith.constant 0 : i32
    return %arg0, %arg1, %c0_i32, %c0_i32_0, %c0_i32_1 : i32, i32, i32, i32, i32
  }
  func.func @transform_2(%arg0: i32, %arg1: i32) -> (i32, i32) {
    %c0_i32 = arith.constant 0 : i32
    %c0_i32_0 = arith.constant 0 : i32
    %c0_i32_1 = arith.constant 0 : i32
    return %c0_i32, %c0_i32_0 : i32, i32
  }
  func.func @transform_3(%arg0: i32, %arg1: i32) -> (i32, i32) {
    %c0_i32 = arith.constant 0 : i32
    %c0_i32_0 = arith.constant 0 : i32
    %c0_i32_1 = arith.constant 0 : i32
    return %c0_i32, %c0_i32_0 : i32, i32
  }
  func.func @transform_4(%arg0: i32, %arg1: i32) -> (i32, i32) {
    %c0_i32 = arith.constant 0 : i32
    %c0_i32_0 = arith.constant 0 : i32
    %c0_i32_1 = arith.constant 0 : i32
    return %c0_i32, %c0_i32_0 : i32, i32
  }
  func.func @transform_5(%arg0: i32, %arg1: i32) -> (i32, i32, i32) {
    %c0_i32 = arith.constant 0 : i32
    %c0_i32_0 = arith.constant 0 : i32
    %c0_i32_1 = arith.constant 0 : i32
    %c0_i32_2 = arith.constant 0 : i32
    return %c0_i32, %c0_i32_0, %c0_i32_1 : i32, i32, i32
  }
  func.func @transform_6(%arg0: i32, %arg1: i32) -> (i32, i32) {
    %c0_i32 = arith.constant 0 : i32
    %c0_i32_0 = arith.constant 0 : i32
    %c0_i32_1 = arith.constant 0 : i32
    return %c0_i32, %c0_i32_0 : i32, i32
  }
  func.func @transform_7(%arg0: i32, %arg1: i32) -> (i32, i32) {
    %c0_i32 = arith.constant 0 : i32
    %c0_i32_0 = arith.constant 0 : i32
    %c0_i32_1 = arith.constant 0 : i32
    return %c0_i32, %c0_i32_0 : i32, i32
  }
  func.func @transform_8(%arg0: i32, %arg1: i32) -> (i32, i32) {
    %c0_i32 = arith.constant 0 : i32
    %c0_i32_0 = arith.constant 0 : i32
    %c0_i32_1 = arith.constant 0 : i32
    return %c0_i32, %c0_i32_0 : i32, i32
  }
  func.func @transform_9(%arg0: i32, %arg1: i32) -> (i32, i32) {
    %c0_i32 = arith.constant 0 : i32
    %c0_i32_0 = arith.constant 0 : i32
    %c0_i32_1 = arith.constant 0 : i32
    return %c0_i32, %c0_i32_0 : i32, i32
  }
  func.func @transform_10(%arg0: i32, %arg1: i32) -> (i32, i32) {
    %c0_i32 = arith.constant 0 : i32
    %c0_i32_0 = arith.constant 0 : i32
    %c0_i32_1 = arith.constant 0 : i32
    return %c0_i32, %c0_i32_0 : i32, i32
  }
  func.func @transform_11(%arg0: i32, %arg1: i32) -> (i32, i32, i32, i32) {
    %c0_i32 = arith.constant 0 : i32
    %c0_i32_0 = arith.constant 0 : i32
    %c0_i32_1 = arith.constant 0 : i32
    return %arg0, %arg1, %c0_i32, %c0_i32_0 : i32, i32, i32, i32
  }
}

module attributes {stable_mosaic.version = 11 : i64} {
  func.func @bottleneck_kernel(%arg0: i32, %arg1: i32, %arg2: memref<1x8x16x16xf32, #tpu.memory_space<vmem>>, %arg3: memref<1x1x2x16x16xf32, #tpu.memory_space<vmem>>, %arg4: memref<16x4xbf16, #tpu.memory_space<vmem>>, %arg5: memref<1x4xf32, #tpu.memory_space<vmem>>, %arg6: memref<1x4xf32, #tpu.memory_space<vmem>>, %arg7: memref<9x4x4xbf16, #tpu.memory_space<vmem>>, %arg8: memref<1x4xf32, #tpu.memory_space<vmem>>, %arg9: memref<1x4xf32, #tpu.memory_space<vmem>>, %arg10: memref<4x16xbf16, #tpu.memory_space<vmem>>, %arg11: memref<1x16xf32, #tpu.memory_space<vmem>>, %arg12: memref<1x16xf32, #tpu.memory_space<vmem>>, %arg13: memref<1x8x16x16xf32, #tpu.memory_space<vmem>>, %arg14: memref<10x16x4xbf16, #tpu.memory_space<vmem>>) attributes {dimension_semantics = [#tpu.dimension_semantics<parallel>, #tpu.dimension_semantics<parallel>], iteration_bounds = array<i64: 2, 2>, scalar_prefetch = 0 : i64, scratch_operands = 1 : i64, tpu.core_type = #tpu.core_type<tc>, window_params = [{transform_indices = @transform_0, window_bounds = array<i64: 1, 8, 16, 16>}, {transform_indices = @transform_1, window_bounds = array<i64: 1, 1, 2, 16, 16>}, {pipeline_mode = #tpu.pipeline_mode<synchronous>, transform_indices = @transform_2, window_bounds = array<i64: 16, 4>}, {pipeline_mode = #tpu.pipeline_mode<synchronous>, transform_indices = @transform_3, window_bounds = array<i64: 1, 4>}, {pipeline_mode = #tpu.pipeline_mode<synchronous>, transform_indices = @transform_4, window_bounds = array<i64: 1, 4>}, {pipeline_mode = #tpu.pipeline_mode<synchronous>, transform_indices = @transform_5, window_bounds = array<i64: 9, 4, 4>}, {pipeline_mode = #tpu.pipeline_mode<synchronous>, transform_indices = @transform_6, window_bounds = array<i64: 1, 4>}, {pipeline_mode = #tpu.pipeline_mode<synchronous>, transform_indices = @transform_7, window_bounds = array<i64: 1, 4>}, {pipeline_mode = #tpu.pipeline_mode<synchronous>, transform_indices = @transform_8, window_bounds = array<i64: 4, 16>}, {pipeline_mode = #tpu.pipeline_mode<synchronous>, transform_indices = @transform_9, window_bounds = array<i64: 1, 16>}, {pipeline_mode = #tpu.pipeline_mode<synchronous>, transform_indices = @transform_10, window_bounds = array<i64: 1, 16>}, {transform_indices = @transform_11, window_bounds = array<i64: 1, 8, 16, 16>}]} {
    %c0 = arith.constant 0 : index
    %c0_0 = arith.constant 0 : index
    %c0_1 = arith.constant 0 : index
    %c0_2 = arith.constant 0 : index
    %0 = vector.load %arg2[%c0, %c0_0, %c0_1, %c0_2] : memref<1x8x16x16xf32, #tpu.memory_space<vmem>>, vector<1x8x16x16xf32>
    %1 = vector.shape_cast %0 : vector<1x8x16x16xf32> to vector<8x16x16xf32>
    %2 = arith.truncf %1 : vector<8x16x16xf32> to vector<8x16x16xbf16>
    %c0_3 = arith.constant 0 : index
    %c0_4 = arith.constant 0 : index
    %3 = vector.load %arg4[%c0_3, %c0_4] : memref<16x4xbf16, #tpu.memory_space<vmem>>, vector<16x4xbf16>
    "tpu.trace_start"() <{level = 10 : i32, message = "hwc,cp->hwp"}> : () -> ()
    %cst = arith.constant dense<0.000000e+00> : vector<8x16x4xf32>
    %4 = tpu.matmul %2, %3, %cst {dimension_numbers = #tpu.dot_dimension_numbers<[2], [0], [0, 1], [1], [0, 0, 0, 1, 1, 1], [], []>} : vector<8x16x16xbf16>, vector<16x4xbf16>, vector<8x16x4xf32> -> vector<8x16x4xf32>
    "tpu.trace_stop"() : () -> ()
    %c0_5 = arith.constant 0 : index
    %c0_6 = arith.constant 0 : index
    %5 = vector.load %arg5[%c0_5, %c0_6] : memref<1x4xf32, #tpu.memory_space<vmem>>, vector<1x4xf32>
    %6 = vector.shape_cast %5 : vector<1x4xf32> to vector<1x1x4xf32>
    %7 = vector.broadcast %6 : vector<1x1x4xf32> to vector<8x16x4xf32>
    %8 = arith.mulf %4, %7 : vector<8x16x4xf32>
    %c0_7 = arith.constant 0 : index
    %c0_8 = arith.constant 0 : index
    %9 = vector.load %arg6[%c0_7, %c0_8] : memref<1x4xf32, #tpu.memory_space<vmem>>, vector<1x4xf32>
    %10 = vector.shape_cast %9 : vector<1x4xf32> to vector<1x1x4xf32>
    %11 = vector.broadcast %10 : vector<1x1x4xf32> to vector<8x16x4xf32>
    %12 = arith.addf %8, %11 : vector<8x16x4xf32>
    %cst_9 = arith.constant 0.000000e+00 : f32
    %13 = vector.broadcast %cst_9 : f32 to vector<8x16x4xf32>
    %14 = arith.maximumf %12, %13 : vector<8x16x4xf32>
    %15 = arith.truncf %14 : vector<8x16x4xf32> to vector<8x16x4xbf16>
    %c1 = arith.constant 1 : index
    %c0_10 = arith.constant 0 : index
    %c0_11 = arith.constant 0 : index
    %16 = vector.load %arg14[%c1, %c0_10, %c0_11] : memref<10x16x4xbf16, #tpu.memory_space<vmem>>, vector<8x16x4xbf16>
    tpu.vector_store %arg14[%c1, %c0_10, %c0_11], %15 {strides = array<i32>} : memref<10x16x4xbf16, #tpu.memory_space<vmem>>, vector<8x16x4xbf16>,
    %c0_12 = arith.constant 0 : index
    %c0_13 = arith.constant 0 : index
    %c0_14 = arith.constant 0 : index
    %c0_15 = arith.constant 0 : index
    %c0_16 = arith.constant 0 : index
    %17 = vector.load %arg3[%c0_12, %c0_13, %c0_14, %c0_15, %c0_16] : memref<1x1x2x16x16xf32, #tpu.memory_space<vmem>>, vector<1x1x2x16x16xf32>
    %18 = vector.shape_cast %17 : vector<1x1x2x16x16xf32> to vector<2x16x16xf32>
    %19 = arith.truncf %18 : vector<2x16x16xf32> to vector<2x16x16xbf16>
    %c0_17 = arith.constant 0 : index
    %c0_18 = arith.constant 0 : index
    %20 = vector.load %arg4[%c0_17, %c0_18] : memref<16x4xbf16, #tpu.memory_space<vmem>>, vector<16x4xbf16>
    "tpu.trace_start"() <{level = 10 : i32, message = "hwc,cp->hwp"}> : () -> ()
    %cst_19 = arith.constant dense<0.000000e+00> : vector<2x16x4xf32>
    %21 = tpu.matmul %19, %20, %cst_19 {dimension_numbers = #tpu.dot_dimension_numbers<[2], [0], [0, 1], [1], [0, 0, 0, 1, 1, 1], [], []>} : vector<2x16x16xbf16>, vector<16x4xbf16>, vector<2x16x4xf32> -> vector<2x16x4xf32>
    "tpu.trace_stop"() : () -> ()
    %c0_20 = arith.constant 0 : index
    %c0_21 = arith.constant 0 : index
    %22 = vector.load %arg5[%c0_20, %c0_21] : memref<1x4xf32, #tpu.memory_space<vmem>>, vector<1x4xf32>
    %23 = vector.shape_cast %22 : vector<1x4xf32> to vector<1x1x4xf32>
    %24 = vector.broadcast %23 : vector<1x1x4xf32> to vector<2x16x4xf32>
    %25 = arith.mulf %21, %24 : vector<2x16x4xf32>
    %c0_22 = arith.constant 0 : index
    %c0_23 = arith.constant 0 : index
    %26 = vector.load %arg6[%c0_22, %c0_23] : memref<1x4xf32, #tpu.memory_space<vmem>>, vector<1x4xf32>
    %27 = vector.shape_cast %26 : vector<1x4xf32> to vector<1x1x4xf32>
    %28 = vector.broadcast %27 : vector<1x1x4xf32> to vector<2x16x4xf32>
    %29 = arith.addf %25, %28 : vector<2x16x4xf32>
    %cst_24 = arith.constant 0.000000e+00 : f32
    %30 = vector.broadcast %cst_24 : f32 to vector<2x16x4xf32>
    %31 = arith.maximumf %29, %30 : vector<2x16x4xf32>
    %c0_i32 = arith.constant 0 : i32
    %32 = arith.cmpi sgt, %arg1, %c0_i32 : i32
    %33 = arith.extui %32 : i1 to i32
    %34 = arith.sitofp %33 : i32 to f32
    %c1_i32 = arith.constant 1 : i32
    %35 = arith.cmpi slt, %arg1, %c1_i32 : i32
    %36 = arith.extui %35 : i1 to i32
    %37 = arith.sitofp %36 : i32 to f32
    %38 = vector.extract_strided_slice %31 {offsets = [0, 0, 0], sizes = [1, 16, 4], strides = [1, 1, 1]} : vector<2x16x4xf32> to vector<1x16x4xf32>
    %39 = vector.shape_cast %38 : vector<1x16x4xf32> to vector<16x4xf32>
    %40 = vector.broadcast %34 : f32 to vector<16x4xf32>
    %41 = arith.mulf %39, %40 : vector<16x4xf32>
    %42 = arith.truncf %41 : vector<16x4xf32> to vector<16x4xbf16>
    %c0_25 = arith.constant 0 : index
    %c0_26 = arith.constant 0 : index
    %c0_27 = arith.constant 0 : index
    %43 = vector.load %arg14[%c0_25, %c0_26, %c0_27] : memref<10x16x4xbf16, #tpu.memory_space<vmem>>, vector<1x16x4xbf16>
    %44 = vector.shape_cast %43 : vector<1x16x4xbf16> to vector<16x4xbf16>
    %45 = vector.shape_cast %42 : vector<16x4xbf16> to vector<1x16x4xbf16>
    tpu.vector_store %arg14[%c0_25, %c0_26, %c0_27], %45 {strides = array<i32>} : memref<10x16x4xbf16, #tpu.memory_space<vmem>>, vector<1x16x4xbf16>,
    %46 = vector.extract_strided_slice %31 {offsets = [1, 0, 0], sizes = [1, 16, 4], strides = [1, 1, 1]} : vector<2x16x4xf32> to vector<1x16x4xf32>
    %47 = vector.shape_cast %46 : vector<1x16x4xf32> to vector<16x4xf32>
    %48 = vector.broadcast %37 : f32 to vector<16x4xf32>
    %49 = arith.mulf %47, %48 : vector<16x4xf32>
    %50 = arith.truncf %49 : vector<16x4xf32> to vector<16x4xbf16>
    %c9 = arith.constant 9 : index
    %c0_28 = arith.constant 0 : index
    %c0_29 = arith.constant 0 : index
    %51 = vector.load %arg14[%c9, %c0_28, %c0_29] : memref<10x16x4xbf16, #tpu.memory_space<vmem>>, vector<1x16x4xbf16>
    %52 = vector.shape_cast %51 : vector<1x16x4xbf16> to vector<16x4xbf16>
    %53 = vector.shape_cast %50 : vector<16x4xbf16> to vector<1x16x4xbf16>
    tpu.vector_store %arg14[%c9, %c0_28, %c0_29], %53 {strides = array<i32>} : memref<10x16x4xbf16, #tpu.memory_space<vmem>>, vector<1x16x4xbf16>,
    %c0_30 = arith.constant 0 : index
    %c0_31 = arith.constant 0 : index
    %c0_32 = arith.constant 0 : index
    %54 = vector.load %arg14[%c0_30, %c0_31, %c0_32] : memref<10x16x4xbf16, #tpu.memory_space<vmem>>, vector<10x16x4xbf16>
    %cst_33 = arith.constant 0.000000e+00 : bf16
    %55 = vector.broadcast %cst_33 : bf16 to vector<10x1x4xbf16>
    %56 = vector.extract_strided_slice %54 {offsets = [0, 0, 0], sizes = [10, 15, 4], strides = [1, 1, 1]} : vector<10x16x4xbf16> to vector<10x15x4xbf16>
    %57 = tpu.concatenate %55, %56 in 1 : vector<10x1x4xbf16>, vector<10x15x4xbf16> -> vector<10x16x4xbf16>
    %58 = vector.extract_strided_slice %54 {offsets = [0, 1, 0], sizes = [10, 15, 4], strides = [1, 1, 1]} : vector<10x16x4xbf16> to vector<10x15x4xbf16>
    %59 = tpu.concatenate %58, %55 in 1 : vector<10x15x4xbf16>, vector<10x1x4xbf16> -> vector<10x16x4xbf16>
    %60 = vector.extract_strided_slice %57 {offsets = [0, 0, 0], sizes = [8, 16, 4], strides = [1, 1, 1]} : vector<10x16x4xbf16> to vector<8x16x4xbf16>
    %c0_34 = arith.constant 0 : index
    %c0_35 = arith.constant 0 : index
    %c0_36 = arith.constant 0 : index
    %61 = vector.load %arg7[%c0_34, %c0_35, %c0_36] : memref<9x4x4xbf16, #tpu.memory_space<vmem>>, vector<1x4x4xbf16>
    %62 = vector.shape_cast %61 : vector<1x4x4xbf16> to vector<4x4xbf16>
    "tpu.trace_start"() <{level = 10 : i32, message = "hwp,pq->hwq"}> : () -> ()
    %cst_37 = arith.constant dense<0.000000e+00> : vector<8x16x4xf32>
    %63 = tpu.matmul %60, %62, %cst_37 {dimension_numbers = #tpu.dot_dimension_numbers<[2], [0], [0, 1], [1], [0, 0, 0, 1, 1, 1], [], []>} : vector<8x16x4xbf16>, vector<4x4xbf16>, vector<8x16x4xf32> -> vector<8x16x4xf32>
    "tpu.trace_stop"() : () -> ()
    %64 = vector.extract_strided_slice %54 {offsets = [0, 0, 0], sizes = [8, 16, 4], strides = [1, 1, 1]} : vector<10x16x4xbf16> to vector<8x16x4xbf16>
    %c1_38 = arith.constant 1 : index
    %c0_39 = arith.constant 0 : index
    %c0_40 = arith.constant 0 : index
    %65 = vector.load %arg7[%c1_38, %c0_39, %c0_40] : memref<9x4x4xbf16, #tpu.memory_space<vmem>>, vector<1x4x4xbf16>
    %66 = vector.shape_cast %65 : vector<1x4x4xbf16> to vector<4x4xbf16>
    "tpu.trace_start"() <{level = 10 : i32, message = "hwp,pq->hwq"}> : () -> ()
    %cst_41 = arith.constant dense<0.000000e+00> : vector<8x16x4xf32>
    %67 = tpu.matmul %64, %66, %cst_41 {dimension_numbers = #tpu.dot_dimension_numbers<[2], [0], [0, 1], [1], [0, 0, 0, 1, 1, 1], [], []>} : vector<8x16x4xbf16>, vector<4x4xbf16>, vector<8x16x4xf32> -> vector<8x16x4xf32>
    "tpu.trace_stop"() : () -> ()
    %68 = arith.addf %63, %67 : vector<8x16x4xf32>
    %69 = vector.extract_strided_slice %59 {offsets = [0, 0, 0], sizes = [8, 16, 4], strides = [1, 1, 1]} : vector<10x16x4xbf16> to vector<8x16x4xbf16>
    %c2 = arith.constant 2 : index
    %c0_42 = arith.constant 0 : index
    %c0_43 = arith.constant 0 : index
    %70 = vector.load %arg7[%c2, %c0_42, %c0_43] : memref<9x4x4xbf16, #tpu.memory_space<vmem>>, vector<1x4x4xbf16>
    %71 = vector.shape_cast %70 : vector<1x4x4xbf16> to vector<4x4xbf16>
    "tpu.trace_start"() <{level = 10 : i32, message = "hwp,pq->hwq"}> : () -> ()
    %cst_44 = arith.constant dense<0.000000e+00> : vector<8x16x4xf32>
    %72 = tpu.matmul %69, %71, %cst_44 {dimension_numbers = #tpu.dot_dimension_numbers<[2], [0], [0, 1], [1], [0, 0, 0, 1, 1, 1], [], []>} : vector<8x16x4xbf16>, vector<4x4xbf16>, vector<8x16x4xf32> -> vector<8x16x4xf32>
    "tpu.trace_stop"() : () -> ()
    %73 = arith.addf %68, %72 : vector<8x16x4xf32>
    %74 = vector.extract_strided_slice %57 {offsets = [1, 0, 0], sizes = [8, 16, 4], strides = [1, 1, 1]} : vector<10x16x4xbf16> to vector<8x16x4xbf16>
    %c3 = arith.constant 3 : index
    %c0_45 = arith.constant 0 : index
    %c0_46 = arith.constant 0 : index
    %75 = vector.load %arg7[%c3, %c0_45, %c0_46] : memref<9x4x4xbf16, #tpu.memory_space<vmem>>, vector<1x4x4xbf16>
    %76 = vector.shape_cast %75 : vector<1x4x4xbf16> to vector<4x4xbf16>
    "tpu.trace_start"() <{level = 10 : i32, message = "hwp,pq->hwq"}> : () -> ()
    %cst_47 = arith.constant dense<0.000000e+00> : vector<8x16x4xf32>
    %77 = tpu.matmul %74, %76, %cst_47 {dimension_numbers = #tpu.dot_dimension_numbers<[2], [0], [0, 1], [1], [0, 0, 0, 1, 1, 1], [], []>} : vector<8x16x4xbf16>, vector<4x4xbf16>, vector<8x16x4xf32> -> vector<8x16x4xf32>
    "tpu.trace_stop"() : () -> ()
    %78 = arith.addf %73, %77 : vector<8x16x4xf32>
    %79 = vector.extract_strided_slice %54 {offsets = [1, 0, 0], sizes = [8, 16, 4], strides = [1, 1, 1]} : vector<10x16x4xbf16> to vector<8x16x4xbf16>
    %c4 = arith.constant 4 : index
    %c0_48 = arith.constant 0 : index
    %c0_49 = arith.constant 0 : index
    %80 = vector.load %arg7[%c4, %c0_48, %c0_49] : memref<9x4x4xbf16, #tpu.memory_space<vmem>>, vector<1x4x4xbf16>
    %81 = vector.shape_cast %80 : vector<1x4x4xbf16> to vector<4x4xbf16>
    "tpu.trace_start"() <{level = 10 : i32, message = "hwp,pq->hwq"}> : () -> ()
    %cst_50 = arith.constant dense<0.000000e+00> : vector<8x16x4xf32>
    %82 = tpu.matmul %79, %81, %cst_50 {dimension_numbers = #tpu.dot_dimension_numbers<[2], [0], [0, 1], [1], [0, 0, 0, 1, 1, 1], [], []>} : vector<8x16x4xbf16>, vector<4x4xbf16>, vector<8x16x4xf32> -> vector<8x16x4xf32>
    "tpu.trace_stop"() : () -> ()
    %83 = arith.addf %78, %82 : vector<8x16x4xf32>
    %84 = vector.extract_strided_slice %59 {offsets = [1, 0, 0], sizes = [8, 16, 4], strides = [1, 1, 1]} : vector<10x16x4xbf16> to vector<8x16x4xbf16>
    %c5 = arith.constant 5 : index
    %c0_51 = arith.constant 0 : index
    %c0_52 = arith.constant 0 : index
    %85 = vector.load %arg7[%c5, %c0_51, %c0_52] : memref<9x4x4xbf16, #tpu.memory_space<vmem>>, vector<1x4x4xbf16>
    %86 = vector.shape_cast %85 : vector<1x4x4xbf16> to vector<4x4xbf16>
    "tpu.trace_start"() <{level = 10 : i32, message = "hwp,pq->hwq"}> : () -> ()
    %cst_53 = arith.constant dense<0.000000e+00> : vector<8x16x4xf32>
    %87 = tpu.matmul %84, %86, %cst_53 {dimension_numbers = #tpu.dot_dimension_numbers<[2], [0], [0, 1], [1], [0, 0, 0, 1, 1, 1], [], []>} : vector<8x16x4xbf16>, vector<4x4xbf16>, vector<8x16x4xf32> -> vector<8x16x4xf32>
    "tpu.trace_stop"() : () -> ()
    %88 = arith.addf %83, %87 : vector<8x16x4xf32>
    %89 = vector.extract_strided_slice %57 {offsets = [2, 0, 0], sizes = [8, 16, 4], strides = [1, 1, 1]} : vector<10x16x4xbf16> to vector<8x16x4xbf16>
    %c6 = arith.constant 6 : index
    %c0_54 = arith.constant 0 : index
    %c0_55 = arith.constant 0 : index
    %90 = vector.load %arg7[%c6, %c0_54, %c0_55] : memref<9x4x4xbf16, #tpu.memory_space<vmem>>, vector<1x4x4xbf16>
    %91 = vector.shape_cast %90 : vector<1x4x4xbf16> to vector<4x4xbf16>
    "tpu.trace_start"() <{level = 10 : i32, message = "hwp,pq->hwq"}> : () -> ()
    %cst_56 = arith.constant dense<0.000000e+00> : vector<8x16x4xf32>
    %92 = tpu.matmul %89, %91, %cst_56 {dimension_numbers = #tpu.dot_dimension_numbers<[2], [0], [0, 1], [1], [0, 0, 0, 1, 1, 1], [], []>} : vector<8x16x4xbf16>, vector<4x4xbf16>, vector<8x16x4xf32> -> vector<8x16x4xf32>
    "tpu.trace_stop"() : () -> ()
    %93 = arith.addf %88, %92 : vector<8x16x4xf32>
    %94 = vector.extract_strided_slice %54 {offsets = [2, 0, 0], sizes = [8, 16, 4], strides = [1, 1, 1]} : vector<10x16x4xbf16> to vector<8x16x4xbf16>
    %c7 = arith.constant 7 : index
    %c0_57 = arith.constant 0 : index
    %c0_58 = arith.constant 0 : index
    %95 = vector.load %arg7[%c7, %c0_57, %c0_58] : memref<9x4x4xbf16, #tpu.memory_space<vmem>>, vector<1x4x4xbf16>
    %96 = vector.shape_cast %95 : vector<1x4x4xbf16> to vector<4x4xbf16>
    "tpu.trace_start"() <{level = 10 : i32, message = "hwp,pq->hwq"}> : () -> ()
    %cst_59 = arith.constant dense<0.000000e+00> : vector<8x16x4xf32>
    %97 = tpu.matmul %94, %96, %cst_59 {dimension_numbers = #tpu.dot_dimension_numbers<[2], [0], [0, 1], [1], [0, 0, 0, 1, 1, 1], [], []>} : vector<8x16x4xbf16>, vector<4x4xbf16>, vector<8x16x4xf32> -> vector<8x16x4xf32>
    "tpu.trace_stop"() : () -> ()
    %98 = arith.addf %93, %97 : vector<8x16x4xf32>
    %99 = vector.extract_strided_slice %59 {offsets = [2, 0, 0], sizes = [8, 16, 4], strides = [1, 1, 1]} : vector<10x16x4xbf16> to vector<8x16x4xbf16>
    %c8 = arith.constant 8 : index
    %c0_60 = arith.constant 0 : index
    %c0_61 = arith.constant 0 : index
    %100 = vector.load %arg7[%c8, %c0_60, %c0_61] : memref<9x4x4xbf16, #tpu.memory_space<vmem>>, vector<1x4x4xbf16>
    %101 = vector.shape_cast %100 : vector<1x4x4xbf16> to vector<4x4xbf16>
    "tpu.trace_start"() <{level = 10 : i32, message = "hwp,pq->hwq"}> : () -> ()
    %cst_62 = arith.constant dense<0.000000e+00> : vector<8x16x4xf32>
    %102 = tpu.matmul %99, %101, %cst_62 {dimension_numbers = #tpu.dot_dimension_numbers<[2], [0], [0, 1], [1], [0, 0, 0, 1, 1, 1], [], []>} : vector<8x16x4xbf16>, vector<4x4xbf16>, vector<8x16x4xf32> -> vector<8x16x4xf32>
    "tpu.trace_stop"() : () -> ()
    %103 = arith.addf %98, %102 : vector<8x16x4xf32>
    %c0_63 = arith.constant 0 : index
    %c0_64 = arith.constant 0 : index
    %104 = vector.load %arg8[%c0_63, %c0_64] : memref<1x4xf32, #tpu.memory_space<vmem>>, vector<1x4xf32>
    %105 = vector.shape_cast %104 : vector<1x4xf32> to vector<1x1x4xf32>
    %106 = vector.broadcast %105 : vector<1x1x4xf32> to vector<8x16x4xf32>
    %107 = arith.mulf %103, %106 : vector<8x16x4xf32>
    %c0_65 = arith.constant 0 : index
    %c0_66 = arith.constant 0 : index
    %108 = vector.load %arg9[%c0_65, %c0_66] : memref<1x4xf32, #tpu.memory_space<vmem>>, vector<1x4xf32>
    %109 = vector.shape_cast %108 : vector<1x4xf32> to vector<1x1x4xf32>
    %110 = vector.broadcast %109 : vector<1x1x4xf32> to vector<8x16x4xf32>
    %111 = arith.addf %107, %110 : vector<8x16x4xf32>
    %cst_67 = arith.constant 0.000000e+00 : f32
    %112 = vector.broadcast %cst_67 : f32 to vector<8x16x4xf32>
    %113 = arith.maximumf %111, %112 : vector<8x16x4xf32>
    %114 = arith.truncf %113 : vector<8x16x4xf32> to vector<8x16x4xbf16>
    %c0_68 = arith.constant 0 : index
    %c0_69 = arith.constant 0 : index
    %115 = vector.load %arg10[%c0_68, %c0_69] : memref<4x16xbf16, #tpu.memory_space<vmem>>, vector<4x16xbf16>
    "tpu.trace_start"() <{level = 10 : i32, message = "hwc,cp->hwp"}> : () -> ()
    %cst_70 = arith.constant dense<0.000000e+00> : vector<8x16x16xf32>
    %116 = tpu.matmul %114, %115, %cst_70 {dimension_numbers = #tpu.dot_dimension_numbers<[2], [0], [0, 1], [1], [0, 0, 0, 1, 1, 1], [], []>} : vector<8x16x4xbf16>, vector<4x16xbf16>, vector<8x16x16xf32> -> vector<8x16x16xf32>
    "tpu.trace_stop"() : () -> ()
    %c0_71 = arith.constant 0 : index
    %c0_72 = arith.constant 0 : index
    %117 = vector.load %arg11[%c0_71, %c0_72] : memref<1x16xf32, #tpu.memory_space<vmem>>, vector<1x16xf32>
    %118 = vector.shape_cast %117 : vector<1x16xf32> to vector<1x1x16xf32>
    %119 = vector.broadcast %118 : vector<1x1x16xf32> to vector<8x16x16xf32>
    %120 = arith.mulf %116, %119 : vector<8x16x16xf32>
    %c0_73 = arith.constant 0 : index
    %c0_74 = arith.constant 0 : index
    %121 = vector.load %arg12[%c0_73, %c0_74] : memref<1x16xf32, #tpu.memory_space<vmem>>, vector<1x16xf32>
    %122 = vector.shape_cast %121 : vector<1x16xf32> to vector<1x1x16xf32>
    %123 = vector.broadcast %122 : vector<1x1x16xf32> to vector<8x16x16xf32>
    %124 = arith.addf %120, %123 : vector<8x16x16xf32>
    %c0_75 = arith.constant 0 : index
    %c0_76 = arith.constant 0 : index
    %c0_77 = arith.constant 0 : index
    %c0_78 = arith.constant 0 : index
    %125 = vector.load %arg2[%c0_75, %c0_76, %c0_77, %c0_78] : memref<1x8x16x16xf32, #tpu.memory_space<vmem>>, vector<1x8x16x16xf32>
    %126 = vector.shape_cast %125 : vector<1x8x16x16xf32> to vector<8x16x16xf32>
    %127 = arith.addf %124, %126 : vector<8x16x16xf32>
    %cst_79 = arith.constant 0.000000e+00 : f32
    %128 = vector.broadcast %cst_79 : f32 to vector<8x16x16xf32>
    %129 = arith.maximumf %127, %128 : vector<8x16x16xf32>
    %c0_80 = arith.constant 0 : index
    %c0_81 = arith.constant 0 : index
    %c0_82 = arith.constant 0 : index
    %c0_83 = arith.constant 0 : index
    %130 = vector.load %arg13[%c0_80, %c0_81, %c0_82, %c0_83] : memref<1x8x16x16xf32, #tpu.memory_space<vmem>>, vector<1x8x16x16xf32>
    %131 = vector.shape_cast %130 : vector<1x8x16x16xf32> to vector<8x16x16xf32>
    %132 = vector.shape_cast %129 : vector<8x16x16xf32> to vector<1x8x16x16xf32>
    tpu.vector_store %arg13[%c0_80, %c0_81, %c0_82, %c0_83], %132 {strides = array<i32>} : memref<1x8x16x16xf32, #tpu.memory_space<vmem>>, vector<1x8x16x16xf32>,
    return
  }
  func.func @transform_0(%arg0: i32, %arg1: i32) -> (i32, i32, i32, i32) {
    %c0_i32 = arith.constant 0 : i32
    %c0_i32_0 = arith.constant 0 : i32
    %c0_i32_1 = arith.constant 0 : i32
    return %arg0, %arg1, %c0_i32, %c0_i32_0 : i32, i32, i32, i32
  }
  func.func @transform_1(%arg0: i32, %arg1: i32) -> (i32, i32, i32, i32, i32) {
    %c0_i32 = arith.constant 0 : i32
    %c0_i32_0 = arith.constant 0 : i32
    %c0_i32_1 = arith.constant 0 : i32
    %c0_i32_2 = arith.constant 0 : i32
    return %arg0, %arg1, %c0_i32, %c0_i32_0, %c0_i32_1 : i32, i32, i32, i32, i32
  }
  func.func @transform_2(%arg0: i32, %arg1: i32) -> (i32, i32) {
    %c0_i32 = arith.constant 0 : i32
    %c0_i32_0 = arith.constant 0 : i32
    %c0_i32_1 = arith.constant 0 : i32
    return %c0_i32, %c0_i32_0 : i32, i32
  }
  func.func @transform_3(%arg0: i32, %arg1: i32) -> (i32, i32) {
    %c0_i32 = arith.constant 0 : i32
    %c0_i32_0 = arith.constant 0 : i32
    %c0_i32_1 = arith.constant 0 : i32
    return %c0_i32, %c0_i32_0 : i32, i32
  }
  func.func @transform_4(%arg0: i32, %arg1: i32) -> (i32, i32) {
    %c0_i32 = arith.constant 0 : i32
    %c0_i32_0 = arith.constant 0 : i32
    %c0_i32_1 = arith.constant 0 : i32
    return %c0_i32, %c0_i32_0 : i32, i32
  }
  func.func @transform_5(%arg0: i32, %arg1: i32) -> (i32, i32, i32) {
    %c0_i32 = arith.constant 0 : i32
    %c0_i32_0 = arith.constant 0 : i32
    %c0_i32_1 = arith.constant 0 : i32
    %c0_i32_2 = arith.constant 0 : i32
    return %c0_i32, %c0_i32_0, %c0_i32_1 : i32, i32, i32
  }
  func.func @transform_6(%arg0: i32, %arg1: i32) -> (i32, i32) {
    %c0_i32 = arith.constant 0 : i32
    %c0_i32_0 = arith.constant 0 : i32
    %c0_i32_1 = arith.constant 0 : i32
    return %c0_i32, %c0_i32_0 : i32, i32
  }
  func.func @transform_7(%arg0: i32, %arg1: i32) -> (i32, i32) {
    %c0_i32 = arith.constant 0 : i32
    %c0_i32_0 = arith.constant 0 : i32
    %c0_i32_1 = arith.constant 0 : i32
    return %c0_i32, %c0_i32_0 : i32, i32
  }
  func.func @transform_8(%arg0: i32, %arg1: i32) -> (i32, i32) {
    %c0_i32 = arith.constant 0 : i32
    %c0_i32_0 = arith.constant 0 : i32
    %c0_i32_1 = arith.constant 0 : i32
    return %c0_i32, %c0_i32_0 : i32, i32
  }
  func.func @transform_9(%arg0: i32, %arg1: i32) -> (i32, i32) {
    %c0_i32 = arith.constant 0 : i32
    %c0_i32_0 = arith.constant 0 : i32
    %c0_i32_1 = arith.constant 0 : i32
    return %c0_i32, %c0_i32_0 : i32, i32
  }
  func.func @transform_10(%arg0: i32, %arg1: i32) -> (i32, i32) {
    %c0_i32 = arith.constant 0 : i32
    %c0_i32_0 = arith.constant 0 : i32
    %c0_i32_1 = arith.constant 0 : i32
    return %c0_i32, %c0_i32_0 : i32, i32
  }
  func.func @transform_11(%arg0: i32, %arg1: i32) -> (i32, i32, i32, i32) {
    %c0_i32 = arith.constant 0 : i32
    %c0_i32_0 = arith.constant 0 : i32
    %c0_i32_1 = arith.constant 0 : i32
    return %arg0, %arg1, %c0_i32, %c0_i32_0 : i32, i32, i32, i32
  }
}

</mosaic_0001>

<llo_original>
// kernel: tpu_custom_call.1
$region0: #{tpu_custom_call.1}
  #allocation0 [shape = 'u32[]', space=smem, size = 0x4, offset = 0x4, fixed_abs, tag = 'smem constant byte address 0x4 - core index']
  #allocation1 [shape = 'u32[144,128]{1,0:T(1,128)}', space=vmem, size = 0x12000, scoped, tag = 'internal scratch']
  #allocation2 [shape = 'bf16[10,16,4]{2,1,0:T(16,128)(2,1)}', space=vmem, size = 0xa000, scoped, tag = 'scratch operand']
  %s0 = inlined_call_operand.hbm [shape: f32[2,16,16,16], index: 0, kind: input, shape index: {}]
  %s1 = inlined_call_operand.hbm [shape: f32[2,2,2,16,16], index: 1, kind: input, shape index: {}]
  %s2 = inlined_call_operand.vmem [shape: bf16[16,4], index: 2, kind: input, shape index: {}]
  %s3 = inlined_call_operand.vmem [shape: f32[1,4], index: 3, kind: input, shape index: {}]
  %s4 = inlined_call_operand.vmem [shape: f32[1,4], index: 4, kind: input, shape index: {}]
  %s5 = inlined_call_operand.vmem [shape: bf16[9,4,4], index: 5, kind: input, shape index: {}]
  %s6 = inlined_call_operand.vmem [shape: f32[1,4], index: 6, kind: input, shape index: {}]
  %s7 = inlined_call_operand.vmem [shape: f32[1,4], index: 7, kind: input, shape index: {}]
  %s8 = inlined_call_operand.vmem [shape: bf16[4,16], index: 8, kind: input, shape index: {}]
  %s9 = inlined_call_operand.vmem [shape: f32[1,16], index: 9, kind: input, shape index: {}]
  %s10 = inlined_call_operand.vmem [shape: f32[1,16], index: 10, kind: input, shape index: {}]
  %s11 = inlined_call_operand.hbm [shape: f32[2,16,16,16], index: 11, kind: output, shape index: {}]
  %s12 = sld [smem:[#allocation0]]
  $region85: #{tpu_custom_call.1} parent=0
    _
  %s14 = ssub.s32 1, %s12
  %s15 = scalar_select 0, %s14, %s12
  $region1: #{tpu_custom_call.1} parent=0
    #allocation3 [shape = 'u8[131072]{0}', space=vmem, size = 0x20000, scoped, tag = 'input window, operand 0']
    #allocation4 [shape = 's32[2]{0}', space=sflag, size = 0x8, scoped, tag = 'scoped memory for tpu_custom_call.1']
    #allocation5 [shape = 's32[2]{0}', space=sflag, size = 0x8, scoped, tag = 'scoped memory for tpu_custom_call.1']
    #allocation6 [shape = 'u8[32768]{0}', space=vmem, size = 0x8000, scoped, tag = 'input window, operand 1']
    #allocation7 [shape = 's32[2]{0}', space=sflag, size = 0x8, scoped, tag = 'scoped memory for tpu_custom_call.1']
    #allocation8 [shape = 'u8[131072]{0}', space=vmem, size = 0x20000, scoped, tag = 'output window, operand 0']
    %16 = vsyncpa [#allocation4], 0
    %s17 = scalar_lea.sflag [#allocation4], 1
    %18 = vsyncpa %s17, 0
    %19 = vsyncpa [#allocation7], 0
    %s20 = scalar_lea.sflag [#allocation7], 1
    %21 = vsyncpa %s20, 0
    %22 = vsyncpa [#allocation5], 0
    %s23 = scalar_lea.sflag [#allocation5], 1
    %24 = vsyncpa %s23, 0
    loop: start=0, step=1, limit=6
    $region2: #{tpu_custom_call.1} parent=1 // loop_pre_header
      _
    $region3: #{tpu_custom_call.1} parent=1 // loop_header
      %s26 = sphi 0, %s30
      %p27 = scmp.ge.s32.totalorder %s26, 6
      %s33 = sphi 0, %s45
      %s34 = sphi 0, %s41
      %s35 = sphi 0, %s33
      %s36 = sphi 0, %s34
      %s37 = sphi 0, %s35
      %s38 = sphi 0, %s36
      %s50 = sphi 0, %s52
      %s53 = sphi 0, %s50
      %s54 = sphi 0, %s53
      %s70 = sphi 0, %s54
      %s78 = sphi 0, %s80
      %s81 = sphi 0, %s78
      %s82 = sphi 0, %s81
      %s98 = sphi 0, %s82
      %s102 = sphi 0, %s102
      %s104 = sphi 0, %s102
      %s105 = sphi 0, %s104
      %s119 = sphi 0, %s105
      %s123 = sphi 0, %s123
      %s125 = sphi 0, %s123
      %s126 = sphi 0, %s125
      %s140 = sphi 0, %s126
      %s144 = sphi 0, %s144
      %s146 = sphi 0, %s144
      %s147 = sphi 0, %s146
      %s161 = sphi 0, %s147
      %s165 = sphi 0, %s165
      %s167 = sphi 0, %s165
      %s168 = sphi 0, %s167
      %s182 = sphi 0, %s168
      %s186 = sphi 0, %s186
      %s188 = sphi 0, %s186
      %s189 = sphi 0, %s188
      %s203 = sphi 0, %s189
      %s207 = sphi 0, %s207
      %s209 = sphi 0, %s207
      %s210 = sphi 0, %s209
      %s224 = sphi 0, %s210
      %s228 = sphi 0, %s228
      %s230 = sphi 0, %s228
      %s231 = sphi 0, %s230
      %s245 = sphi 0, %s231
      %s249 = sphi 0, %s249
      %s251 = sphi 0, %s249
      %s252 = sphi 0, %s251
      %s266 = sphi 0, %s252
      %s270 = sphi 0, %s270
      %s272 = sphi 0, %s270
      %s273 = sphi 0, %s272
      %s287 = sphi 0, %s273
      %s295 = sphi 0, %s297
      %s298 = sphi 0, %s295
      %s299 = sphi 0, %s298
      %s315 = sphi 0, %s299
    $region4: #{tpu_custom_call.1} parent=1 // loop_header_branch
      %29 = sbr.rel (%p27) target = $region8
    $region5: #{tpu_custom_call.1} parent=1 // loop_body
      %s31 = ssub.s32 %s26, 1
      %s32 = ssub.s32 %s26, 2
      %s39 = sadd.s32 1, %s34
      %p40 = scmp.ge.s32.totalorder %s39, 2
      %s41 = scalar_select %p40, 0, %s39
      %s42 = sadd.s32 1, %s33
      %s43 = scalar_select %p40, %s42, %s33
      %p44 = scmp.ge.s32.totalorder %s43, 2
      %s45 = scalar_select %p44, 0, %s43
      %s46 = ssub.s32 %s33, %s45
      %s47 = ssub.s32 %s34, %s41
      %s48 = sor.u32 %s46, %s47
      %p49 = scmp.eq.s32.totalorder %s48, 0
      %s51 = sadd.s32 %s50, 1
      %s52 = scalar_select %p49, %s50, %s51
      %p55 = pneg %p49
      %p56 = scmp.eq.s32.totalorder %s26, 3
      %p57 = por %p55, %p56
      %p58 = scmp.ne.s32.totalorder %s50, %s53
      %p59 = scmp.eq.s32.totalorder %s26, 0
      %p60 = por %p58, %p59
      %p61 = scmp.ne.s32.totalorder %s50, %s53
      %p62 = scmp.eq.s32.totalorder %s31, 3
      %p63 = por %p61, %p62
      %p64 = scmp.ne.s32.totalorder %s53, %s54
      %p65 = scmp.eq.s32.totalorder %s31, 0
      %p66 = por %p64, %p65
      %p67 = scmp.ne.s32.totalorder %s53, %s54
      %p68 = scmp.eq.s32.totalorder %s32, 3
      %p69 = por %p67, %p68
      %p71 = scmp.ne.s32.totalorder %s54, %s70
      %p72 = scmp.eq.s32.totalorder %s32, 0
      %p73 = por %p71, %p72
      %s74 = ssub.s32 %s33, %s45
      %s75 = ssub.s32 %s34, %s41
      %s76 = sor.u32 %s74, %s75
      %p77 = scmp.eq.s32.totalorder %s76, 0
      %s79 = sadd.s32 %s78, 1
      %s80 = scalar_select %p77, %s78, %s79
      %p83 = pneg %p77
      %p84 = scmp.eq.s32.totalorder %s26, 3
      %p85 = por %p83, %p84
      %p86 = scmp.ne.s32.totalorder %s78, %s81
      %p87 = scmp.eq.s32.totalorder %s26, 0
      %p88 = por %p86, %p87
      %p89 = scmp.ne.s32.totalorder %s78, %s81
      %p90 = scmp.eq.s32.totalorder %s31, 3
      %p91 = por %p89, %p90
      %p92 = scmp.ne.s32.totalorder %s81, %s82
      %p93 = scmp.eq.s32.totalorder %s31, 0
      %p94 = por %p92, %p93
      %p95 = scmp.ne.s32.totalorder %s81, %s82
      %p96 = scmp.eq.s32.totalorder %s32, 3
      %p97 = por %p95, %p96
      %p99 = scmp.ne.s32.totalorder %s82, %s98
      %p100 = scmp.eq.s32.totalorder %s32, 0
      %p101 = por %p99, %p100
      %s103 = sadd.s32 %s102, 1
      %p106 = scmp.eq.s32.totalorder %s26, 3
      %p107 = scmp.ne.s32.totalorder %s102, %s104
      %p108 = scmp.eq.s32.totalorder %s26, 0
      %p109 = por %p107, %p108
      %p110 = scmp.ne.s32.totalorder %s102, %s104
      %p111 = scmp.eq.s32.totalorder %s31, 3
      %p112 = por %p110, %p111
      %p113 = scmp.ne.s32.totalorder %s104, %s105
      %p114 = scmp.eq.s32.totalorder %s31, 0
      %p115 = por %p113, %p114
      %p116 = scmp.ne.s32.totalorder %s104, %s105
      %p117 = scmp.eq.s32.totalorder %s32, 3
      %p118 = por %p116, %p117
      %p120 = scmp.ne.s32.totalorder %s105, %s119
      %p121 = scmp.eq.s32.totalorder %s32, 0
      %p122 = por %p120, %p121
      %s124 = sadd.s32 %s123, 1
      %p127 = scmp.eq.s32.totalorder %s26, 3
      %p128 = scmp.ne.s32.totalorder %s123, %s125
      %p129 = scmp.eq.s32.totalorder %s26, 0
      %p130 = por %p128, %p129
      %p131 = scmp.ne.s32.totalorder %s123, %s125
      %p132 = scmp.eq.s32.totalorder %s31, 3
      %p133 = por %p131, %p132
      %p134 = scmp.ne.s32.totalorder %s125, %s126
      %p135 = scmp.eq.s32.totalorder %s31, 0
      %p136 = por %p134, %p135
      %p137 = scmp.ne.s32.totalorder %s125, %s126
      %p138 = scmp.eq.s32.totalorder %s32, 3
      %p139 = por %p137, %p138
      %p141 = scmp.ne.s32.totalorder %s126, %s140
      %p142 = scmp.eq.s32.totalorder %s32, 0
      %p143 = por %p141, %p142
      %s145 = sadd.s32 %s144, 1
      %p148 = scmp.eq.s32.totalorder %s26, 3
      %p149 = scmp.ne.s32.totalorder %s144, %s146
      %p150 = scmp.eq.s32.totalorder %s26, 0
      %p151 = por %p149, %p150
      %p152 = scmp.ne.s32.totalorder %s144, %s146
      %p153 = scmp.eq.s32.totalorder %s31, 3
      %p154 = por %p152, %p153
      %p155 = scmp.ne.s32.totalorder %s146, %s147
      %p156 = scmp.eq.s32.totalorder %s31, 0
      %p157 = por %p155, %p156
      %p158 = scmp.ne.s32.totalorder %s146, %s147
      %p159 = scmp.eq.s32.totalorder %s32, 3
      %p160 = por %p158, %p159
      %p162 = scmp.ne.s32.totalorder %s147, %s161
      %p163 = scmp.eq.s32.totalorder %s32, 0
      %p164 = por %p162, %p163
      %s166 = sadd.s32 %s165, 1
      %p169 = scmp.eq.s32.totalorder %s26, 3
      %p170 = scmp.ne.s32.totalorder %s165, %s167
      %p171 = scmp.eq.s32.totalorder %s26, 0
      %p172 = por %p170, %p171
      %p173 = scmp.ne.s32.totalorder %s165, %s167
      %p174 = scmp.eq.s32.totalorder %s31, 3
      %p175 = por %p173, %p174
      %p176 = scmp.ne.s32.totalorder %s167, %s168
      %p177 = scmp.eq.s32.totalorder %s31, 0
      %p178 = por %p176, %p177
      %p179 = scmp.ne.s32.totalorder %s167, %s168
      %p180 = scmp.eq.s32.totalorder %s32, 3
      %p181 = por %p179, %p180
      %p183 = scmp.ne.s32.totalorder %s168, %s182
      %p184 = scmp.eq.s32.totalorder %s32, 0
      %p185 = por %p183, %p184
      %s187 = sadd.s32 %s186, 1
      %p190 = scmp.eq.s32.totalorder %s26, 3
      %p191 = scmp.ne.s32.totalorder %s186, %s188
      %p192 = scmp.eq.s32.totalorder %s26, 0
      %p193 = por %p191, %p192
      %p194 = scmp.ne.s32.totalorder %s186, %s188
      %p195 = scmp.eq.s32.totalorder %s31, 3
      %p196 = por %p194, %p195
      %p197 = scmp.ne.s32.totalorder %s188, %s189
      %p198 = scmp.eq.s32.totalorder %s31, 0
      %p199 = por %p197, %p198
      %p200 = scmp.ne.s32.totalorder %s188, %s189
      %p201 = scmp.eq.s32.totalorder %s32, 3
      %p202 = por %p200, %p201
      %p204 = scmp.ne.s32.totalorder %s189, %s203
      %p205 = scmp.eq.s32.totalorder %s32, 0
      %p206 = por %p204, %p205
      %s208 = sadd.s32 %s207, 1
      %p211 = scmp.eq.s32.totalorder %s26, 3
      %p212 = scmp.ne.s32.totalorder %s207, %s209
      %p213 = scmp.eq.s32.totalorder %s26, 0
      %p214 = por %p212, %p213
      %p215 = scmp.ne.s32.totalorder %s207, %s209
      %p216 = scmp.eq.s32.totalorder %s31, 3
      %p217 = por %p215, %p216
      %p218 = scmp.ne.s32.totalorder %s209, %s210
      %p219 = scmp.eq.s32.totalorder %s31, 0
      %p220 = por %p218, %p219
      %p221 = scmp.ne.s32.totalorder %s209, %s210
      %p222 = scmp.eq.s32.totalorder %s32, 3
      %p223 = por %p221, %p222
      %p225 = scmp.ne.s32.totalorder %s210, %s224
      %p226 = scmp.eq.s32.totalorder %s32, 0
      %p227 = por %p225, %p226
      %s229 = sadd.s32 %s228, 1
      %p232 = scmp.eq.s32.totalorder %s26, 3
      %p233 = scmp.ne.s32.totalorder %s228, %s230
      %p234 = scmp.eq.s32.totalorder %s26, 0
      %p235 = por %p233, %p234
      %p236 = scmp.ne.s32.totalorder %s228, %s230
      %p237 = scmp.eq.s32.totalorder %s31, 3
      %p238 = por %p236, %p237
      %p239 = scmp.ne.s32.totalorder %s230, %s231
      %p240 = scmp.eq.s32.totalorder %s31, 0
      %p241 = por %p239, %p240
      %p242 = scmp.ne.s32.totalorder %s230, %s231
      %p243 = scmp.eq.s32.totalorder %s32, 3
      %p244 = por %p242, %p243
      %p246 = scmp.ne.s32.totalorder %s231, %s245
      %p247 = scmp.eq.s32.totalorder %s32, 0
      %p248 = por %p246, %p247
      %s250 = sadd.s32 %s249, 1
      %p253 = scmp.eq.s32.totalorder %s26, 3
      %p254 = scmp.ne.s32.totalorder %s249, %s251
      %p255 = scmp.eq.s32.totalorder %s26, 0
      %p256 = por %p254, %p255
      %p257 = scmp.ne.s32.totalorder %s249, %s251
      %p258 = scmp.eq.s32.totalorder %s31, 3
      %p259 = por %p257, %p258
      %p260 = scmp.ne.s32.totalorder %s251, %s252
      %p261 = scmp.eq.s32.totalorder %s31, 0
      %p262 = por %p260, %p261
      %p263 = scmp.ne.s32.totalorder %s251, %s252
      %p264 = scmp.eq.s32.totalorder %s32, 3
      %p265 = por %p263, %p264
      %p267 = scmp.ne.s32.totalorder %s252, %s266
      %p268 = scmp.eq.s32.totalorder %s32, 0
      %p269 = por %p267, %p268
      %s271 = sadd.s32 %s270, 1
      %p274 = scmp.eq.s32.totalorder %s26, 3
      %p275 = scmp.ne.s32.totalorder %s270, %s272
      %p276 = scmp.eq.s32.totalorder %s26, 0
      %p277 = por %p275, %p276
      %p278 = scmp.ne.s32.totalorder %s270, %s272
      %p279 = scmp.eq.s32.totalorder %s31, 3
      %p280 = por %p278, %p279
      %p281 = scmp.ne.s32.totalorder %s272, %s273
      %p282 = scmp.eq.s32.totalorder %s31, 0
      %p283 = por %p281, %p282
      %p284 = scmp.ne.s32.totalorder %s272, %s273
      %p285 = scmp.eq.s32.totalorder %s32, 3
      %p286 = por %p284, %p285
      %p288 = scmp.ne.s32.totalorder %s273, %s287
      %p289 = scmp.eq.s32.totalorder %s32, 0
      %p290 = por %p288, %p289
      %s291 = ssub.s32 %s33, %s45
      %s292 = ssub.s32 %s34, %s41
      %s293 = sor.u32 %s291, %s292
      %p294 = scmp.eq.s32.totalorder %s293, 0
      %s296 = sadd.s32 %s295, 1
      %s297 = scalar_select %p294, %s295, %s296
      %p300 = pneg %p294
      %p301 = scmp.eq.s32.totalorder %s26, 3
      %p302 = por %p300, %p301
      %p303 = scmp.ne.s32.totalorder %s295, %s298
      %p304 = scmp.eq.s32.totalorder %s26, 0
      %p305 = por %p303, %p304
      %p306 = scmp.ne.s32.totalorder %s295, %s298
      %p307 = scmp.eq.s32.totalorder %s31, 3
      %p308 = por %p306, %p307
      %p309 = scmp.ne.s32.totalorder %s298, %s299
      %p310 = scmp.eq.s32.totalorder %s31, 0
      %p311 = por %p309, %p310
      %p312 = scmp.ne.s32.totalorder %s298, %s299
      %p313 = scmp.eq.s32.totalorder %s32, 3
      %p314 = por %p312, %p313
      %p316 = scmp.ne.s32.totalorder %s299, %s315
      %p317 = scmp.eq.s32.totalorder %s32, 0
      %p318 = por %p316, %p317
      %p319 = scmp.le.s32.totalorder 1, %s26
      %p320 = scmp.lt.s32.totalorder %s26, 5
      %p321 = pnand %p319, %p320
      %p322 = pneg %p321
      // Predicated region
      $region9: #{tpu_custom_call.1} parent=5 // pred_check
        _
      $region10: #{tpu_custom_call.1} parent=5 // pred_check_branch
        %324 = sbr.rel (%p321) target = $region12
      $region11: #{tpu_custom_call.1} parent=5 // pred_region
        %s325 = ssub.s32 %s26, 1
        // Predicated region
        $region13: #{tpu_custom_call.1} parent=11 // pred_check
          %p326 = pneg %p115
        $region14: #{tpu_custom_call.1} parent=11 // pred_check_branch
          %328 = sbr.rel (%p326) target = $region16
        $region15: #{tpu_custom_call.1} parent=11 // pred_region
          _
        $region16: #{tpu_custom_call.1} parent=11 // pred_fallthru
          _
        // Predicated region
        $region17: #{tpu_custom_call.1} parent=11 // pred_check
          %p329 = pneg %p136
        $region18: #{tpu_custom_call.1} parent=11 // pred_check_branch
          %331 = sbr.rel (%p329) target = $region20
        $region19: #{tpu_custom_call.1} parent=11 // pred_region
          _
        $region20: #{tpu_custom_call.1} parent=11 // pred_fallthru
          _
        // Predicated region
        $region21: #{tpu_custom_call.1} parent=11 // pred_check
          %p332 = pneg %p157
        $region22: #{tpu_custom_call.1} parent=11 // pred_check_branch
          %334 = sbr.rel (%p332) target = $region24
        $region23: #{tpu_custom_call.1} parent=11 // pred_region
          _
        $region24: #{tpu_custom_call.1} parent=11 // pred_fallthru
          _
        // Predicated region
        $region25: #{tpu_custom_call.1} parent=11 // pred_check
          %p335 = pneg %p178
        $region26: #{tpu_custom_call.1} parent=11 // pred_check_branch
          %337 = sbr.rel (%p335) target = $region28
        $region27: #{tpu_custom_call.1} parent=11 // pred_region
          _
        $region28: #{tpu_custom_call.1} parent=11 // pred_fallthru
          _
        // Predicated region
        $region29: #{tpu_custom_call.1} parent=11 // pred_check
          %p338 = pneg %p199
        $region30: #{tpu_custom_call.1} parent=11 // pred_check_branch
          %340 = sbr.rel (%p338) target = $region32
        $region31: #{tpu_custom_call.1} parent=11 // pred_region
          _
        $region32: #{tpu_custom_call.1} parent=11 // pred_fallthru
          _
        // Predicated region
        $region33: #{tpu_custom_call.1} parent=11 // pred_check
          %p341 = pneg %p220
        $region34: #{tpu_custom_call.1} parent=11 // pred_check_branch
          %343 = sbr.rel (%p341) target = $region36
        $region35: #{tpu_custom_call.1} parent=11 // pred_region
          _
        $region36: #{tpu_custom_call.1} parent=11 // pred_fallthru
          _
        // Predicated region
        $region37: #{tpu_custom_call.1} parent=11 // pred_check
          %p344 = pneg %p241
        $region38: #{tpu_custom_call.1} parent=11 // pred_check_branch
          %346 = sbr.rel (%p344) target = $region40
        $region39: #{tpu_custom_call.1} parent=11 // pred_region
          _
        $region40: #{tpu_custom_call.1} parent=11 // pred_fallthru
          _
        // Predicated region
        $region41: #{tpu_custom_call.1} parent=11 // pred_check
          %p347 = pneg %p262
        $region42: #{tpu_custom_call.1} parent=11 // pred_check_branch
          %349 = sbr.rel (%p347) target = $region44
        $region43: #{tpu_custom_call.1} parent=11 // pred_region
          _
        $region44: #{tpu_custom_call.1} parent=11 // pred_fallthru
          _
        // Predicated region
        $region45: #{tpu_custom_call.1} parent=11 // pred_check
          %p350 = pneg %p283
        $region46: #{tpu_custom_call.1} parent=11 // pred_check_branch
          %352 = sbr.rel (%p350) target = $region48
        $region47: #{tpu_custom_call.1} parent=11 // pred_region
          _
        $region48: #{tpu_custom_call.1} parent=11 // pred_fallthru
          _
      $region12: #{tpu_custom_call.1} parent=5 // pred_fallthru
        _
      %p353 = scmp.lt.s32.totalorder %s26, 4
      // Predicated region
      $region49: #{tpu_custom_call.1} parent=5 // pred_check
        %p354 = pneg %p353
      $region50: #{tpu_custom_call.1} parent=5 // pred_check_branch
        %356 = sbr.rel (%p354) target = $region52
      $region51: #{tpu_custom_call.1} parent=5 // pred_region
        // Predicated region
        $region53: #{tpu_custom_call.1} parent=51 // pred_check
          %p357 = pneg %p60
        $region54: #{tpu_custom_call.1} parent=51 // pred_check_branch
          %359 = sbr.rel (%p357) target = $region56
        $region55: #{tpu_custom_call.1} parent=51 // pred_region
          %s360 = sand.u32 %s50, 1
          %s361 = scalar_lea.sflag [#allocation4], %s360
          %s362 = sand.u32 %s50, 1
          %s363 = smul.addr %s362, 128
          %s364 = scalar_lea.vmem [#allocation3], %s363
          %s365 = smul.u32 8, %s34
          %s367 = ssub.s32 2048, 2048
          %368 = vsyncadd %s361, %s367
          %s369 = smul.addr %s365, 2
          %s370 = smul.addr %s33, 32
          %s371 = sadd.s32 %s369, %s370
          %s372 = smul.addr %s371, 128
          %s373 = scalar_lea.hbm %s0, %s372
          %s374 = sshll.u32 %s364, 4
          %s375 = int_to_ptr.vmem [resolvable:$true] %s374
          %380 = dma.hbm_to_vmem [thread:$0]  %s373, 2048, %s375, %s361, 128, 128, 8
        $region56: #{tpu_custom_call.1} parent=51 // pred_fallthru
          _
        // Predicated region
        $region57: #{tpu_custom_call.1} parent=51 // pred_check
          %p381 = pneg %p88
        $region58: #{tpu_custom_call.1} parent=51 // pred_check_branch
          %383 = sbr.rel (%p381) target = $region60
        $region59: #{tpu_custom_call.1} parent=51 // pred_region
          %s384 = sand.u32 %s78, 1
          %s385 = scalar_lea.sflag [#allocation7], %s384
          %s386 = sand.u32 %s78, 1
          %s387 = smul.addr %s386, 32
          %s388 = scalar_lea.vmem [#allocation6], %s387
          %s390 = ssub.s32 512, 512
          %391 = vsyncadd %s385, %s390
          %s392 = smul.addr %s34, 4
          %s393 = smul.addr %s33, 8
          %s394 = sadd.s32 %s392, %s393
          %s395 = smul.addr %s394, 128
          %s396 = scalar_lea.hbm %s1, %s395
          %s397 = sshll.u32 %s388, 4
          %s398 = int_to_ptr.vmem [resolvable:$true] %s397
          %403 = dma.hbm_to_vmem [thread:$0]  %s396, 512, %s398, %s385, 128, 128, 8
        $region60: #{tpu_custom_call.1} parent=51 // pred_fallthru
          _
      $region52: #{tpu_custom_call.1} parent=5 // pred_fallthru
        _
      %p404 = scmp.le.s32.totalorder 1, %s26
      %p405 = scmp.lt.s32.totalorder %s26, 5
      %p406 = pnand %p404, %p405
      %p407 = pneg %p406
      // Predicated region
      $region61: #{tpu_custom_call.1} parent=5 // pred_check
        _
      $region62: #{tpu_custom_call.1} parent=5 // pred_check_branch
        %409 = sbr.rel (%p406) target = $region64
      $region63: #{tpu_custom_call.1} parent=5 // pred_region
        %s410 = ssub.s32 %s26, 1
        %s411 = sand.u32 %s53, 1
        %s412 = scalar_lea.sflag [#allocation4], %s411
        %s413 = sand.u32 %s53, 1
        %s414 = smul.addr %s413, 128
        %s415 = scalar_lea.vmem [#allocation3], %s414
        // Predicated region
        $region65: #{tpu_custom_call.1} parent=63 // pred_check
          %p416 = pneg %p66
        $region66: #{tpu_custom_call.1} parent=63 // pred_check_branch
          %418 = sbr.rel (%p416) target = $region68
        $region67: #{tpu_custom_call.1} parent=63 // pred_region
          %419 = dma.done %s412, 2048
        $region68: #{tpu_custom_call.1} parent=63 // pred_fallthru
          _
        %s420 = sand.u32 %s81, 1
        %s421 = scalar_lea.sflag [#allocation7], %s420
        %s422 = sand.u32 %s81, 1
        %s423 = smul.addr %s422, 32
        %s424 = scalar_lea.vmem [#allocation6], %s423
        // Predicated region
        $region69: #{tpu_custom_call.1} parent=63 // pred_check
          %p425 = pneg %p94
        $region70: #{tpu_custom_call.1} parent=63 // pred_check_branch
          %427 = sbr.rel (%p425) target = $region72
        $region71: #{tpu_custom_call.1} parent=63 // pred_region
          %428 = dma.done %s421, 512
        $region72: #{tpu_custom_call.1} parent=63 // pred_fallthru
          _
        %s429 = sand.u32 %s53, 1
        %s430 = scalar_lea.sflag [#allocation4], %s429
        %s431 = sand.u32 %s53, 1
        %s432 = smul.addr %s431, 128
        %s433 = scalar_lea.vmem [#allocation3], %s432
        %p434 = pneg %p66
        %p435 = pneg %p63
        %s436 = sand.u32 %s81, 1
        %s437 = scalar_lea.sflag [#allocation7], %s436
        %s438 = sand.u32 %s81, 1
        %s439 = smul.addr %s438, 32
        %s440 = scalar_lea.vmem [#allocation6], %s439
        %p441 = pneg %p94
        %p442 = pneg %p91
        %p443 = pneg %p115
        %p444 = pneg %p112
        %p445 = pneg %p136
        %p446 = pneg %p133
        %p447 = pneg %p157
        %p448 = pneg %p154
        %p449 = pneg %p178
        %p450 = pneg %p175
        %p451 = pneg %p199
        %p452 = pneg %p196
        %p453 = pneg %p220
        %p454 = pneg %p217
        %p455 = pneg %p241
        %p456 = pneg %p238
        %p457 = pneg %p262
        %p458 = pneg %p259
        %p459 = pneg %p283
        %p460 = pneg %p280
        %p461 = pneg %p311
        %p462 = pneg %p308
        %s463 = sand.u32 %s298, 1
        %s464 = scalar_lea.sflag [#allocation5], %s463
        %s465 = sand.u32 %s298, 1
        %s466 = smul.addr %s465, 128
        %s467 = scalar_lea.vmem [#allocation8], %s466
        %s468 = smul.u32 8, %s36
        %s469 = smul.u32 8, %s36
        %v471 = vld [vmem:[%s415] sm:$0xff]
        %v472 = vld [vmem:[%s415 + $0x8] sm:$0xff]
        %v473 = vld [vmem:[%s415 + $0x10] sm:$0xff]
        %v474 = vld [vmem:[%s415 + $0x18] sm:$0xff]
        %v475 = vld [vmem:[%s415 + $0x20] sm:$0xff]
        %v476 = vld [vmem:[%s415 + $0x28] sm:$0xff]
        %v477 = vld [vmem:[%s415 + $0x30] sm:$0xff]
        %v478 = vld [vmem:[%s415 + $0x38] sm:$0xff]
        %v479 = vld [vmem:[%s415 + $0x40] sm:$0xff]
        %v480 = vld [vmem:[%s415 + $0x48] sm:$0xff]
        %v481 = vld [vmem:[%s415 + $0x50] sm:$0xff]
        %v482 = vld [vmem:[%s415 + $0x58] sm:$0xff]
        %v483 = vld [vmem:[%s415 + $0x60] sm:$0xff]
        %v484 = vld [vmem:[%s415 + $0x68] sm:$0xff]
        %v485 = vld [vmem:[%s415 + $0x70] sm:$0xff]
        %v486 = vld [vmem:[%s415 + $0x78] sm:$0xff]
        %v487 = vpack.c.bf16 %v472, %v471
        %v488 = vpack.c.bf16 %v474, %v473
        %v489 = vpack.c.bf16 %v476, %v475
        %v490 = vpack.c.bf16 %v478, %v477
        %v491 = vpack.c.bf16 %v480, %v479
        %v492 = vpack.c.bf16 %v482, %v481
        %v493 = vpack.c.bf16 %v484, %v483
        %v494 = vpack.c.bf16 %v486, %v485
        %v495 = vld [vmem:[%s2] sm:$0xf]
        %v496 = vld [vmem:[%s2 + $0x4] sm:$0xf]
        %v499 = vunpack.c.l.b16 %v495
        %v500 = vunpack.c.l.b16 %v496
        %v501 = vpack.c.b16 %v500, %v499
        %vm503 = vcmask 130048
        %v505 = vsel %vm503, %v487, 0
        %v508 = vsel %vm503, %v488, 0
        %v511 = vsel %vm503, %v489, 0
        %v514 = vsel %vm503, %v490, 0
        %v517 = vsel %vm503, %v491, 0
        %v520 = vsel %vm503, %v492, 0
        %v523 = vsel %vm503, %v493, 0
        %v526 = vsel %vm503, %v494, 0
        %528 = vmatprep.subr.bf16.mxu0 0
        %529 = vmatpush1.bf16.msra.mxu0 %v501
        %530 = vmatprep.subr.bf16.mxu0 0
        %531 = vmatpush1.bf16.msra.mxu0 0
        %532 = vmatprep.subr.bf16.mxu0 0
        %533 = vmatpush1.bf16.msra.mxu0 0
        %534 = vmatprep.subr.bf16.mxu0 0
        %535 = vmatpush1.bf16.msra.mxu0 0
        %536 = vmatprep.subr.bf16.mxu0 0
        %537 = vmatpush1.bf16.msra.mxu0 0
        %538 = vmatprep.subr.bf16.mxu0 0
        %539 = vmatpush1.bf16.msra.mxu0 0
        %540 = vmatprep.subr.bf16.mxu0 0
        %541 = vmatpush1.bf16.msra.mxu0 0
        %542 = vmatprep.subr.bf16.mxu0 0
        %543 = vmatpush1.bf16.msra.mxu0 0
        %544 = vmatprep.subr.bf16.mxu0 0
        %545 = vmatpush1.bf16.msra.mxu0 0
        %546 = vmatprep.subr.bf16.mxu0 0
        %547 = vmatpush1.bf16.msra.mxu0 0
        %548 = vmatprep.subr.bf16.mxu0 0
        %549 = vmatpush1.bf16.msra.mxu0 0
        %550 = vmatprep.subr.bf16.mxu0 0
        %551 = vmatpush1.bf16.msra.mxu0 0
        %552 = vmatprep.subr.bf16.mxu0 0
        %553 = vmatpush1.bf16.msra.mxu0 0
        %554 = vmatprep.subr.bf16.mxu0 0
        %555 = vmatpush1.bf16.msra.mxu0 0
        %556 = vmatprep.subr.bf16.mxu0 0
        %557 = vmatpush1.bf16.msra.mxu0 0
        %558 = vmatprep.subr.bf16.mxu0 0
        %559 = vmatpush1.bf16.msra.mxu0 0
        %560 = vmatprep.mubr.bf16.mxu0 0
        %561 = vmatmul.mubr.bf16.gmra.mrb[0].mxu0 %v505
        %v562 = vpop.f32.mrb[0].mxu0
        %v563 = vadd.f32 0.0, %v562
        %v564 = vpop.f32.mrb[0].mxu0
        %v565 = vpop.f32.mrb[0].mxu0
        %v566 = vadd.f32 0.0, %v565
        %v567 = vpop.f32.mrb[0].mxu0
        %568 = vmatprep.mubr.bf16.mxu0 0
        %569 = vmatmul.mubr.bf16.gmra.mrb[0].mxu0 %v508
        %v570 = vpop.f32.mrb[0].mxu0
        %v571 = vadd.f32 0.0, %v570
        %v572 = vpop.f32.mrb[0].mxu0
        %v573 = vpop.f32.mrb[0].mxu0
        %v574 = vadd.f32 0.0, %v573
        %v575 = vpop.f32.mrb[0].mxu0
        %576 = vmatprep.mubr.bf16.mxu0 0
        %577 = vmatmul.mubr.bf16.gmra.mrb[0].mxu0 %v511
        %v578 = vpop.f32.mrb[0].mxu0
        %v579 = vadd.f32 0.0, %v578
        %v580 = vpop.f32.mrb[0].mxu0
        %v581 = vpop.f32.mrb[0].mxu0
        %v582 = vadd.f32 0.0, %v581
        %v583 = vpop.f32.mrb[0].mxu0
        %584 = vmatprep.mubr.bf16.mxu0 0
        %585 = vmatmul.mubr.bf16.gmra.mrb[0].mxu0 %v514
        %v586 = vpop.f32.mrb[0].mxu0
        %v587 = vadd.f32 0.0, %v586
        %v588 = vpop.f32.mrb[0].mxu0
        %v589 = vpop.f32.mrb[0].mxu0
        %v590 = vadd.f32 0.0, %v589
        %v591 = vpop.f32.mrb[0].mxu0
        %592 = vmatprep.mubr.bf16.mxu0 0
        %593 = vmatmul.mubr.bf16.gmra.mrb[0].mxu0 %v517
        %v594 = vpop.f32.mrb[0].mxu0
        %v595 = vadd.f32 0.0, %v594
        %v596 = vpop.f32.mrb[0].mxu0
        %v597 = vpop.f32.mrb[0].mxu0
        %v598 = vadd.f32 0.0, %v597
        %v599 = vpop.f32.mrb[0].mxu0
        %600 = vmatprep.mubr.bf16.mxu0 0
        %601 = vmatmul.mubr.bf16.gmra.mrb[0].mxu0 %v520
        %v602 = vpop.f32.mrb[0].mxu0
        %v603 = vadd.f32 0.0, %v602
        %v604 = vpop.f32.mrb[0].mxu0
        %v605 = vpop.f32.mrb[0].mxu0
        %v606 = vadd.f32 0.0, %v605
        %v607 = vpop.f32.mrb[0].mxu0
        %608 = vmatprep.mubr.bf16.mxu0 0
        %609 = vmatmul.mubr.bf16.gmra.mrb[0].mxu0 %v523
        %v610 = vpop.f32.mrb[0].mxu0
        %v611 = vadd.f32 0.0, %v610
        %v612 = vpop.f32.mrb[0].mxu0
        %v613 = vpop.f32.mrb[0].mxu0
        %v614 = vadd.f32 0.0, %v613
        %v615 = vpop.f32.mrb[0].mxu0
        %616 = vmatprep.mubr.bf16.mxu0 0
        %617 = vmatmul.mubr.bf16.gmra.mrb[0].mxu0 %v526
        %v618 = vpop.f32.mrb[0].mxu0
        %v619 = vadd.f32 0.0, %v618
        %v620 = vpop.f32.mrb[0].mxu0
        %v621 = vpop.f32.mrb[0].mxu0
        %v622 = vadd.f32 0.0, %v621
        %v623 = vpop.f32.mrb[0].mxu0
        %624 = vdwg.mxu0
        %v625 = vld [vmem:[%s3] sm:$0x1]
        %v627 = vlaneseq
        %v628 = vshrl.u32 %v627, 7
        %v629 = vsub.s32 0, %v628
        %v630 = vrot.slane %v625, %v629
        %v632 = vmul.f32 %v563, %v630
        %v633 = vmul.f32 %v566, %v630
        %v634 = vmul.f32 %v571, %v630
        %v635 = vmul.f32 %v574, %v630
        %v636 = vmul.f32 %v579, %v630
        %v637 = vmul.f32 %v582, %v630
        %v638 = vmul.f32 %v587, %v630
        %v639 = vmul.f32 %v590, %v630
        %v640 = vmul.f32 %v595, %v630
        %v641 = vmul.f32 %v598, %v630
        %v642 = vmul.f32 %v603, %v630
        %v643 = vmul.f32 %v606, %v630
        %v644 = vmul.f32 %v611, %v630
        %v645 = vmul.f32 %v614, %v630
        %v646 = vmul.f32 %v619, %v630
        %v647 = vmul.f32 %v622, %v630
        %v648 = vld [vmem:[%s4] sm:$0x1]
        %v650 = vlaneseq
        %v651 = vshrl.u32 %v650, 7
        %v652 = vsub.s32 0, %v651
        %v653 = vrot.slane %v648, %v652
        %v655 = vadd.f32 %v632, %v653
        %v656 = vadd.f32 %v633, %v653
        %v657 = vadd.f32 %v634, %v653
        %v658 = vadd.f32 %v635, %v653
        %v659 = vadd.f32 %v636, %v653
        %v660 = vadd.f32 %v637, %v653
        %v661 = vadd.f32 %v638, %v653
        %v662 = vadd.f32 %v639, %v653
        %v663 = vadd.f32 %v640, %v653
        %v664 = vadd.f32 %v641, %v653
        %v665 = vadd.f32 %v642, %v653
        %v666 = vadd.f32 %v643, %v653
        %v667 = vadd.f32 %v644, %v653
        %v668 = vadd.f32 %v645, %v653
        %v669 = vadd.f32 %v646, %v653
        %v670 = vadd.f32 %v647, %v653
        %v671 = vmax.f32 %v655, 0.0
        %v672 = vmax.f32 %v656, 0.0
        %v673 = vmax.f32 %v657, 0.0
        %v674 = vmax.f32 %v658, 0.0
        %v675 = vmax.f32 %v659, 0.0
        %v676 = vmax.f32 %v660, 0.0
        %v677 = vmax.f32 %v661, 0.0
        %v678 = vmax.f32 %v662, 0.0
        %v679 = vmax.f32 %v663, 0.0
        %v680 = vmax.f32 %v664, 0.0
        %v681 = vmax.f32 %v665, 0.0
        %v682 = vmax.f32 %v666, 0.0
        %v683 = vmax.f32 %v667, 0.0
        %v684 = vmax.f32 %v668, 0.0
        %v685 = vmax.f32 %v669, 0.0
        %v686 = vmax.f32 %v670, 0.0
        %v687 = vpack.c.bf16 %v672, %v671
        %v688 = vpack.c.bf16 %v674, %v673
        %v689 = vpack.c.bf16 %v676, %v675
        %v690 = vpack.c.bf16 %v678, %v677
        %v691 = vpack.c.bf16 %v680, %v679
        %v692 = vpack.c.bf16 %v682, %v681
        %v693 = vpack.c.bf16 %v684, %v683
        %v694 = vpack.c.bf16 %v686, %v685
        %s695 = scalar_lea.vmem [#allocation2], 8
        %vm696 = vcmask 31744
        %697 = vst.msk [vmem:[%s695] sm:$0xff] %vm696, %v687
        %698 = vst.msk [vmem:[%s695 + $0x8] sm:$0xff] %vm696, %v688
        %699 = vst.msk [vmem:[%s695 + $0x10] sm:$0xff] %vm696, %v689
        %700 = vst.msk [vmem:[%s695 + $0x18] sm:$0xff] %vm696, %v690
        %701 = vst.msk [vmem:[%s695 + $0x20] sm:$0xff] %vm696, %v691
        %702 = vst.msk [vmem:[%s695 + $0x28] sm:$0xff] %vm696, %v692
        %703 = vst.msk [vmem:[%s695 + $0x30] sm:$0xff] %vm696, %v693
        %704 = vst.msk [vmem:[%s695 + $0x38] sm:$0xff] %vm696, %v694
        %v705 = vld [vmem:[%s424] sm:$0xff]
        %v706 = vld [vmem:[%s424 + $0x8] sm:$0xff]
        %v707 = vld [vmem:[%s424 + $0x10] sm:$0xff]
        %v708 = vld [vmem:[%s424 + $0x18] sm:$0xff]
        %v709 = vpack.c.bf16 %v706, %v705
        %v710 = vpack.c.bf16 %v708, %v707
        %v711 = vld [vmem:[%s2] sm:$0xf]
        %v712 = vld [vmem:[%s2 + $0x4] sm:$0xf]
        %v715 = vunpack.c.l.b16 %v711
        %v716 = vunpack.c.l.b16 %v712
        %v717 = vpack.c.b16 %v716, %v715
        %v720 = vsel %vm503, %v709, 0
        %v723 = vsel %vm503, %v710, 0
        %725 = vmatprep.subr.bf16.mxu0 0
        %726 = vmatpush1.bf16.msra.mxu0 %v717
        %727 = vmatprep.subr.bf16.mxu0 0
        %728 = vmatpush1.bf16.msra.mxu0 0
        %729 = vmatprep.subr.bf16.mxu0 0
        %730 = vmatpush1.bf16.msra.mxu0 0
        %731 = vmatprep.subr.bf16.mxu0 0
        %732 = vmatpush1.bf16.msra.mxu0 0
        %733 = vmatprep.subr.bf16.mxu0 0
        %734 = vmatpush1.bf16.msra.mxu0 0
        %735 = vmatprep.subr.bf16.mxu0 0
        %736 = vmatpush1.bf16.msra.mxu0 0
        %737 = vmatprep.subr.bf16.mxu0 0
        %738 = vmatpush1.bf16.msra.mxu0 0
        %739 = vmatprep.subr.bf16.mxu0 0
        %740 = vmatpush1.bf16.msra.mxu0 0
        %741 = vmatprep.subr.bf16.mxu0 0
        %742 = vmatpush1.bf16.msra.mxu0 0
        %743 = vmatprep.subr.bf16.mxu0 0
        %744 = vmatpush1.bf16.msra.mxu0 0
        %745 = vmatprep.subr.bf16.mxu0 0
        %746 = vmatpush1.bf16.msra.mxu0 0
        %747 = vmatprep.subr.bf16.mxu0 0
        %748 = vmatpush1.bf16.msra.mxu0 0
        %749 = vmatprep.subr.bf16.mxu0 0
        %750 = vmatpush1.bf16.msra.mxu0 0
        %751 = vmatprep.subr.bf16.mxu0 0
        %752 = vmatpush1.bf16.msra.mxu0 0
        %753 = vmatprep.subr.bf16.mxu0 0
        %754 = vmatpush1.bf16.msra.mxu0 0
        %755 = vmatprep.subr.bf16.mxu0 0
        %756 = vmatpush1.bf16.msra.mxu0 0
        %757 = vmatprep.mubr.bf16.mxu0 0
        %758 = vmatmul.mubr.bf16.gmra.mrb[0].mxu0 %v720
        %v759 = vpop.f32.mrb[0].mxu0
        %v760 = vadd.f32 0.0, %v759
        %v761 = vpop.f32.mrb[0].mxu0
        %v762 = vpop.f32.mrb[0].mxu0
        %v763 = vadd.f32 0.0, %v762
        %v764 = vpop.f32.mrb[0].mxu0
        %765 = vmatprep.mubr.bf16.mxu0 0
        %766 = vmatmul.mubr.bf16.gmra.mrb[0].mxu0 %v723
        %v767 = vpop.f32.mrb[0].mxu0
        %v768 = vadd.f32 0.0, %v767
        %v769 = vpop.f32.mrb[0].mxu0
        %v770 = vpop.f32.mrb[0].mxu0
        %v771 = vadd.f32 0.0, %v770
        %v772 = vpop.f32.mrb[0].mxu0
        %773 = vdwg.mxu0
        %v774 = vld [vmem:[%s3] sm:$0x1]
        %v776 = vlaneseq
        %v777 = vshrl.u32 %v776, 7
        %v778 = vsub.s32 0, %v777
        %v779 = vrot.slane %v774, %v778
        %v781 = vmul.f32 %v760, %v779
        %v782 = vmul.f32 %v763, %v779
        %v783 = vmul.f32 %v768, %v779
        %v784 = vmul.f32 %v771, %v779
        %v785 = vld [vmem:[%s4] sm:$0x1]
        %v787 = vlaneseq
        %v788 = vshrl.u32 %v787, 7
        %v789 = vsub.s32 0, %v788
        %v790 = vrot.slane %v785, %v789
        %v792 = vadd.f32 %v781, %v790
        %v793 = vadd.f32 %v782, %v790
        %v794 = vadd.f32 %v783, %v790
        %v795 = vadd.f32 %v784, %v790
        %v796 = vmax.f32 %v792, 0.0
        %v797 = vmax.f32 %v793, 0.0
        %v798 = vmax.f32 %v794, 0.0
        %v799 = vmax.f32 %v795, 0.0
        %p800 = scmp.gt.s32.totalorder %s36, 0
        %s801 = scalar_select %p800, 1, 0
        %s802 = scvt.s32.f32 %s801
        %p803 = scmp.lt.s32.totalorder %s36, 1
        %s804 = scalar_select %p803, 1, 0
        %s805 = scvt.s32.f32 %s804
        %v806 = vstv %s802
        %v807 = vmul.f32 %v796, %v806
        %v808 = vmul.f32 %v797, %v806
        %v809 = vpack.c.bf16 %v808, %v807
        %810 = vst.msk [vmem:[#allocation2] sm:$0xff] %vm696, %v809
        %v811 = vstv %s805
        %v812 = vmul.f32 %v798, %v811
        %v813 = vmul.f32 %v799, %v811
        %v814 = vpack.c.bf16 %v813, %v812
        %s815 = scalar_lea.vmem [#allocation2], 72
        %816 = vst.msk [vmem:[%s815] sm:$0xff] %vm696, %v814
        %v817 = vld [vmem:[#allocation2] sm:$0xff]
        %v818 = vld [vmem:[#allocation2 + $0x8] sm:$0xff]
        %v819 = vld [vmem:[#allocation2 + $0x10] sm:$0xff]
        %v820 = vld [vmem:[#allocation2 + $0x18] sm:$0xff]
        %v821 = vld [vmem:[#allocation2 + $0x20] sm:$0xff]
        %v822 = vld [vmem:[#allocation2 + $0x28] sm:$0xff]
        %v823 = vld [vmem:[#allocation2 + $0x30] sm:$0xff]
        %v824 = vld [vmem:[#allocation2 + $0x38] sm:$0xff]
        %v825 = vld [vmem:[#allocation2 + $0x40] sm:$0xff]
        %v826 = vld [vmem:[#allocation2 + $0x48] sm:$0xff]
        %v828 = vshrl.u32 %v817, 16
        %v830 = vrot.slane %v828, 7
        %v831 = vshll.u32 %v817, 16
        %v833 = vor.u32 %v830, %v831
        %v835 = vshrl.u32 %v818, 16
        %v837 = vrot.slane %v835, 7
        %v838 = vshll.u32 %v818, 16
        %v840 = vor.u32 %v837, %v838
        %v842 = vshrl.u32 %v819, 16
        %v844 = vrot.slane %v842, 7
        %v845 = vshll.u32 %v819, 16
        %v847 = vor.u32 %v844, %v845
        %v849 = vshrl.u32 %v820, 16
        %v851 = vrot.slane %v849, 7
        %v852 = vshll.u32 %v820, 16
        %v854 = vor.u32 %v851, %v852
        %v856 = vshrl.u32 %v821, 16
        %v858 = vrot.slane %v856, 7
        %v859 = vshll.u32 %v821, 16
        %v861 = vor.u32 %v858, %v859
        %v863 = vshrl.u32 %v822, 16
        %v865 = vrot.slane %v863, 7
        %v866 = vshll.u32 %v822, 16
        %v868 = vor.u32 %v865, %v866
        %v870 = vshrl.u32 %v823, 16
        %v872 = vrot.slane %v870, 7
        %v873 = vshll.u32 %v823, 16
        %v875 = vor.u32 %v872, %v873
        %v877 = vshrl.u32 %v824, 16
        %v879 = vrot.slane %v877, 7
        %v880 = vshll.u32 %v824, 16
        %v882 = vor.u32 %v879, %v880
        %v884 = vshrl.u32 %v825, 16
        %v886 = vrot.slane %v884, 7
        %v887 = vshll.u32 %v825, 16
        %v889 = vor.u32 %v886, %v887
        %v891 = vshrl.u32 %v826, 16
        %v893 = vrot.slane %v891, 7
        %v894 = vshll.u32 %v826, 16
        %v896 = vor.u32 %v893, %v894
        %vm907 = vcmask 1040384
        %vm908 = vsmask.f32 256
        %vm909 = vmand %vm907, %vm908
        %v910 = vsel %vm909, 0, %v833
        %v911 = vsel %vm909, 0, %v840
        %v912 = vsel %vm909, 0, %v847
        %v913 = vsel %vm909, 0, %v854
        %v914 = vsel %vm909, 0, %v861
        %v915 = vsel %vm909, 0, %v868
        %v916 = vsel %vm909, 0, %v875
        %v917 = vsel %vm909, 0, %v882
        %v918 = vsel %vm909, 0, %v889
        %v919 = vsel %vm909, 0, %v896
        %v920 = vrot.slane %v831, 1
        %v921 = vor.u32 %v828, %v920
        %v922 = vrot.slane %v838, 1
        %v923 = vor.u32 %v835, %v922
        %v924 = vrot.slane %v845, 1
        %v925 = vor.u32 %v842, %v924
        %v926 = vrot.slane %v852, 1
        %v927 = vor.u32 %v849, %v926
        %v928 = vrot.slane %v859, 1
        %v929 = vor.u32 %v856, %v928
        %v930 = vrot.slane %v866, 1
        %v931 = vor.u32 %v863, %v930
        %v932 = vrot.slane %v873, 1
        %v933 = vor.u32 %v870, %v932
        %v934 = vrot.slane %v880, 1
        %v935 = vor.u32 %v877, %v934
        %v936 = vrot.slane %v887, 1
        %v937 = vor.u32 %v884, %v936
        %v938 = vrot.slane %v894, 1
        %v939 = vor.u32 %v891, %v938
        %vm950 = vcmask 1047552
        %vm951 = vsmask.f32 7424
        %vm952 = vmand %vm950, %vm951
        %v953 = vsel %vm952, %v921, 0
        %v954 = vsel %vm952, %v923, 0
        %v955 = vsel %vm952, %v925, 0
        %v956 = vsel %vm952, %v927, 0
        %v957 = vsel %vm952, %v929, 0
        %v958 = vsel %vm952, %v931, 0
        %v959 = vsel %vm952, %v933, 0
        %v960 = vsel %vm952, %v935, 0
        %v961 = vsel %vm952, %v937, 0
        %v962 = vsel %vm952, %v939, 0
        %v963 = vld [vmem:[%s5] sm:$0x3]
        %s964 = scalar_lea.vmem %s5, 2
        %v965 = vld [vmem:[%s964] sm:$0x3]
        %v966 = vsel %vm696, %v817, 0
        %v968 = vsel %vm696, %v818, 0
        %v970 = vsel %vm696, %v819, 0
        %v972 = vsel %vm696, %v820, 0
        %v974 = vsel %vm696, %v821, 0
        %v976 = vsel %vm696, %v822, 0
        %v978 = vsel %vm696, %v823, 0
        %v980 = vsel %vm696, %v824, 0
        %vm982 = vcmask 1041408
        %v984 = vsel %vm982, %v965, 0
        %986 = vmatprep.subr.bf16.mxu0 0
        %987 = vmatpush1.bf16.msra.mxu0 %v984
        %988 = vmatprep.subr.bf16.mxu0 0
        %989 = vmatpush1.bf16.msra.mxu0 0
        %990 = vmatprep.subr.bf16.mxu0 0
        %991 = vmatpush1.bf16.msra.mxu0 0
        %992 = vmatprep.subr.bf16.mxu0 0
        %993 = vmatpush1.bf16.msra.mxu0 0
        %994 = vmatprep.subr.bf16.mxu0 0
        %995 = vmatpush1.bf16.msra.mxu0 0
        %996 = vmatprep.subr.bf16.mxu0 0
        %997 = vmatpush1.bf16.msra.mxu0 0
        %998 = vmatprep.subr.bf16.mxu0 0
        %999 = vmatpush1.bf16.msra.mxu0 0
        %1000 = vmatprep.subr.bf16.mxu0 0
        %1001 = vmatpush1.bf16.msra.mxu0 0
        %1002 = vmatprep.subr.bf16.mxu0 0
        %1003 = vmatpush1.bf16.msra.mxu0 0
        %1004 = vmatprep.subr.bf16.mxu0 0
        %1005 = vmatpush1.bf16.msra.mxu0 0
        %1006 = vmatprep.subr.bf16.mxu0 0
        %1007 = vmatpush1.bf16.msra.mxu0 0
        %1008 = vmatprep.subr.bf16.mxu0 0
        %1009 = vmatpush1.bf16.msra.mxu0 0
        %1010 = vmatprep.subr.bf16.mxu0 0
        %1011 = vmatpush1.bf16.msra.mxu0 0
        %1012 = vmatprep.subr.bf16.mxu0 0
        %1013 = vmatpush1.bf16.msra.mxu0 0
        %1014 = vmatprep.subr.bf16.mxu0 0
        %1015 = vmatpush1.bf16.msra.mxu0 0
        %1016 = vmatprep.subr.bf16.mxu0 0
        %1017 = vmatpush1.bf16.msra.mxu0 0
        %1018 = vmatprep.mubr.bf16.mxu0 0
        %1019 = vmatmul.mubr.bf16.gmra.mrb[0].mxu0 %v966
        %v1020 = vpop.f32.mrb[0].mxu0
        %v1021 = vadd.f32 0.0, %v1020
        %v1022 = vpop.f32.mrb[0].mxu0
        %v1023 = vpop.f32.mrb[0].mxu0
        %v1024 = vadd.f32 0.0, %v1023
        %v1025 = vpop.f32.mrb[0].mxu0
        %1026 = vmatprep.mubr.bf16.mxu0 0
        %1027 = vmatmul.mubr.bf16.gmra.mrb[0].mxu0 %v968
        %v1028 = vpop.f32.mrb[0].mxu0
        %v1029 = vadd.f32 0.0, %v1028
        %v1030 = vpop.f32.mrb[0].mxu0
        %v1031 = vpop.f32.mrb[0].mxu0
        %v1032 = vadd.f32 0.0, %v1031
        %v1033 = vpop.f32.mrb[0].mxu0
        %1034 = vmatprep.mubr.bf16.mxu0 0
        %1035 = vmatmul.mubr.bf16.gmra.mrb[0].mxu0 %v970
        %v1036 = vpop.f32.mrb[0].mxu0
        %v1037 = vadd.f32 0.0, %v1036
        %v1038 = vpop.f32.mrb[0].mxu0
        %v1039 = vpop.f32.mrb[0].mxu0
        %v1040 = vadd.f32 0.0, %v1039
        %v1041 = vpop.f32.mrb[0].mxu0
        %1042 = vmatprep.mubr.bf16.mxu0 0
        %1043 = vmatmul.mubr.bf16.gmra.mrb[0].mxu0 %v972
        %v1044 = vpop.f32.mrb[0].mxu0
        %v1045 = vadd.f32 0.0, %v1044
        %v1046 = vpop.f32.mrb[0].mxu0
        %v1047 = vpop.f32.mrb[0].mxu0
        %v1048 = vadd.f32 0.0, %v1047
        %v1049 = vpop.f32.mrb[0].mxu0
        %1050 = vmatprep.mubr.bf16.mxu0 0
        %1051 = vmatmul.mubr.bf16.gmra.mrb[0].mxu0 %v974
        %v1052 = vpop.f32.mrb[0].mxu0
        %v1053 = vadd.f32 0.0, %v1052
        %v1054 = vpop.f32.mrb[0].mxu0
        %v1055 = vpop.f32.mrb[0].mxu0
        %v1056 = vadd.f32 0.0, %v1055
        %v1057 = vpop.f32.mrb[0].mxu0
        %1058 = vmatprep.mubr.bf16.mxu0 0
        %1059 = vmatmul.mubr.bf16.gmra.mrb[0].mxu0 %v976
        %v1060 = vpop.f32.mrb[0].mxu0
        %v1061 = vadd.f32 0.0, %v1060
        %v1062 = vpop.f32.mrb[0].mxu0
        %v1063 = vpop.f32.mrb[0].mxu0
        %v1064 = vadd.f32 0.0, %v1063
        %v1065 = vpop.f32.mrb[0].mxu0
        %1066 = vmatprep.mubr.bf16.mxu0 0
        %1067 = vmatmul.mubr.bf16.gmra.mrb[0].mxu0 %v978
        %v1068 = vpop.f32.mrb[0].mxu0
        %v1069 = vadd.f32 0.0, %v1068
        %v1070 = vpop.f32.mrb[0].mxu0
        %v1071 = vpop.f32.mrb[0].mxu0
        %v1072 = vadd.f32 0.0, %v1071
        %v1073 = vpop.f32.mrb[0].mxu0
        %1074 = vmatprep.mubr.bf16.mxu0 0
        %1075 = vmatmul.mubr.bf16.gmra.mrb[0].mxu0 %v980
        %v1076 = vpop.f32.mrb[0].mxu0
        %v1077 = vadd.f32 0.0, %v1076
        %v1078 = vpop.f32.mrb[0].mxu0
        %v1079 = vpop.f32.mrb[0].mxu0
        %v1080 = vadd.f32 0.0, %v1079
        %v1081 = vpop.f32.mrb[0].mxu0
        %1082 = vdwg.mxu0
        %v1084 = vsel %vm696, %v910, 0
        %v1087 = vsel %vm696, %v911, 0
        %v1090 = vsel %vm696, %v912, 0
        %v1093 = vsel %vm696, %v913, 0
        %v1096 = vsel %vm696, %v914, 0
        %v1099 = vsel %vm696, %v915, 0
        %v1102 = vsel %vm696, %v916, 0
        %v1105 = vsel %vm696, %v917, 0
        %v1108 = vsel %vm982, %v963, 0
        %1110 = vmatprep.subr.bf16.mxu0 0
        %1111 = vmatpush1.bf16.msra.mxu0 %v1108
        %1112 = vmatprep.subr.bf16.mxu0 0
        %1113 = vmatpush1.bf16.msra.mxu0 0
        %1114 = vmatprep.subr.bf16.mxu0 0
        %1115 = vmatpush1.bf16.msra.mxu0 0
        %1116 = vmatprep.subr.bf16.mxu0 0
        %1117 = vmatpush1.bf16.msra.mxu0 0
        %1118 = vmatprep.subr.bf16.mxu0 0
        %1119 = vmatpush1.bf16.msra.mxu0 0
        %1120 = vmatprep.subr.bf16.mxu0 0
        %1121 = vmatpush1.bf16.msra.mxu0 0
        %1122 = vmatprep.subr.bf16.mxu0 0
        %1123 = vmatpush1.bf16.msra.mxu0 0
        %1124 = vmatprep.subr.bf16.mxu0 0
        %1125 = vmatpush1.bf16.msra.mxu0 0
        %1126 = vmatprep.subr.bf16.mxu0 0
        %1127 = vmatpush1.bf16.msra.mxu0 0
        %1128 = vmatprep.subr.bf16.mxu0 0
        %1129 = vmatpush1.bf16.msra.mxu0 0
        %1130 = vmatprep.subr.bf16.mxu0 0
        %1131 = vmatpush1.bf16.msra.mxu0 0
        %1132 = vmatprep.subr.bf16.mxu0 0
        %1133 = vmatpush1.bf16.msra.mxu0 0
        %1134 = vmatprep.subr.bf16.mxu0 0
        %1135 = vmatpush1.bf16.msra.mxu0 0
        %1136 = vmatprep.subr.bf16.mxu0 0
        %1137 = vmatpush1.bf16.msra.mxu0 0
        %1138 = vmatprep.subr.bf16.mxu0 0
        %1139 = vmatpush1.bf16.msra.mxu0 0
        %1140 = vmatprep.subr.bf16.mxu0 0
        %1141 = vmatpush1.bf16.msra.mxu0 0
        %1142 = vmatprep.mubr.bf16.mxu0 0
        %1143 = vmatmul.mubr.bf16.gmra.mrb[0].mxu0 %v1084
        %v1144 = vpop.f32.mrb[0].mxu0
        %v1145 = vadd.f32 %v1021, %v1144
        %v1146 = vpop.f32.mrb[0].mxu0
        %v1147 = vpop.f32.mrb[0].mxu0
        %v1148 = vadd.f32 %v1024, %v1147
        %v1149 = vpop.f32.mrb[0].mxu0
        %1150 = vmatprep.mubr.bf16.mxu0 0
        %1151 = vmatmul.mubr.bf16.gmra.mrb[0].mxu0 %v1087
        %v1152 = vpop.f32.mrb[0].mxu0
        %v1153 = vadd.f32 %v1029, %v1152
        %v1154 = vpop.f32.mrb[0].mxu0
        %v1155 = vpop.f32.mrb[0].mxu0
        %v1156 = vadd.f32 %v1032, %v1155
        %v1157 = vpop.f32.mrb[0].mxu0
        %1158 = vmatprep.mubr.bf16.mxu0 0
        %1159 = vmatmul.mubr.bf16.gmra.mrb[0].mxu0 %v1090
        %v1160 = vpop.f32.mrb[0].mxu0
        %v1161 = vadd.f32 %v1037, %v1160
        %v1162 = vpop.f32.mrb[0].mxu0
        %v1163 = vpop.f32.mrb[0].mxu0
        %v1164 = vadd.f32 %v1040, %v1163
        %v1165 = vpop.f32.mrb[0].mxu0
        %1166 = vmatprep.mubr.bf16.mxu0 0
        %1167 = vmatmul.mubr.bf16.gmra.mrb[0].mxu0 %v1093
        %v1168 = vpop.f32.mrb[0].mxu0
        %v1169 = vadd.f32 %v1045, %v1168
        %v1170 = vpop.f32.mrb[0].mxu0
        %v1171 = vpop.f32.mrb[0].mxu0
        %v1172 = vadd.f32 %v1048, %v1171
        %v1173 = vpop.f32.mrb[0].mxu0
        %1174 = vmatprep.mubr.bf16.mxu0 0
        %1175 = vmatmul.mubr.bf16.gmra.mrb[0].mxu0 %v1096
        %v1176 = vpop.f32.mrb[0].mxu0
        %v1177 = vadd.f32 %v1053, %v1176
        %v1178 = vpop.f32.mrb[0].mxu0
        %v1179 = vpop.f32.mrb[0].mxu0
        %v1180 = vadd.f32 %v1056, %v1179
        %v1181 = vpop.f32.mrb[0].mxu0
        %1182 = vmatprep.mubr.bf16.mxu0 0
        %1183 = vmatmul.mubr.bf16.gmra.mrb[0].mxu0 %v1099
        %v1184 = vpop.f32.mrb[0].mxu0
        %v1185 = vadd.f32 %v1061, %v1184
        %v1186 = vpop.f32.mrb[0].mxu0
        %v1187 = vpop.f32.mrb[0].mxu0
        %v1188 = vadd.f32 %v1064, %v1187
        %v1189 = vpop.f32.mrb[0].mxu0
        %1190 = vmatprep.mubr.bf16.mxu0 0
        %1191 = vmatmul.mubr.bf16.gmra.mrb[0].mxu0 %v1102
        %v1192 = vpop.f32.mrb[0].mxu0
        %v1193 = vadd.f32 %v1069, %v1192
        %v1194 = vpop.f32.mrb[0].mxu0
        %v1195 = vpop.f32.mrb[0].mxu0
        %v1196 = vadd.f32 %v1072, %v1195
        %v1197 = vpop.f32.mrb[0].mxu0
        %1198 = vmatprep.mubr.bf16.mxu0 0
        %1199 = vmatmul.mubr.bf16.gmra.mrb[0].mxu0 %v1105
        %v1200 = vpop.f32.mrb[0].mxu0
        %v1201 = vadd.f32 %v1077, %v1200
        %v1202 = vpop.f32.mrb[0].mxu0
        %v1203 = vpop.f32.mrb[0].mxu0
        %v1204 = vadd.f32 %v1080, %v1203
        %v1205 = vpop.f32.mrb[0].mxu0
        %1206 = vdwg.mxu0
        %s1207 = scalar_lea.vmem %s5, 4
        %v1208 = vld [vmem:[%s1207] sm:$0x3]
        %v1210 = vsel %vm696, %v953, 0
        %v1213 = vsel %vm696, %v954, 0
        %v1216 = vsel %vm696, %v955, 0
        %v1219 = vsel %vm696, %v956, 0
        %v1222 = vsel %vm696, %v957, 0
        %v1225 = vsel %vm696, %v958, 0
        %v1228 = vsel %vm696, %v959, 0
        %v1231 = vsel %vm696, %v960, 0
        %v1234 = vsel %vm982, %v1208, 0
        %1236 = vmatprep.subr.bf16.mxu0 0
        %1237 = vmatpush1.bf16.msra.mxu0 %v1234
        %1238 = vmatprep.subr.bf16.mxu0 0
        %1239 = vmatpush1.bf16.msra.mxu0 0
        %1240 = vmatprep.subr.bf16.mxu0 0
        %1241 = vmatpush1.bf16.msra.mxu0 0
        %1242 = vmatprep.subr.bf16.mxu0 0
        %1243 = vmatpush1.bf16.msra.mxu0 0
        %1244 = vmatprep.subr.bf16.mxu0 0
        %1245 = vmatpush1.bf16.msra.mxu0 0
        %1246 = vmatprep.subr.bf16.mxu0 0
        %1247 = vmatpush1.bf16.msra.mxu0 0
        %1248 = vmatprep.subr.bf16.mxu0 0
        %1249 = vmatpush1.bf16.msra.mxu0 0
        %1250 = vmatprep.subr.bf16.mxu0 0
        %1251 = vmatpush1.bf16.msra.mxu0 0
        %1252 = vmatprep.subr.bf16.mxu0 0
        %1253 = vmatpush1.bf16.msra.mxu0 0
        %1254 = vmatprep.subr.bf16.mxu0 0
        %1255 = vmatpush1.bf16.msra.mxu0 0
        %1256 = vmatprep.subr.bf16.mxu0 0
        %1257 = vmatpush1.bf16.msra.mxu0 0
        %1258 = vmatprep.subr.bf16.mxu0 0
        %1259 = vmatpush1.bf16.msra.mxu0 0
        %1260 = vmatprep.subr.bf16.mxu0 0
        %1261 = vmatpush1.bf16.msra.mxu0 0
        %1262 = vmatprep.subr.bf16.mxu0 0
        %1263 = vmatpush1.bf16.msra.mxu0 0
        %1264 = vmatprep.subr.bf16.mxu0 0
        %1265 = vmatpush1.bf16.msra.mxu0 0
        %1266 = vmatprep.subr.bf16.mxu0 0
        %1267 = vmatpush1.bf16.msra.mxu0 0
        %1268 = vmatprep.mubr.bf16.mxu0 0
        %1269 = vmatmul.mubr.bf16.gmra.mrb[0].mxu0 %v1210
        %v1270 = vpop.f32.mrb[0].mxu0
        %v1271 = vadd.f32 0.0, %v1270
        %v1272 = vpop.f32.mrb[0].mxu0
        %v1273 = vpop.f32.mrb[0].mxu0
        %v1274 = vadd.f32 0.0, %v1273
        %v1275 = vpop.f32.mrb[0].mxu0
        %1276 = vmatprep.mubr.bf16.mxu0 0
        %1277 = vmatmul.mubr.bf16.gmra.mrb[0].mxu0 %v1213
        %v1278 = vpop.f32.mrb[0].mxu0
        %v1279 = vadd.f32 0.0, %v1278
        %v1280 = vpop.f32.mrb[0].mxu0
        %v1281 = vpop.f32.mrb[0].mxu0
        %v1282 = vadd.f32 0.0, %v1281
        %v1283 = vpop.f32.mrb[0].mxu0
        %1284 = vmatprep.mubr.bf16.mxu0 0
        %1285 = vmatmul.mubr.bf16.gmra.mrb[0].mxu0 %v1216
        %v1286 = vpop.f32.mrb[0].mxu0
        %v1287 = vadd.f32 0.0, %v1286
        %v1288 = vpop.f32.mrb[0].mxu0
        %v1289 = vpop.f32.mrb[0].mxu0
        %v1290 = vadd.f32 0.0, %v1289
        %v1291 = vpop.f32.mrb[0].mxu0
        %1292 = vmatprep.mubr.bf16.mxu0 0
        %1293 = vmatmul.mubr.bf16.gmra.mrb[0].mxu0 %v1219
        %v1294 = vpop.f32.mrb[0].mxu0
        %v1295 = vadd.f32 0.0, %v1294
        %v1296 = vpop.f32.mrb[0].mxu0
        %v1297 = vpop.f32.mrb[0].mxu0
        %v1298 = vadd.f32 0.0, %v1297
        %v1299 = vpop.f32.mrb[0].mxu0
        %1300 = vmatprep.mubr.bf16.mxu0 0
        %1301 = vmatmul.mubr.bf16.gmra.mrb[0].mxu0 %v1222
        %v1302 = vpop.f32.mrb[0].mxu0
        %v1303 = vadd.f32 0.0, %v1302
        %v1304 = vpop.f32.mrb[0].mxu0
        %v1305 = vpop.f32.mrb[0].mxu0
        %v1306 = vadd.f32 0.0, %v1305
        %v1307 = vpop.f32.mrb[0].mxu0
        %1308 = vmatprep.mubr.bf16.mxu0 0
        %1309 = vmatmul.mubr.bf16.gmra.mrb[0].mxu0 %v1225
        %v1310 = vpop.f32.mrb[0].mxu0
        %v1311 = vadd.f32 0.0, %v1310
        %v1312 = vpop.f32.mrb[0].mxu0
        %v1313 = vpop.f32.mrb[0].mxu0
        %v1314 = vadd.f32 0.0, %v1313
        %v1315 = vpop.f32.mrb[0].mxu0
        %1316 = vmatprep.mubr.bf16.mxu0 0
        %1317 = vmatmul.mubr.bf16.gmra.mrb[0].mxu0 %v1228
        %v1318 = vpop.f32.mrb[0].mxu0
        %v1319 = vadd.f32 0.0, %v1318
        %v1320 = vpop.f32.mrb[0].mxu0
        %v1321 = vpop.f32.mrb[0].mxu0
        %v1322 = vadd.f32 0.0, %v1321
        %v1323 = vpop.f32.mrb[0].mxu0
        %1324 = vmatprep.mubr.bf16.mxu0 0
        %1325 = vmatmul.mubr.bf16.gmra.mrb[0].mxu0 %v1231
        %v1326 = vpop.f32.mrb[0].mxu0
        %v1327 = vadd.f32 0.0, %v1326
        %v1328 = vpop.f32.mrb[0].mxu0
        %v1329 = vpop.f32.mrb[0].mxu0
        %v1330 = vadd.f32 0.0, %v1329
        %v1331 = vpop.f32.mrb[0].mxu0
        %1332 = vdwg.mxu0
        %v1333 = vadd.f32 %v1145, %v1271
        %v1334 = vadd.f32 %v1148, %v1274
        %v1335 = vadd.f32 %v1153, %v1279
        %v1336 = vadd.f32 %v1156, %v1282
        %v1337 = vadd.f32 %v1161, %v1287
        %v1338 = vadd.f32 %v1164, %v1290
        %v1339 = vadd.f32 %v1169, %v1295
        %v1340 = vadd.f32 %v1172, %v1298
        %v1341 = vadd.f32 %v1177, %v1303
        %v1342 = vadd.f32 %v1180, %v1306
        %v1343 = vadd.f32 %v1185, %v1311
        %v1344 = vadd.f32 %v1188, %v1314
        %v1345 = vadd.f32 %v1193, %v1319
        %v1346 = vadd.f32 %v1196, %v1322
        %v1347 = vadd.f32 %v1201, %v1327
        %v1348 = vadd.f32 %v1204, %v1330
        %s1349 = scalar_lea.vmem %s5, 6
        %v1350 = vld [vmem:[%s1349] sm:$0x3]
        %v1352 = vsel %vm696, %v918, 0
        %v1355 = vsel %vm982, %v1350, 0
        %1357 = vmatprep.subr.bf16.mxu0 0
        %1358 = vmatpush1.bf16.msra.mxu0 %v1355
        %1359 = vmatprep.subr.bf16.mxu0 0
        %1360 = vmatpush1.bf16.msra.mxu0 0
        %1361 = vmatprep.subr.bf16.mxu0 0
        %1362 = vmatpush1.bf16.msra.mxu0 0
        %1363 = vmatprep.subr.bf16.mxu0 0
        %1364 = vmatpush1.bf16.msra.mxu0 0
        %1365 = vmatprep.subr.bf16.mxu0 0
        %1366 = vmatpush1.bf16.msra.mxu0 0
        %1367 = vmatprep.subr.bf16.mxu0 0
        %1368 = vmatpush1.bf16.msra.mxu0 0
        %1369 = vmatprep.subr.bf16.mxu0 0
        %1370 = vmatpush1.bf16.msra.mxu0 0
        %1371 = vmatprep.subr.bf16.mxu0 0
        %1372 = vmatpush1.bf16.msra.mxu0 0
        %1373 = vmatprep.subr.bf16.mxu0 0
        %1374 = vmatpush1.bf16.msra.mxu0 0
        %1375 = vmatprep.subr.bf16.mxu0 0
        %1376 = vmatpush1.bf16.msra.mxu0 0
        %1377 = vmatprep.subr.bf16.mxu0 0
        %1378 = vmatpush1.bf16.msra.mxu0 0
        %1379 = vmatprep.subr.bf16.mxu0 0
        %1380 = vmatpush1.bf16.msra.mxu0 0
        %1381 = vmatprep.subr.bf16.mxu0 0
        %1382 = vmatpush1.bf16.msra.mxu0 0
        %1383 = vmatprep.subr.bf16.mxu0 0
        %1384 = vmatpush1.bf16.msra.mxu0 0
        %1385 = vmatprep.subr.bf16.mxu0 0
        %1386 = vmatpush1.bf16.msra.mxu0 0
        %1387 = vmatprep.subr.bf16.mxu0 0
        %1388 = vmatpush1.bf16.msra.mxu0 0
        %1389 = vmatprep.mubr.bf16.mxu0 0
        %1390 = vmatmul.mubr.bf16.gmra.mrb[0].mxu0 %v1087
        %v1391 = vpop.f32.mrb[0].mxu0
        %v1392 = vadd.f32 0.0, %v1391
        %v1393 = vpop.f32.mrb[0].mxu0
        %v1394 = vpop.f32.mrb[0].mxu0
        %v1395 = vadd.f32 0.0, %v1394
        %v1396 = vpop.f32.mrb[0].mxu0
        %1397 = vmatprep.mubr.bf16.mxu0 0
        %1398 = vmatmul.mubr.bf16.gmra.mrb[0].mxu0 %v1090
        %v1399 = vpop.f32.mrb[0].mxu0
        %v1400 = vadd.f32 0.0, %v1399
        %v1401 = vpop.f32.mrb[0].mxu0
        %v1402 = vpop.f32.mrb[0].mxu0
        %v1403 = vadd.f32 0.0, %v1402
        %v1404 = vpop.f32.mrb[0].mxu0
        %1405 = vmatprep.mubr.bf16.mxu0 0
        %1406 = vmatmul.mubr.bf16.gmra.mrb[0].mxu0 %v1093
        %v1407 = vpop.f32.mrb[0].mxu0
        %v1408 = vadd.f32 0.0, %v1407
        %v1409 = vpop.f32.mrb[0].mxu0
        %v1410 = vpop.f32.mrb[0].mxu0
        %v1411 = vadd.f32 0.0, %v1410
        %v1412 = vpop.f32.mrb[0].mxu0
        %1413 = vmatprep.mubr.bf16.mxu0 0
        %1414 = vmatmul.mubr.bf16.gmra.mrb[0].mxu0 %v1096
        %v1415 = vpop.f32.mrb[0].mxu0
        %v1416 = vadd.f32 0.0, %v1415
        %v1417 = vpop.f32.mrb[0].mxu0
        %v1418 = vpop.f32.mrb[0].mxu0
        %v1419 = vadd.f32 0.0, %v1418
        %v1420 = vpop.f32.mrb[0].mxu0
        %1421 = vmatprep.mubr.bf16.mxu0 0
        %1422 = vmatmul.mubr.bf16.gmra.mrb[0].mxu0 %v1099
        %v1423 = vpop.f32.mrb[0].mxu0
        %v1424 = vadd.f32 0.0, %v1423
        %v1425 = vpop.f32.mrb[0].mxu0
        %v1426 = vpop.f32.mrb[0].mxu0
        %v1427 = vadd.f32 0.0, %v1426
        %v1428 = vpop.f32.mrb[0].mxu0
        %1429 = vmatprep.mubr.bf16.mxu0 0
        %1430 = vmatmul.mubr.bf16.gmra.mrb[0].mxu0 %v1102
        %v1431 = vpop.f32.mrb[0].mxu0
        %v1432 = vadd.f32 0.0, %v1431
        %v1433 = vpop.f32.mrb[0].mxu0
        %v1434 = vpop.f32.mrb[0].mxu0
        %v1435 = vadd.f32 0.0, %v1434
        %v1436 = vpop.f32.mrb[0].mxu0
        %1437 = vmatprep.mubr.bf16.mxu0 0
        %1438 = vmatmul.mubr.bf16.gmra.mrb[0].mxu0 %v1105
        %v1439 = vpop.f32.mrb[0].mxu0
        %v1440 = vadd.f32 0.0, %v1439
        %v1441 = vpop.f32.mrb[0].mxu0
        %v1442 = vpop.f32.mrb[0].mxu0
        %v1443 = vadd.f32 0.0, %v1442
        %v1444 = vpop.f32.mrb[0].mxu0
        %1445 = vmatprep.mubr.bf16.mxu0 0
        %1446 = vmatmul.mubr.bf16.gmra.mrb[0].mxu0 %v1352
        %v1447 = vpop.f32.mrb[0].mxu0
        %v1448 = vadd.f32 0.0, %v1447
        %v1449 = vpop.f32.mrb[0].mxu0
        %v1450 = vpop.f32.mrb[0].mxu0
        %v1451 = vadd.f32 0.0, %v1450
        %v1452 = vpop.f32.mrb[0].mxu0
        %1453 = vdwg.mxu0
        %v1454 = vadd.f32 %v1333, %v1392
        %v1455 = vadd.f32 %v1334, %v1395
        %v1456 = vadd.f32 %v1335, %v1400
        %v1457 = vadd.f32 %v1336, %v1403
        %v1458 = vadd.f32 %v1337, %v1408
        %v1459 = vadd.f32 %v1338, %v1411
        %v1460 = vadd.f32 %v1339, %v1416
        %v1461 = vadd.f32 %v1340, %v1419
        %v1462 = vadd.f32 %v1341, %v1424
        %v1463 = vadd.f32 %v1342, %v1427
        %v1464 = vadd.f32 %v1343, %v1432
        %v1465 = vadd.f32 %v1344, %v1435
        %v1466 = vadd.f32 %v1345, %v1440
        %v1467 = vadd.f32 %v1346, %v1443
        %v1468 = vadd.f32 %v1347, %v1448
        %v1469 = vadd.f32 %v1348, %v1451
        %s1470 = scalar_lea.vmem %s5, 8
        %v1471 = vld [vmem:[%s1470] sm:$0x3]
        %v1472 = vsel %vm696, %v825, 0
        %v1475 = vsel %vm982, %v1471, 0
        %1477 = vmatprep.subr.bf16.mxu0 0
        %1478 = vmatpush1.bf16.msra.mxu0 %v1475
        %1479 = vmatprep.subr.bf16.mxu0 0
        %1480 = vmatpush1.bf16.msra.mxu0 0
        %1481 = vmatprep.subr.bf16.mxu0 0
        %1482 = vmatpush1.bf16.msra.mxu0 0
        %1483 = vmatprep.subr.bf16.mxu0 0
        %1484 = vmatpush1.bf16.msra.mxu0 0
        %1485 = vmatprep.subr.bf16.mxu0 0
        %1486 = vmatpush1.bf16.msra.mxu0 0
        %1487 = vmatprep.subr.bf16.mxu0 0
        %1488 = vmatpush1.bf16.msra.mxu0 0
        %1489 = vmatprep.subr.bf16.mxu0 0
        %1490 = vmatpush1.bf16.msra.mxu0 0
        %1491 = vmatprep.subr.bf16.mxu0 0
        %1492 = vmatpush1.bf16.msra.mxu0 0
        %1493 = vmatprep.subr.bf16.mxu0 0
        %1494 = vmatpush1.bf16.msra.mxu0 0
        %1495 = vmatprep.subr.bf16.mxu0 0
        %1496 = vmatpush1.bf16.msra.mxu0 0
        %1497 = vmatprep.subr.bf16.mxu0 0
        %1498 = vmatpush1.bf16.msra.mxu0 0
        %1499 = vmatprep.subr.bf16.mxu0 0
        %1500 = vmatpush1.bf16.msra.mxu0 0
        %1501 = vmatprep.subr.bf16.mxu0 0
        %1502 = vmatpush1.bf16.msra.mxu0 0
        %1503 = vmatprep.subr.bf16.mxu0 0
        %1504 = vmatpush1.bf16.msra.mxu0 0
        %1505 = vmatprep.subr.bf16.mxu0 0
        %1506 = vmatpush1.bf16.msra.mxu0 0
        %1507 = vmatprep.subr.bf16.mxu0 0
        %1508 = vmatpush1.bf16.msra.mxu0 0
        %1509 = vmatprep.mubr.bf16.mxu0 0
        %1510 = vmatmul.mubr.bf16.gmra.mrb[0].mxu0 %v968
        %v1511 = vpop.f32.mrb[0].mxu0
        %v1512 = vadd.f32 0.0, %v1511
        %v1513 = vpop.f32.mrb[0].mxu0
        %v1514 = vpop.f32.mrb[0].mxu0
        %v1515 = vadd.f32 0.0, %v1514
        %v1516 = vpop.f32.mrb[0].mxu0
        %1517 = vmatprep.mubr.bf16.mxu0 0
        %1518 = vmatmul.mubr.bf16.gmra.mrb[0].mxu0 %v970
        %v1519 = vpop.f32.mrb[0].mxu0
        %v1520 = vadd.f32 0.0, %v1519
        %v1521 = vpop.f32.mrb[0].mxu0
        %v1522 = vpop.f32.mrb[0].mxu0
        %v1523 = vadd.f32 0.0, %v1522
        %v1524 = vpop.f32.mrb[0].mxu0
        %1525 = vmatprep.mubr.bf16.mxu0 0
        %1526 = vmatmul.mubr.bf16.gmra.mrb[0].mxu0 %v972
        %v1527 = vpop.f32.mrb[0].mxu0
        %v1528 = vadd.f32 0.0, %v1527
        %v1529 = vpop.f32.mrb[0].mxu0
        %v1530 = vpop.f32.mrb[0].mxu0
        %v1531 = vadd.f32 0.0, %v1530
        %v1532 = vpop.f32.mrb[0].mxu0
        %1533 = vmatprep.mubr.bf16.mxu0 0
        %1534 = vmatmul.mubr.bf16.gmra.mrb[0].mxu0 %v974
        %v1535 = vpop.f32.mrb[0].mxu0
        %v1536 = vadd.f32 0.0, %v1535
        %v1537 = vpop.f32.mrb[0].mxu0
        %v1538 = vpop.f32.mrb[0].mxu0
        %v1539 = vadd.f32 0.0, %v1538
        %v1540 = vpop.f32.mrb[0].mxu0
        %1541 = vmatprep.mubr.bf16.mxu0 0
        %1542 = vmatmul.mubr.bf16.gmra.mrb[0].mxu0 %v976
        %v1543 = vpop.f32.mrb[0].mxu0
        %v1544 = vadd.f32 0.0, %v1543
        %v1545 = vpop.f32.mrb[0].mxu0
        %v1546 = vpop.f32.mrb[0].mxu0
        %v1547 = vadd.f32 0.0, %v1546
        %v1548 = vpop.f32.mrb[0].mxu0
        %1549 = vmatprep.mubr.bf16.mxu0 0
        %1550 = vmatmul.mubr.bf16.gmra.mrb[0].mxu0 %v978
        %v1551 = vpop.f32.mrb[0].mxu0
        %v1552 = vadd.f32 0.0, %v1551
        %v1553 = vpop.f32.mrb[0].mxu0
        %v1554 = vpop.f32.mrb[0].mxu0
        %v1555 = vadd.f32 0.0, %v1554
        %v1556 = vpop.f32.mrb[0].mxu0
        %1557 = vmatprep.mubr.bf16.mxu0 0
        %1558 = vmatmul.mubr.bf16.gmra.mrb[0].mxu0 %v980
        %v1559 = vpop.f32.mrb[0].mxu0
        %v1560 = vadd.f32 0.0, %v1559
        %v1561 = vpop.f32.mrb[0].mxu0
        %v1562 = vpop.f32.mrb[0].mxu0
        %v1563 = vadd.f32 0.0, %v1562
        %v1564 = vpop.f32.mrb[0].mxu0
        %1565 = vmatprep.mubr.bf16.mxu0 0
        %1566 = vmatmul.mubr.bf16.gmra.mrb[0].mxu0 %v1472
        %v1567 = vpop.f32.mrb[0].mxu0
        %v1568 = vadd.f32 0.0, %v1567
        %v1569 = vpop.f32.mrb[0].mxu0
        %v1570 = vpop.f32.mrb[0].mxu0
        %v1571 = vadd.f32 0.0, %v1570
        %v1572 = vpop.f32.mrb[0].mxu0
        %1573 = vdwg.mxu0
        %v1574 = vadd.f32 %v1454, %v1512
        %v1575 = vadd.f32 %v1455, %v1515
        %v1576 = vadd.f32 %v1456, %v1520
        %v1577 = vadd.f32 %v1457, %v1523
        %v1578 = vadd.f32 %v1458, %v1528
        %v1579 = vadd.f32 %v1459, %v1531
        %v1580 = vadd.f32 %v1460, %v1536
        %v1581 = vadd.f32 %v1461, %v1539
        %v1582 = vadd.f32 %v1462, %v1544
        %v1583 = vadd.f32 %v1463, %v1547
        %v1584 = vadd.f32 %v1464, %v1552
        %v1585 = vadd.f32 %v1465, %v1555
        %v1586 = vadd.f32 %v1466, %v1560
        %v1587 = vadd.f32 %v1467, %v1563
        %v1588 = vadd.f32 %v1468, %v1568
        %v1589 = vadd.f32 %v1469, %v1571
        %s1590 = scalar_lea.vmem %s5, 10
        %v1591 = vld [vmem:[%s1590] sm:$0x3]
        %v1593 = vsel %vm696, %v961, 0
        %v1596 = vsel %vm982, %v1591, 0
        %1598 = vmatprep.subr.bf16.mxu0 0
        %1599 = vmatpush1.bf16.msra.mxu0 %v1596
        %1600 = vmatprep.subr.bf16.mxu0 0
        %1601 = vmatpush1.bf16.msra.mxu0 0
        %1602 = vmatprep.subr.bf16.mxu0 0
        %1603 = vmatpush1.bf16.msra.mxu0 0
        %1604 = vmatprep.subr.bf16.mxu0 0
        %1605 = vmatpush1.bf16.msra.mxu0 0
        %1606 = vmatprep.subr.bf16.mxu0 0
        %1607 = vmatpush1.bf16.msra.mxu0 0
        %1608 = vmatprep.subr.bf16.mxu0 0
        %1609 = vmatpush1.bf16.msra.mxu0 0
        %1610 = vmatprep.subr.bf16.mxu0 0
        %1611 = vmatpush1.bf16.msra.mxu0 0
        %1612 = vmatprep.subr.bf16.mxu0 0
        %1613 = vmatpush1.bf16.msra.mxu0 0
        %1614 = vmatprep.subr.bf16.mxu0 0
        %1615 = vmatpush1.bf16.msra.mxu0 0
        %1616 = vmatprep.subr.bf16.mxu0 0
        %1617 = vmatpush1.bf16.msra.mxu0 0
        %1618 = vmatprep.subr.bf16.mxu0 0
        %1619 = vmatpush1.bf16.msra.mxu0 0
        %1620 = vmatprep.subr.bf16.mxu0 0
        %1621 = vmatpush1.bf16.msra.mxu0 0
        %1622 = vmatprep.subr.bf16.mxu0 0
        %1623 = vmatpush1.bf16.msra.mxu0 0
        %1624 = vmatprep.subr.bf16.mxu0 0
        %1625 = vmatpush1.bf16.msra.mxu0 0
        %1626 = vmatprep.subr.bf16.mxu0 0
        %1627 = vmatpush1.bf16.msra.mxu0 0
        %1628 = vmatprep.subr.bf16.mxu0 0
        %1629 = vmatpush1.bf16.msra.mxu0 0
        %1630 = vmatprep.mubr.bf16.mxu0 0
        %1631 = vmatmul.mubr.bf16.gmra.mrb[0].mxu0 %v1213
        %v1632 = vpop.f32.mrb[0].mxu0
        %v1633 = vadd.f32 0.0, %v1632
        %v1634 = vpop.f32.mrb[0].mxu0
        %v1635 = vpop.f32.mrb[0].mxu0
        %v1636 = vadd.f32 0.0, %v1635
        %v1637 = vpop.f32.mrb[0].mxu0
        %1638 = vmatprep.mubr.bf16.mxu0 0
        %1639 = vmatmul.mubr.bf16.gmra.mrb[0].mxu0 %v1216
        %v1640 = vpop.f32.mrb[0].mxu0
        %v1641 = vadd.f32 0.0, %v1640
        %v1642 = vpop.f32.mrb[0].mxu0
        %v1643 = vpop.f32.mrb[0].mxu0
        %v1644 = vadd.f32 0.0, %v1643
        %v1645 = vpop.f32.mrb[0].mxu0
        %1646 = vmatprep.mubr.bf16.mxu0 0
        %1647 = vmatmul.mubr.bf16.gmra.mrb[0].mxu0 %v1219
        %v1648 = vpop.f32.mrb[0].mxu0
        %v1649 = vadd.f32 0.0, %v1648
        %v1650 = vpop.f32.mrb[0].mxu0
        %v1651 = vpop.f32.mrb[0].mxu0
        %v1652 = vadd.f32 0.0, %v1651
        %v1653 = vpop.f32.mrb[0].mxu0
        %1654 = vmatprep.mubr.bf16.mxu0 0
        %1655 = vmatmul.mubr.bf16.gmra.mrb[0].mxu0 %v1222
        %v1656 = vpop.f32.mrb[0].mxu0
        %v1657 = vadd.f32 0.0, %v1656
        %v1658 = vpop.f32.mrb[0].mxu0
        %v1659 = vpop.f32.mrb[0].mxu0
        %v1660 = vadd.f32 0.0, %v1659
        %v1661 = vpop.f32.mrb[0].mxu0
        %1662 = vmatprep.mubr.bf16.mxu0 0
        %1663 = vmatmul.mubr.bf16.gmra.mrb[0].mxu0 %v1225
        %v1664 = vpop.f32.mrb[0].mxu0
        %v1665 = vadd.f32 0.0, %v1664
        %v1666 = vpop.f32.mrb[0].mxu0
        %v1667 = vpop.f32.mrb[0].mxu0
        %v1668 = vadd.f32 0.0, %v1667
        %v1669 = vpop.f32.mrb[0].mxu0
        %1670 = vmatprep.mubr.bf16.mxu0 0
        %1671 = vmatmul.mubr.bf16.gmra.mrb[0].mxu0 %v1228
        %v1672 = vpop.f32.mrb[0].mxu0
        %v1673 = vadd.f32 0.0, %v1672
        %v1674 = vpop.f32.mrb[0].mxu0
        %v1675 = vpop.f32.mrb[0].mxu0
        %v1676 = vadd.f32 0.0, %v1675
        %v1677 = vpop.f32.mrb[0].mxu0
        %1678 = vmatprep.mubr.bf16.mxu0 0
        %1679 = vmatmul.mubr.bf16.gmra.mrb[0].mxu0 %v1231
        %v1680 = vpop.f32.mrb[0].mxu0
        %v1681 = vadd.f32 0.0, %v1680
        %v1682 = vpop.f32.mrb[0].mxu0
        %v1683 = vpop.f32.mrb[0].mxu0
        %v1684 = vadd.f32 0.0, %v1683
        %v1685 = vpop.f32.mrb[0].mxu0
        %1686 = vmatprep.mubr.bf16.mxu0 0
        %1687 = vmatmul.mubr.bf16.gmra.mrb[0].mxu0 %v1593
        %v1688 = vpop.f32.mrb[0].mxu0
        %v1689 = vadd.f32 0.0, %v1688
        %v1690 = vpop.f32.mrb[0].mxu0
        %v1691 = vpop.f32.mrb[0].mxu0
        %v1692 = vadd.f32 0.0, %v1691
        %v1693 = vpop.f32.mrb[0].mxu0
        %1694 = vdwg.mxu0
        %v1695 = vadd.f32 %v1574, %v1633
        %v1696 = vadd.f32 %v1575, %v1636
        %v1697 = vadd.f32 %v1576, %v1641
        %v1698 = vadd.f32 %v1577, %v1644
        %v1699 = vadd.f32 %v1578, %v1649
        %v1700 = vadd.f32 %v1579, %v1652
        %v1701 = vadd.f32 %v1580, %v1657
        %v1702 = vadd.f32 %v1581, %v1660
        %v1703 = vadd.f32 %v1582, %v1665
        %v1704 = vadd.f32 %v1583, %v1668
        %v1705 = vadd.f32 %v1584, %v1673
        %v1706 = vadd.f32 %v1585, %v1676
        %v1707 = vadd.f32 %v1586, %v1681
        %v1708 = vadd.f32 %v1587, %v1684
        %v1709 = vadd.f32 %v1588, %v1689
        %v1710 = vadd.f32 %v1589, %v1692
        %s1711 = scalar_lea.vmem %s5, 12
        %v1712 = vld [vmem:[%s1711] sm:$0x3]
        %v1714 = vsel %vm696, %v919, 0
        %v1717 = vsel %vm982, %v1712, 0
        %1719 = vmatprep.subr.bf16.mxu0 0
        %1720 = vmatpush1.bf16.msra.mxu0 %v1717
        %1721 = vmatprep.subr.bf16.mxu0 0
        %1722 = vmatpush1.bf16.msra.mxu0 0
        %1723 = vmatprep.subr.bf16.mxu0 0
        %1724 = vmatpush1.bf16.msra.mxu0 0
        %1725 = vmatprep.subr.bf16.mxu0 0
        %1726 = vmatpush1.bf16.msra.mxu0 0
        %1727 = vmatprep.subr.bf16.mxu0 0
        %1728 = vmatpush1.bf16.msra.mxu0 0
        %1729 = vmatprep.subr.bf16.mxu0 0
        %1730 = vmatpush1.bf16.msra.mxu0 0
        %1731 = vmatprep.subr.bf16.mxu0 0
        %1732 = vmatpush1.bf16.msra.mxu0 0
        %1733 = vmatprep.subr.bf16.mxu0 0
        %1734 = vmatpush1.bf16.msra.mxu0 0
        %1735 = vmatprep.subr.bf16.mxu0 0
        %1736 = vmatpush1.bf16.msra.mxu0 0
        %1737 = vmatprep.subr.bf16.mxu0 0
        %1738 = vmatpush1.bf16.msra.mxu0 0
        %1739 = vmatprep.subr.bf16.mxu0 0
        %1740 = vmatpush1.bf16.msra.mxu0 0
        %1741 = vmatprep.subr.bf16.mxu0 0
        %1742 = vmatpush1.bf16.msra.mxu0 0
        %1743 = vmatprep.subr.bf16.mxu0 0
        %1744 = vmatpush1.bf16.msra.mxu0 0
        %1745 = vmatprep.subr.bf16.mxu0 0
        %1746 = vmatpush1.bf16.msra.mxu0 0
        %1747 = vmatprep.subr.bf16.mxu0 0
        %1748 = vmatpush1.bf16.msra.mxu0 0
        %1749 = vmatprep.subr.bf16.mxu0 0
        %1750 = vmatpush1.bf16.msra.mxu0 0
        %1751 = vmatprep.mubr.bf16.mxu0 0
        %1752 = vmatmul.mubr.bf16.gmra.mrb[0].mxu0 %v1090
        %v1753 = vpop.f32.mrb[0].mxu0
        %v1754 = vadd.f32 0.0, %v1753
        %v1755 = vpop.f32.mrb[0].mxu0
        %v1756 = vpop.f32.mrb[0].mxu0
        %v1757 = vadd.f32 0.0, %v1756
        %v1758 = vpop.f32.mrb[0].mxu0
        %1759 = vmatprep.mubr.bf16.mxu0 0
        %1760 = vmatmul.mubr.bf16.gmra.mrb[0].mxu0 %v1093
        %v1761 = vpop.f32.mrb[0].mxu0
        %v1762 = vadd.f32 0.0, %v1761
        %v1763 = vpop.f32.mrb[0].mxu0
        %v1764 = vpop.f32.mrb[0].mxu0
        %v1765 = vadd.f32 0.0, %v1764
        %v1766 = vpop.f32.mrb[0].mxu0
        %1767 = vmatprep.mubr.bf16.mxu0 0
        %1768 = vmatmul.mubr.bf16.gmra.mrb[0].mxu0 %v1096
        %v1769 = vpop.f32.mrb[0].mxu0
        %v1770 = vadd.f32 0.0, %v1769
        %v1771 = vpop.f32.mrb[0].mxu0
        %v1772 = vpop.f32.mrb[0].mxu0
        %v1773 = vadd.f32 0.0, %v1772
        %v1774 = vpop.f32.mrb[0].mxu0
        %1775 = vmatprep.mubr.bf16.mxu0 0
        %1776 = vmatmul.mubr.bf16.gmra.mrb[0].mxu0 %v1099
        %v1777 = vpop.f32.mrb[0].mxu0
        %v1778 = vadd.f32 0.0, %v1777
        %v1779 = vpop.f32.mrb[0].mxu0
        %v1780 = vpop.f32.mrb[0].mxu0
        %v1781 = vadd.f32 0.0, %v1780
        %v1782 = vpop.f32.mrb[0].mxu0
        %1783 = vmatprep.mubr.bf16.mxu0 0
        %1784 = vmatmul.mubr.bf16.gmra.mrb[0].mxu0 %v1102
        %v1785 = vpop.f32.mrb[0].mxu0
        %v1786 = vadd.f32 0.0, %v1785
        %v1787 = vpop.f32.mrb[0].mxu0
        %v1788 = vpop.f32.mrb[0].mxu0
        %v1789 = vadd.f32 0.0, %v1788
        %v1790 = vpop.f32.mrb[0].mxu0
        %1791 = vmatprep.mubr.bf16.mxu0 0
        %1792 = vmatmul.mubr.bf16.gmra.mrb[0].mxu0 %v1105
        %v1793 = vpop.f32.mrb[0].mxu0
        %v1794 = vadd.f32 0.0, %v1793
        %v1795 = vpop.f32.mrb[0].mxu0
        %v1796 = vpop.f32.mrb[0].mxu0
        %v1797 = vadd.f32 0.0, %v1796
        %v1798 = vpop.f32.mrb[0].mxu0
        %1799 = vmatprep.mubr.bf16.mxu0 0
        %1800 = vmatmul.mubr.bf16.gmra.mrb[0].mxu0 %v1352
        %v1801 = vpop.f32.mrb[0].mxu0
        %v1802 = vadd.f32 0.0, %v1801
        %v1803 = vpop.f32.mrb[0].mxu0
        %v1804 = vpop.f32.mrb[0].mxu0
        %v1805 = vadd.f32 0.0, %v1804
        %v1806 = vpop.f32.mrb[0].mxu0
        %1807 = vmatprep.mubr.bf16.mxu0 0
        %1808 = vmatmul.mubr.bf16.gmra.mrb[0].mxu0 %v1714
        %v1809 = vpop.f32.mrb[0].mxu0
        %v1810 = vadd.f32 0.0, %v1809
        %v1811 = vpop.f32.mrb[0].mxu0
        %v1812 = vpop.f32.mrb[0].mxu0
        %v1813 = vadd.f32 0.0, %v1812
        %v1814 = vpop.f32.mrb[0].mxu0
        %1815 = vdwg.mxu0
        %v1816 = vadd.f32 %v1695, %v1754
        %v1817 = vadd.f32 %v1696, %v1757
        %v1818 = vadd.f32 %v1697, %v1762
        %v1819 = vadd.f32 %v1698, %v1765
        %v1820 = vadd.f32 %v1699, %v1770
        %v1821 = vadd.f32 %v1700, %v1773
        %v1822 = vadd.f32 %v1701, %v1778
        %v1823 = vadd.f32 %v1702, %v1781
        %v1824 = vadd.f32 %v1703, %v1786
        %v1825 = vadd.f32 %v1704, %v1789
        %v1826 = vadd.f32 %v1705, %v1794
        %v1827 = vadd.f32 %v1706, %v1797
        %v1828 = vadd.f32 %v1707, %v1802
        %v1829 = vadd.f32 %v1708, %v1805
        %v1830 = vadd.f32 %v1709, %v1810
        %v1831 = vadd.f32 %v1710, %v1813
        %s1832 = scalar_lea.vmem %s5, 14
        %v1833 = vld [vmem:[%s1832] sm:$0x3]
        %v1834 = vsel %vm696, %v826, 0
        %v1837 = vsel %vm982, %v1833, 0
        %1839 = vmatprep.subr.bf16.mxu0 0
        %1840 = vmatpush1.bf16.msra.mxu0 %v1837
        %1841 = vmatprep.subr.bf16.mxu0 0
        %1842 = vmatpush1.bf16.msra.mxu0 0
        %1843 = vmatprep.subr.bf16.mxu0 0
        %1844 = vmatpush1.bf16.msra.mxu0 0
        %1845 = vmatprep.subr.bf16.mxu0 0
        %1846 = vmatpush1.bf16.msra.mxu0 0
        %1847 = vmatprep.subr.bf16.mxu0 0
        %1848 = vmatpush1.bf16.msra.mxu0 0
        %1849 = vmatprep.subr.bf16.mxu0 0
        %1850 = vmatpush1.bf16.msra.mxu0 0
        %1851 = vmatprep.subr.bf16.mxu0 0
        %1852 = vmatpush1.bf16.msra.mxu0 0
        %1853 = vmatprep.subr.bf16.mxu0 0
        %1854 = vmatpush1.bf16.msra.mxu0 0
        %1855 = vmatprep.subr.bf16.mxu0 0
        %1856 = vmatpush1.bf16.msra.mxu0 0
        %1857 = vmatprep.subr.bf16.mxu0 0
        %1858 = vmatpush1.bf16.msra.mxu0 0
        %1859 = vmatprep.subr.bf16.mxu0 0
        %1860 = vmatpush1.bf16.msra.mxu0 0
        %1861 = vmatprep.subr.bf16.mxu0 0
        %1862 = vmatpush1.bf16.msra.mxu0 0
        %1863 = vmatprep.subr.bf16.mxu0 0
        %1864 = vmatpush1.bf16.msra.mxu0 0
        %1865 = vmatprep.subr.bf16.mxu0 0
        %1866 = vmatpush1.bf16.msra.mxu0 0
        %1867 = vmatprep.subr.bf16.mxu0 0
        %1868 = vmatpush1.bf16.msra.mxu0 0
        %1869 = vmatprep.subr.bf16.mxu0 0
        %1870 = vmatpush1.bf16.msra.mxu0 0
        %1871 = vmatprep.mubr.bf16.mxu0 0
        %1872 = vmatmul.mubr.bf16.gmra.mrb[0].mxu0 %v970
        %v1873 = vpop.f32.mrb[0].mxu0
        %v1874 = vadd.f32 0.0, %v1873
        %v1875 = vpop.f32.mrb[0].mxu0
        %v1876 = vpop.f32.mrb[0].mxu0
        %v1877 = vadd.f32 0.0, %v1876
        %v1878 = vpop.f32.mrb[0].mxu0
        %1879 = vmatprep.mubr.bf16.mxu0 0
        %1880 = vmatmul.mubr.bf16.gmra.mrb[0].mxu0 %v972
        %v1881 = vpop.f32.mrb[0].mxu0
        %v1882 = vadd.f32 0.0, %v1881
        %v1883 = vpop.f32.mrb[0].mxu0
        %v1884 = vpop.f32.mrb[0].mxu0
        %v1885 = vadd.f32 0.0, %v1884
        %v1886 = vpop.f32.mrb[0].mxu0
        %1887 = vmatprep.mubr.bf16.mxu0 0
        %1888 = vmatmul.mubr.bf16.gmra.mrb[0].mxu0 %v974
        %v1889 = vpop.f32.mrb[0].mxu0
        %v1890 = vadd.f32 0.0, %v1889
        %v1891 = vpop.f32.mrb[0].mxu0
        %v1892 = vpop.f32.mrb[0].mxu0
        %v1893 = vadd.f32 0.0, %v1892
        %v1894 = vpop.f32.mrb[0].mxu0
        %1895 = vmatprep.mubr.bf16.mxu0 0
        %1896 = vmatmul.mubr.bf16.gmra.mrb[0].mxu0 %v976
        %v1897 = vpop.f32.mrb[0].mxu0
        %v1898 = vadd.f32 0.0, %v1897
        %v1899 = vpop.f32.mrb[0].mxu0
        %v1900 = vpop.f32.mrb[0].mxu0
        %v1901 = vadd.f32 0.0, %v1900
        %v1902 = vpop.f32.mrb[0].mxu0
        %1903 = vmatprep.mubr.bf16.mxu0 0
        %1904 = vmatmul.mubr.bf16.gmra.mrb[0].mxu0 %v978
        %v1905 = vpop.f32.mrb[0].mxu0
        %v1906 = vadd.f32 0.0, %v1905
        %v1907 = vpop.f32.mrb[0].mxu0
        %v1908 = vpop.f32.mrb[0].mxu0
        %v1909 = vadd.f32 0.0, %v1908
        %v1910 = vpop.f32.mrb[0].mxu0
        %1911 = vmatprep.mubr.bf16.mxu0 0
        %1912 = vmatmul.mubr.bf16.gmra.mrb[0].mxu0 %v980
        %v1913 = vpop.f32.mrb[0].mxu0
        %v1914 = vadd.f32 0.0, %v1913
        %v1915 = vpop.f32.mrb[0].mxu0
        %v1916 = vpop.f32.mrb[0].mxu0
        %v1917 = vadd.f32 0.0, %v1916
        %v1918 = vpop.f32.mrb[0].mxu0
        %1919 = vmatprep.mubr.bf16.mxu0 0
        %1920 = vmatmul.mubr.bf16.gmra.mrb[0].mxu0 %v1472
        %v1921 = vpop.f32.mrb[0].mxu0
        %v1922 = vadd.f32 0.0, %v1921
        %v1923 = vpop.f32.mrb[0].mxu0
        %v1924 = vpop.f32.mrb[0].mxu0
        %v1925 = vadd.f32 0.0, %v1924
        %v1926 = vpop.f32.mrb[0].mxu0
        %1927 = vmatprep.mubr.bf16.mxu0 0
        %1928 = vmatmul.mubr.bf16.gmra.mrb[0].mxu0 %v1834
        %v1929 = vpop.f32.mrb[0].mxu0
        %v1930 = vadd.f32 0.0, %v1929
        %v1931 = vpop.f32.mrb[0].mxu0
        %v1932 = vpop.f32.mrb[0].mxu0
        %v1933 = vadd.f32 0.0, %v1932
        %v1934 = vpop.f32.mrb[0].mxu0
        %1935 = vdwg.mxu0
        %v1936 = vadd.f32 %v1816, %v1874
        %v1937 = vadd.f32 %v1817, %v1877
        %v1938 = vadd.f32 %v1818, %v1882
        %v1939 = vadd.f32 %v1819, %v1885
        %v1940 = vadd.f32 %v1820, %v1890
        %v1941 = vadd.f32 %v1821, %v1893
        %v1942 = vadd.f32 %v1822, %v1898
        %v1943 = vadd.f32 %v1823, %v1901
        %v1944 = vadd.f32 %v1824, %v1906
        %v1945 = vadd.f32 %v1825, %v1909
        %v1946 = vadd.f32 %v1826, %v1914
        %v1947 = vadd.f32 %v1827, %v1917
        %v1948 = vadd.f32 %v1828, %v1922
        %v1949 = vadd.f32 %v1829, %v1925
        %v1950 = vadd.f32 %v1830, %v1930
        %v1951 = vadd.f32 %v1831, %v1933
        %s1952 = scalar_lea.vmem %s5, 16
        %v1953 = vld [vmem:[%s1952] sm:$0x3]
        %v1955 = vsel %vm696, %v962, 0
        %v1958 = vsel %vm982, %v1953, 0
        %1960 = vmatprep.subr.bf16.mxu0 0
        %1961 = vmatpush1.bf16.msra.mxu0 %v1958
        %1962 = vmatprep.subr.bf16.mxu0 0
        %1963 = vmatpush1.bf16.msra.mxu0 0
        %1964 = vmatprep.subr.bf16.mxu0 0
        %1965 = vmatpush1.bf16.msra.mxu0 0
        %1966 = vmatprep.subr.bf16.mxu0 0
        %1967 = vmatpush1.bf16.msra.mxu0 0
        %1968 = vmatprep.subr.bf16.mxu0 0
        %1969 = vmatpush1.bf16.msra.mxu0 0
        %1970 = vmatprep.subr.bf16.mxu0 0
        %1971 = vmatpush1.bf16.msra.mxu0 0
        %1972 = vmatprep.subr.bf16.mxu0 0
        %1973 = vmatpush1.bf16.msra.mxu0 0
        %1974 = vmatprep.subr.bf16.mxu0 0
        %1975 = vmatpush1.bf16.msra.mxu0 0
        %1976 = vmatprep.subr.bf16.mxu0 0
        %1977 = vmatpush1.bf16.msra.mxu0 0
        %1978 = vmatprep.subr.bf16.mxu0 0
        %1979 = vmatpush1.bf16.msra.mxu0 0
        %1980 = vmatprep.subr.bf16.mxu0 0
        %1981 = vmatpush1.bf16.msra.mxu0 0
        %1982 = vmatprep.subr.bf16.mxu0 0
        %1983 = vmatpush1.bf16.msra.mxu0 0
        %1984 = vmatprep.subr.bf16.mxu0 0
        %1985 = vmatpush1.bf16.msra.mxu0 0
        %1986 = vmatprep.subr.bf16.mxu0 0
        %1987 = vmatpush1.bf16.msra.mxu0 0
        %1988 = vmatprep.subr.bf16.mxu0 0
        %1989 = vmatpush1.bf16.msra.mxu0 0
        %1990 = vmatprep.subr.bf16.mxu0 0
        %1991 = vmatpush1.bf16.msra.mxu0 0
        %1992 = vmatprep.mubr.bf16.mxu0 0
        %1993 = vmatmul.mubr.bf16.gmra.mrb[0].mxu0 %v1216
        %v1994 = vpop.f32.mrb[0].mxu0
        %v1995 = vadd.f32 0.0, %v1994
        %v1996 = vpop.f32.mrb[0].mxu0
        %v1997 = vpop.f32.mrb[0].mxu0
        %v1998 = vadd.f32 0.0, %v1997
        %v1999 = vpop.f32.mrb[0].mxu0
        %2000 = vmatprep.mubr.bf16.mxu0 0
        %2001 = vmatmul.mubr.bf16.gmra.mrb[0].mxu0 %v1219
        %v2002 = vpop.f32.mrb[0].mxu0
        %v2003 = vadd.f32 0.0, %v2002
        %v2004 = vpop.f32.mrb[0].mxu0
        %v2005 = vpop.f32.mrb[0].mxu0
        %v2006 = vadd.f32 0.0, %v2005
        %v2007 = vpop.f32.mrb[0].mxu0
        %2008 = vmatprep.mubr.bf16.mxu0 0
        %2009 = vmatmul.mubr.bf16.gmra.mrb[0].mxu0 %v1222
        %v2010 = vpop.f32.mrb[0].mxu0
        %v2011 = vadd.f32 0.0, %v2010
        %v2012 = vpop.f32.mrb[0].mxu0
        %v2013 = vpop.f32.mrb[0].mxu0
        %v2014 = vadd.f32 0.0, %v2013
        %v2015 = vpop.f32.mrb[0].mxu0
        %2016 = vmatprep.mubr.bf16.mxu0 0
        %2017 = vmatmul.mubr.bf16.gmra.mrb[0].mxu0 %v1225
        %v2018 = vpop.f32.mrb[0].mxu0
        %v2019 = vadd.f32 0.0, %v2018
        %v2020 = vpop.f32.mrb[0].mxu0
        %v2021 = vpop.f32.mrb[0].mxu0
        %v2022 = vadd.f32 0.0, %v2021
        %v2023 = vpop.f32.mrb[0].mxu0
        %2024 = vmatprep.mubr.bf16.mxu0 0
        %2025 = vmatmul.mubr.bf16.gmra.mrb[0].mxu0 %v1228
        %v2026 = vpop.f32.mrb[0].mxu0
        %v2027 = vadd.f32 0.0, %v2026
        %v2028 = vpop.f32.mrb[0].mxu0
        %v2029 = vpop.f32.mrb[0].mxu0
        %v2030 = vadd.f32 0.0, %v2029
        %v2031 = vpop.f32.mrb[0].mxu0
        %2032 = vmatprep.mubr.bf16.mxu0 0
        %2033 = vmatmul.mubr.bf16.gmra.mrb[0].mxu0 %v1231
        %v2034 = vpop.f32.mrb[0].mxu0
        %v2035 = vadd.f32 0.0, %v2034
        %v2036 = vpop.f32.mrb[0].mxu0
        %v2037 = vpop.f32.mrb[0].mxu0
        %v2038 = vadd.f32 0.0, %v2037
        %v2039 = vpop.f32.mrb[0].mxu0
        %2040 = vmatprep.mubr.bf16.mxu0 0
        %2041 = vmatmul.mubr.bf16.gmra.mrb[0].mxu0 %v1593
        %v2042 = vpop.f32.mrb[0].mxu0
        %v2043 = vadd.f32 0.0, %v2042
        %v2044 = vpop.f32.mrb[0].mxu0
        %v2045 = vpop.f32.mrb[0].mxu0
        %v2046 = vadd.f32 0.0, %v2045
        %v2047 = vpop.f32.mrb[0].mxu0
        %2048 = vmatprep.mubr.bf16.mxu0 0
        %2049 = vmatmul.mubr.bf16.gmra.mrb[0].mxu0 %v1955
        %v2050 = vpop.f32.mrb[0].mxu0
        %v2051 = vadd.f32 0.0, %v2050
        %v2052 = vpop.f32.mrb[0].mxu0
        %v2053 = vpop.f32.mrb[0].mxu0
        %v2054 = vadd.f32 0.0, %v2053
        %v2055 = vpop.f32.mrb[0].mxu0
        %2056 = vdwg.mxu0
        %v2057 = vadd.f32 %v1936, %v1995
        %v2058 = vadd.f32 %v1937, %v1998
        %v2059 = vadd.f32 %v1938, %v2003
        %v2060 = vadd.f32 %v1939, %v2006
        %v2061 = vadd.f32 %v1940, %v2011
        %v2062 = vadd.f32 %v1941, %v2014
        %v2063 = vadd.f32 %v1942, %v2019
        %v2064 = vadd.f32 %v1943, %v2022
        %v2065 = vadd.f32 %v1944, %v2027
        %v2066 = vadd.f32 %v1945, %v2030
        %v2067 = vadd.f32 %v1946, %v2035
        %v2068 = vadd.f32 %v1947, %v2038
        %v2069 = vadd.f32 %v1948, %v2043
        %v2070 = vadd.f32 %v1949, %v2046
        %v2071 = vadd.f32 %v1950, %v2051
        %v2072 = vadd.f32 %v1951, %v2054
        %v2073 = vld [vmem:[%s6] sm:$0x1]
        %v2075 = vlaneseq
        %v2076 = vshrl.u32 %v2075, 7
        %v2077 = vsub.s32 0, %v2076
        %v2078 = vrot.slane %v2073, %v2077
        %v2080 = vmul.f32 %v2057, %v2078
        %v2081 = vmul.f32 %v2058, %v2078
        %v2082 = vmul.f32 %v2059, %v2078
        %v2083 = vmul.f32 %v2060, %v2078
        %v2084 = vmul.f32 %v2061, %v2078
        %v2085 = vmul.f32 %v2062, %v2078
        %v2086 = vmul.f32 %v2063, %v2078
        %v2087 = vmul.f32 %v2064, %v2078
        %v2088 = vmul.f32 %v2065, %v2078
        %v2089 = vmul.f32 %v2066, %v2078
        %v2090 = vmul.f32 %v2067, %v2078
        %v2091 = vmul.f32 %v2068, %v2078
        %v2092 = vmul.f32 %v2069, %v2078
        %v2093 = vmul.f32 %v2070, %v2078
        %v2094 = vmul.f32 %v2071, %v2078
        %v2095 = vmul.f32 %v2072, %v2078
        %v2096 = vld [vmem:[%s7] sm:$0x1]
        %v2098 = vlaneseq
        %v2099 = vshrl.u32 %v2098, 7
        %v2100 = vsub.s32 0, %v2099
        %v2101 = vrot.slane %v2096, %v2100
        %v2103 = vadd.f32 %v2080, %v2101
        %v2104 = vadd.f32 %v2081, %v2101
        %v2105 = vadd.f32 %v2082, %v2101
        %v2106 = vadd.f32 %v2083, %v2101
        %v2107 = vadd.f32 %v2084, %v2101
        %v2108 = vadd.f32 %v2085, %v2101
        %v2109 = vadd.f32 %v2086, %v2101
        %v2110 = vadd.f32 %v2087, %v2101
        %v2111 = vadd.f32 %v2088, %v2101
        %v2112 = vadd.f32 %v2089, %v2101
        %v2113 = vadd.f32 %v2090, %v2101
        %v2114 = vadd.f32 %v2091, %v2101
        %v2115 = vadd.f32 %v2092, %v2101
        %v2116 = vadd.f32 %v2093, %v2101
        %v2117 = vadd.f32 %v2094, %v2101
        %v2118 = vadd.f32 %v2095, %v2101
        %v2119 = vmax.f32 %v2103, 0.0
        %v2120 = vmax.f32 %v2104, 0.0
        %v2121 = vmax.f32 %v2105, 0.0
        %v2122 = vmax.f32 %v2106, 0.0
        %v2123 = vmax.f32 %v2107, 0.0
        %v2124 = vmax.f32 %v2108, 0.0
        %v2125 = vmax.f32 %v2109, 0.0
        %v2126 = vmax.f32 %v2110, 0.0
        %v2127 = vmax.f32 %v2111, 0.0
        %v2128 = vmax.f32 %v2112, 0.0
        %v2129 = vmax.f32 %v2113, 0.0
        %v2130 = vmax.f32 %v2114, 0.0
        %v2131 = vmax.f32 %v2115, 0.0
        %v2132 = vmax.f32 %v2116, 0.0
        %v2133 = vmax.f32 %v2117, 0.0
        %v2134 = vmax.f32 %v2118, 0.0
        %v2135 = vpack.c.bf16 %v2120, %v2119
        %v2136 = vpack.c.bf16 %v2122, %v2121
        %v2137 = vpack.c.bf16 %v2124, %v2123
        %v2138 = vpack.c.bf16 %v2126, %v2125
        %v2139 = vpack.c.bf16 %v2128, %v2127
        %v2140 = vpack.c.bf16 %v2130, %v2129
        %v2141 = vpack.c.bf16 %v2132, %v2131
        %v2142 = vpack.c.bf16 %v2134, %v2133
        %v2143 = vld [vmem:[%s8] sm:$0x3]
        %v2145 = vsel %vm696, %v2135, 0
        %v2148 = vsel %vm696, %v2136, 0
        %v2151 = vsel %vm696, %v2137, 0
        %v2154 = vsel %vm696, %v2138, 0
        %v2157 = vsel %vm696, %v2139, 0
        %v2160 = vsel %vm696, %v2140, 0
        %v2163 = vsel %vm696, %v2141, 0
        %v2166 = vsel %vm696, %v2142, 0
        %v2169 = vsel %vm982, %v2143, 0
        %2171 = vmatprep.subr.bf16.mxu0 0
        %2172 = vmatpush1.bf16.msra.mxu0 %v2169
        %2173 = vmatprep.subr.bf16.mxu0 0
        %2174 = vmatpush1.bf16.msra.mxu0 0
        %2175 = vmatprep.subr.bf16.mxu0 0
        %2176 = vmatpush1.bf16.msra.mxu0 0
        %2177 = vmatprep.subr.bf16.mxu0 0
        %2178 = vmatpush1.bf16.msra.mxu0 0
        %2179 = vmatprep.subr.bf16.mxu0 0
        %2180 = vmatpush1.bf16.msra.mxu0 0
        %2181 = vmatprep.subr.bf16.mxu0 0
        %2182 = vmatpush1.bf16.msra.mxu0 0
        %2183 = vmatprep.subr.bf16.mxu0 0
        %2184 = vmatpush1.bf16.msra.mxu0 0
        %2185 = vmatprep.subr.bf16.mxu0 0
        %2186 = vmatpush1.bf16.msra.mxu0 0
        %2187 = vmatprep.subr.bf16.mxu0 0
        %2188 = vmatpush1.bf16.msra.mxu0 0
        %2189 = vmatprep.subr.bf16.mxu0 0
        %2190 = vmatpush1.bf16.msra.mxu0 0
        %2191 = vmatprep.subr.bf16.mxu0 0
        %2192 = vmatpush1.bf16.msra.mxu0 0
        %2193 = vmatprep.subr.bf16.mxu0 0
        %2194 = vmatpush1.bf16.msra.mxu0 0
        %2195 = vmatprep.subr.bf16.mxu0 0
        %2196 = vmatpush1.bf16.msra.mxu0 0
        %2197 = vmatprep.subr.bf16.mxu0 0
        %2198 = vmatpush1.bf16.msra.mxu0 0
        %2199 = vmatprep.subr.bf16.mxu0 0
        %2200 = vmatpush1.bf16.msra.mxu0 0
        %2201 = vmatprep.subr.bf16.mxu0 0
        %2202 = vmatpush1.bf16.msra.mxu0 0
        %2203 = vmatprep.mubr.bf16.mxu0 0
        %2204 = vmatmul.mubr.bf16.gmra.mrb[0].mxu0 %v2145
        %v2205 = vpop.f32.mrb[0].mxu0
        %v2206 = vadd.f32 0.0, %v2205
        %v2207 = vpop.f32.mrb[0].mxu0
        %v2208 = vpop.f32.mrb[0].mxu0
        %v2209 = vadd.f32 0.0, %v2208
        %v2210 = vpop.f32.mrb[0].mxu0
        %2211 = vmatprep.mubr.bf16.mxu0 0
        %2212 = vmatmul.mubr.bf16.gmra.mrb[0].mxu0 %v2148
        %v2213 = vpop.f32.mrb[0].mxu0
        %v2214 = vadd.f32 0.0, %v2213
        %v2215 = vpop.f32.mrb[0].mxu0
        %v2216 = vpop.f32.mrb[0].mxu0
        %v2217 = vadd.f32 0.0, %v2216
        %v2218 = vpop.f32.mrb[0].mxu0
        %2219 = vmatprep.mubr.bf16.mxu0 0
        %2220 = vmatmul.mubr.bf16.gmra.mrb[0].mxu0 %v2151
        %v2221 = vpop.f32.mrb[0].mxu0
        %v2222 = vadd.f32 0.0, %v2221
        %v2223 = vpop.f32.mrb[0].mxu0
        %v2224 = vpop.f32.mrb[0].mxu0
        %v2225 = vadd.f32 0.0, %v2224
        %v2226 = vpop.f32.mrb[0].mxu0
        %2227 = vmatprep.mubr.bf16.mxu0 0
        %2228 = vmatmul.mubr.bf16.gmra.mrb[0].mxu0 %v2154
        %v2229 = vpop.f32.mrb[0].mxu0
        %v2230 = vadd.f32 0.0, %v2229
        %v2231 = vpop.f32.mrb[0].mxu0
        %v2232 = vpop.f32.mrb[0].mxu0
        %v2233 = vadd.f32 0.0, %v2232
        %v2234 = vpop.f32.mrb[0].mxu0
        %2235 = vmatprep.mubr.bf16.mxu0 0
        %2236 = vmatmul.mubr.bf16.gmra.mrb[0].mxu0 %v2157
        %v2237 = vpop.f32.mrb[0].mxu0
        %v2238 = vadd.f32 0.0, %v2237
        %v2239 = vpop.f32.mrb[0].mxu0
        %v2240 = vpop.f32.mrb[0].mxu0
        %v2241 = vadd.f32 0.0, %v2240
        %v2242 = vpop.f32.mrb[0].mxu0
        %2243 = vmatprep.mubr.bf16.mxu0 0
        %2244 = vmatmul.mubr.bf16.gmra.mrb[0].mxu0 %v2160
        %v2245 = vpop.f32.mrb[0].mxu0
        %v2246 = vadd.f32 0.0, %v2245
        %v2247 = vpop.f32.mrb[0].mxu0
        %v2248 = vpop.f32.mrb[0].mxu0
        %v2249 = vadd.f32 0.0, %v2248
        %v2250 = vpop.f32.mrb[0].mxu0
        %2251 = vmatprep.mubr.bf16.mxu0 0
        %2252 = vmatmul.mubr.bf16.gmra.mrb[0].mxu0 %v2163
        %v2253 = vpop.f32.mrb[0].mxu0
        %v2254 = vadd.f32 0.0, %v2253
        %v2255 = vpop.f32.mrb[0].mxu0
        %v2256 = vpop.f32.mrb[0].mxu0
        %v2257 = vadd.f32 0.0, %v2256
        %v2258 = vpop.f32.mrb[0].mxu0
        %2259 = vmatprep.mubr.bf16.mxu0 0
        %2260 = vmatmul.mubr.bf16.gmra.mrb[0].mxu0 %v2166
        %v2261 = vpop.f32.mrb[0].mxu0
        %v2262 = vadd.f32 0.0, %v2261
        %v2263 = vpop.f32.mrb[0].mxu0
        %v2264 = vpop.f32.mrb[0].mxu0
        %v2265 = vadd.f32 0.0, %v2264
        %v2266 = vpop.f32.mrb[0].mxu0
        %2267 = vdwg.mxu0
        %v2268 = vld [vmem:[%s9] sm:$0x1]
        %v2270 = vlaneseq
        %v2271 = vshrl.u32 %v2270, 7
        %v2272 = vsub.s32 0, %v2271
        %v2273 = vrot.slane %v2268, %v2272
        %v2275 = vmul.f32 %v2206, %v2273
        %v2276 = vmul.f32 %v2209, %v2273
        %v2277 = vmul.f32 %v2214, %v2273
        %v2278 = vmul.f32 %v2217, %v2273
        %v2279 = vmul.f32 %v2222, %v2273
        %v2280 = vmul.f32 %v2225, %v2273
        %v2281 = vmul.f32 %v2230, %v2273
        %v2282 = vmul.f32 %v2233, %v2273
        %v2283 = vmul.f32 %v2238, %v2273
        %v2284 = vmul.f32 %v2241, %v2273
        %v2285 = vmul.f32 %v2246, %v2273
        %v2286 = vmul.f32 %v2249, %v2273
        %v2287 = vmul.f32 %v2254, %v2273
        %v2288 = vmul.f32 %v2257, %v2273
        %v2289 = vmul.f32 %v2262, %v2273
        %v2290 = vmul.f32 %v2265, %v2273
        %v2291 = vld [vmem:[%s10] sm:$0x1]
        %v2293 = vlaneseq
        %v2294 = vshrl.u32 %v2293, 7
        %v2295 = vsub.s32 0, %v2294
        %v2296 = vrot.slane %v2291, %v2295
        %v2298 = vadd.f32 %v2275, %v2296
        %v2299 = vadd.f32 %v2276, %v2296
        %v2300 = vadd.f32 %v2277, %v2296
        %v2301 = vadd.f32 %v2278, %v2296
        %v2302 = vadd.f32 %v2279, %v2296
        %v2303 = vadd.f32 %v2280, %v2296
        %v2304 = vadd.f32 %v2281, %v2296
        %v2305 = vadd.f32 %v2282, %v2296
        %v2306 = vadd.f32 %v2283, %v2296
        %v2307 = vadd.f32 %v2284, %v2296
        %v2308 = vadd.f32 %v2285, %v2296
        %v2309 = vadd.f32 %v2286, %v2296
        %v2310 = vadd.f32 %v2287, %v2296
        %v2311 = vadd.f32 %v2288, %v2296
        %v2312 = vadd.f32 %v2289, %v2296
        %v2313 = vadd.f32 %v2290, %v2296
        %v2314 = vld [vmem:[%s415] sm:$0xff]
        %v2315 = vld [vmem:[%s415 + $0x8] sm:$0xff]
        %v2316 = vld [vmem:[%s415 + $0x10] sm:$0xff]
        %v2317 = vld [vmem:[%s415 + $0x18] sm:$0xff]
        %v2318 = vld [vmem:[%s415 + $0x20] sm:$0xff]
        %v2319 = vld [vmem:[%s415 + $0x28] sm:$0xff]
        %v2320 = vld [vmem:[%s415 + $0x30] sm:$0xff]
        %v2321 = vld [vmem:[%s415 + $0x38] sm:$0xff]
        %v2322 = vld [vmem:[%s415 + $0x40] sm:$0xff]
        %v2323 = vld [vmem:[%s415 + $0x48] sm:$0xff]
        %v2324 = vld [vmem:[%s415 + $0x50] sm:$0xff]
        %v2325 = vld [vmem:[%s415 + $0x58] sm:$0xff]
        %v2326 = vld [vmem:[%s415 + $0x60] sm:$0xff]
        %v2327 = vld [vmem:[%s415 + $0x68] sm:$0xff]
        %v2328 = vld [vmem:[%s415 + $0x70] sm:$0xff]
        %v2329 = vld [vmem:[%s415 + $0x78] sm:$0xff]
        %v2330 = vadd.f32 %v2298, %v2314
        %v2331 = vadd.f32 %v2299, %v2315
        %v2332 = vadd.f32 %v2300, %v2316
        %v2333 = vadd.f32 %v2301, %v2317
        %v2334 = vadd.f32 %v2302, %v2318
        %v2335 = vadd.f32 %v2303, %v2319
        %v2336 = vadd.f32 %v2304, %v2320
        %v2337 = vadd.f32 %v2305, %v2321
        %v2338 = vadd.f32 %v2306, %v2322
        %v2339 = vadd.f32 %v2307, %v2323
        %v2340 = vadd.f32 %v2308, %v2324
        %v2341 = vadd.f32 %v2309, %v2325
        %v2342 = vadd.f32 %v2310, %v2326
        %v2343 = vadd.f32 %v2311, %v2327
        %v2344 = vadd.f32 %v2312, %v2328
        %v2345 = vadd.f32 %v2313, %v2329
        %v2346 = vmax.f32 %v2330, 0.0
        %v2347 = vmax.f32 %v2331, 0.0
        %v2348 = vmax.f32 %v2332, 0.0
        %v2349 = vmax.f32 %v2333, 0.0
        %v2350 = vmax.f32 %v2334, 0.0
        %v2351 = vmax.f32 %v2335, 0.0
        %v2352 = vmax.f32 %v2336, 0.0
        %v2353 = vmax.f32 %v2337, 0.0
        %v2354 = vmax.f32 %v2338, 0.0
        %v2355 = vmax.f32 %v2339, 0.0
        %v2356 = vmax.f32 %v2340, 0.0
        %v2357 = vmax.f32 %v2341, 0.0
        %v2358 = vmax.f32 %v2342, 0.0
        %v2359 = vmax.f32 %v2343, 0.0
        %v2360 = vmax.f32 %v2344, 0.0
        %v2361 = vmax.f32 %v2345, 0.0
        %2362 = vst.msk [vmem:[%s467] sm:$0xff] %vm503, %v2346
        %2363 = vst.msk [vmem:[%s467 + $0x8] sm:$0xff] %vm503, %v2347
        %2364 = vst.msk [vmem:[%s467 + $0x10] sm:$0xff] %vm503, %v2348
        %2365 = vst.msk [vmem:[%s467 + $0x18] sm:$0xff] %vm503, %v2349
        %2366 = vst.msk [vmem:[%s467 + $0x20] sm:$0xff] %vm503, %v2350
        %2367 = vst.msk [vmem:[%s467 + $0x28] sm:$0xff] %vm503, %v2351
        %2368 = vst.msk [vmem:[%s467 + $0x30] sm:$0xff] %vm503, %v2352
        %2369 = vst.msk [vmem:[%s467 + $0x38] sm:$0xff] %vm503, %v2353
        %2370 = vst.msk [vmem:[%s467 + $0x40] sm:$0xff] %vm503, %v2354
        %2371 = vst.msk [vmem:[%s467 + $0x48] sm:$0xff] %vm503, %v2355
        %2372 = vst.msk [vmem:[%s467 + $0x50] sm:$0xff] %vm503, %v2356
        %2373 = vst.msk [vmem:[%s467 + $0x58] sm:$0xff] %vm503, %v2357
        %2374 = vst.msk [vmem:[%s467 + $0x60] sm:$0xff] %vm503, %v2358
        %2375 = vst.msk [vmem:[%s467 + $0x68] sm:$0xff] %vm503, %v2359
        %2376 = vst.msk [vmem:[%s467 + $0x70] sm:$0xff] %vm503, %v2360
        %2377 = vst.msk [vmem:[%s467 + $0x78] sm:$0xff] %vm503, %v2361
        %s2378 = sand.u32 %s298, 1
        %s2379 = scalar_lea.sflag [#allocation5], %s2378
        %s2380 = sand.u32 %s298, 1
        %s2381 = smul.addr %s2380, 128
        %s2382 = scalar_lea.vmem [#allocation8], %s2381
        // Predicated region
        $region73: #{tpu_custom_call.1} parent=63 // pred_check
          %p2383 = pneg %p308
        $region74: #{tpu_custom_call.1} parent=63 // pred_check_branch
          %2385 = sbr.rel (%p2383) target = $region76
        $region75: #{tpu_custom_call.1} parent=63 // pred_region
          %s2386 = smul.u32 8, %s36
          %s2388 = ssub.s32 2048, 2048
          %2389 = vsyncadd %s2379, %s2388
          %s2390 = smul.addr %s2386, 2
          %s2391 = smul.addr %s35, 32
          %s2392 = sadd.s32 %s2390, %s2391
          %s2393 = smul.addr %s2392, 128
          %s2394 = scalar_lea.hbm %s11, %s2393
          %s2395 = sshll.u32 %s2382, 4
          %s2396 = int_to_ptr.vmem [resolvable:$true] %s2395
          %2401 = dma.vmem_to_hbm [thread:$0]  %s2396, 2048, %s2394, %s2379, 128, 128, 8
        $region76: #{tpu_custom_call.1} parent=63 // pred_fallthru
          _
      $region64: #{tpu_custom_call.1} parent=5 // pred_fallthru
        _
      %p2402 = scmp.le.s32.totalorder 2, %s26
      // Predicated region
      $region77: #{tpu_custom_call.1} parent=5 // pred_check
        %p2403 = pneg %p2402
      $region78: #{tpu_custom_call.1} parent=5 // pred_check_branch
        %2405 = sbr.rel (%p2403) target = $region80
      $region79: #{tpu_custom_call.1} parent=5 // pred_region
        %s2406 = ssub.s32 %s26, 2
        // Predicated region
        $region81: #{tpu_custom_call.1} parent=79 // pred_check
          %p2407 = pneg %p314
        $region82: #{tpu_custom_call.1} parent=79 // pred_check_branch
          %2409 = sbr.rel (%p2407) target = $region84
        $region83: #{tpu_custom_call.1} parent=79 // pred_region
          %s2410 = sand.u32 %s299, 1
          %s2411 = scalar_lea.sflag [#allocation5], %s2410
          %s2412 = sand.u32 %s299, 1
          %s2413 = smul.addr %s2412, 128
          %s2414 = scalar_lea.vmem [#allocation8], %s2413
          %2415 = dma.done %s2411, 2048
        $region84: #{tpu_custom_call.1} parent=79 // pred_fallthru
          _
      $region80: #{tpu_custom_call.1} parent=5 // pred_fallthru
        _
    $region6: #{tpu_custom_call.1} parent=1 // loop_footer
      %s30 = sadd.s32 1, %s26
    $region7: #{tpu_custom_call.1} parent=1 // loop_footer_branch
      %25 = sbr.rel target = $region3
    $region8: #{tpu_custom_call.1} parent=1 // loop_exit
      _
    %2416 = vsyncpa [#allocation4], 1
    %s2417 = scalar_lea.sflag [#allocation4], 1
    %2418 = vsyncpa %s2417, 1
    %2419 = vsyncpa [#allocation7], 1
    %s2420 = scalar_lea.sflag [#allocation7], 1
    %2421 = vsyncpa %s2420, 1
    %2422 = vsyncpa [#allocation5], 1
    %s2423 = scalar_lea.sflag [#allocation5], 1
    %2424 = vsyncpa %s2423, 1

// kernel: tpu_custom_call.1
$region0: #{tpu_custom_call.1}
  #allocation0 [shape = 'u32[]', space=smem, size = 0x4, offset = 0x4, fixed_abs, tag = 'smem constant byte address 0x4 - core index']
  #allocation1 [shape = 'u32[144,128]{1,0:T(1,128)}', space=vmem, size = 0x12000, scoped, tag = 'internal scratch']
  #allocation2 [shape = 'bf16[10,16,4]{2,1,0:T(16,128)(2,1)}', space=vmem, size = 0xa000, scoped, tag = 'scratch operand']
  %s0 = inlined_call_operand.hbm [shape: f32[2,16,16,16], index: 0, kind: input, shape index: {}]
  %s1 = inlined_call_operand.hbm [shape: f32[2,2,2,16,16], index: 1, kind: input, shape index: {}]
  %s2 = inlined_call_operand.vmem [shape: bf16[16,4], index: 2, kind: input, shape index: {}]
  %s3 = inlined_call_operand.vmem [shape: f32[1,4], index: 3, kind: input, shape index: {}]
  %s4 = inlined_call_operand.vmem [shape: f32[1,4], index: 4, kind: input, shape index: {}]
  %s5 = inlined_call_operand.vmem [shape: bf16[9,4,4], index: 5, kind: input, shape index: {}]
  %s6 = inlined_call_operand.vmem [shape: f32[1,4], index: 6, kind: input, shape index: {}]
  %s7 = inlined_call_operand.vmem [shape: f32[1,4], index: 7, kind: input, shape index: {}]
  %s8 = inlined_call_operand.vmem [shape: bf16[4,16], index: 8, kind: input, shape index: {}]
  %s9 = inlined_call_operand.vmem [shape: f32[1,16], index: 9, kind: input, shape index: {}]
  %s10 = inlined_call_operand.vmem [shape: f32[1,16], index: 10, kind: input, shape index: {}]
  %s11 = inlined_call_operand.hbm [shape: f32[2,16,16,16], index: 11, kind: output, shape index: {}]
  %s12 = sld [smem:[#allocation0]]
  $region85: #{tpu_custom_call.1} parent=0
    _
  %s14 = ssub.s32 1, %s12
  %s15 = scalar_select 0, %s14, %s12
  $region1: #{tpu_custom_call.1} parent=0
    #allocation3 [shape = 'u8[131072]{0}', space=vmem, size = 0x20000, scoped, tag = 'input window, operand 0']
    #allocation4 [shape = 's32[2]{0}', space=sflag, size = 0x8, scoped, tag = 'scoped memory for tpu_custom_call.1']
    #allocation5 [shape = 's32[2]{0}', space=sflag, size = 0x8, scoped, tag = 'scoped memory for tpu_custom_call.1']
    #allocation6 [shape = 'u8[32768]{0}', space=vmem, size = 0x8000, scoped, tag = 'input window, operand 1']
    #allocation7 [shape = 's32[2]{0}', space=sflag, size = 0x8, scoped, tag = 'scoped memory for tpu_custom_call.1']
    #allocation8 [shape = 'u8[131072]{0}', space=vmem, size = 0x20000, scoped, tag = 'output window, operand 0']
    %16 = vsyncpa [#allocation4], 0
    %s17 = scalar_lea.sflag [#allocation4], 1
    %18 = vsyncpa %s17, 0
    %19 = vsyncpa [#allocation7], 0
    %s20 = scalar_lea.sflag [#allocation7], 1
    %21 = vsyncpa %s20, 0
    %22 = vsyncpa [#allocation5], 0
    %s23 = scalar_lea.sflag [#allocation5], 1
    %24 = vsyncpa %s23, 0
    loop: start=0, step=1, limit=6
    $region2: #{tpu_custom_call.1} parent=1 // loop_pre_header
      _
    $region3: #{tpu_custom_call.1} parent=1 // loop_header
      %s26 = sphi 0, %s30
      %p27 = scmp.ge.s32.totalorder %s26, 6
      %s33 = sphi 0, %s45
      %s34 = sphi 0, %s41
      %s35 = sphi 0, %s33
      %s36 = sphi 0, %s34
      %s37 = sphi 0, %s35
      %s38 = sphi 0, %s36
      %s50 = sphi 0, %s52
      %s53 = sphi 0, %s50
      %s54 = sphi 0, %s53
      %s70 = sphi 0, %s54
      %s78 = sphi 0, %s80
      %s81 = sphi 0, %s78
      %s82 = sphi 0, %s81
      %s98 = sphi 0, %s82
      %s102 = sphi 0, %s102
      %s104 = sphi 0, %s102
      %s105 = sphi 0, %s104
      %s119 = sphi 0, %s105
      %s123 = sphi 0, %s123
      %s125 = sphi 0, %s123
      %s126 = sphi 0, %s125
      %s140 = sphi 0, %s126
      %s144 = sphi 0, %s144
      %s146 = sphi 0, %s144
      %s147 = sphi 0, %s146
      %s161 = sphi 0, %s147
      %s165 = sphi 0, %s165
      %s167 = sphi 0, %s165
      %s168 = sphi 0, %s167
      %s182 = sphi 0, %s168
      %s186 = sphi 0, %s186
      %s188 = sphi 0, %s186
      %s189 = sphi 0, %s188
      %s203 = sphi 0, %s189
      %s207 = sphi 0, %s207
      %s209 = sphi 0, %s207
      %s210 = sphi 0, %s209
      %s224 = sphi 0, %s210
      %s228 = sphi 0, %s228
      %s230 = sphi 0, %s228
      %s231 = sphi 0, %s230
      %s245 = sphi 0, %s231
      %s249 = sphi 0, %s249
      %s251 = sphi 0, %s249
      %s252 = sphi 0, %s251
      %s266 = sphi 0, %s252
      %s270 = sphi 0, %s270
      %s272 = sphi 0, %s270
      %s273 = sphi 0, %s272
      %s287 = sphi 0, %s273
      %s295 = sphi 0, %s297
      %s298 = sphi 0, %s295
      %s299 = sphi 0, %s298
      %s315 = sphi 0, %s299
    $region4: #{tpu_custom_call.1} parent=1 // loop_header_branch
      %29 = sbr.rel (%p27) target = $region8
    $region5: #{tpu_custom_call.1} parent=1 // loop_body
      %s31 = ssub.s32 %s26, 1
      %s32 = ssub.s32 %s26, 2
      %s39 = sadd.s32 1, %s34
      %p40 = scmp.ge.s32.totalorder %s39, 2
      %s41 = scalar_select %p40, 0, %s39
      %s42 = sadd.s32 1, %s33
      %s43 = scalar_select %p40, %s42, %s33
      %p44 = scmp.ge.s32.totalorder %s43, 2
      %s45 = scalar_select %p44, 0, %s43
      %s46 = ssub.s32 %s33, %s45
      %s47 = ssub.s32 %s34, %s41
      %s48 = sor.u32 %s46, %s47
      %p49 = scmp.eq.s32.totalorder %s48, 0
      %s51 = sadd.s32 %s50, 1
      %s52 = scalar_select %p49, %s50, %s51
      %p55 = pneg %p49
      %p56 = scmp.eq.s32.totalorder %s26, 3
      %p57 = por %p55, %p56
      %p58 = scmp.ne.s32.totalorder %s50, %s53
      %p59 = scmp.eq.s32.totalorder %s26, 0
      %p60 = por %p58, %p59
      %p61 = scmp.ne.s32.totalorder %s50, %s53
      %p62 = scmp.eq.s32.totalorder %s31, 3
      %p63 = por %p61, %p62
      %p64 = scmp.ne.s32.totalorder %s53, %s54
      %p65 = scmp.eq.s32.totalorder %s31, 0
      %p66 = por %p64, %p65
      %p67 = scmp.ne.s32.totalorder %s53, %s54
      %p68 = scmp.eq.s32.totalorder %s32, 3
      %p69 = por %p67, %p68
      %p71 = scmp.ne.s32.totalorder %s54, %s70
      %p72 = scmp.eq.s32.totalorder %s32, 0
      %p73 = por %p71, %p72
      %s74 = ssub.s32 %s33, %s45
      %s75 = ssub.s32 %s34, %s41
      %s76 = sor.u32 %s74, %s75
      %p77 = scmp.eq.s32.totalorder %s76, 0
      %s79 = sadd.s32 %s78, 1
      %s80 = scalar_select %p77, %s78, %s79
      %p83 = pneg %p77
      %p84 = scmp.eq.s32.totalorder %s26, 3
      %p85 = por %p83, %p84
      %p86 = scmp.ne.s32.totalorder %s78, %s81
      %p87 = scmp.eq.s32.totalorder %s26, 0
      %p88 = por %p86, %p87
      %p89 = scmp.ne.s32.totalorder %s78, %s81
      %p90 = scmp.eq.s32.totalorder %s31, 3
      %p91 = por %p89, %p90
      %p92 = scmp.ne.s32.totalorder %s81, %s82
      %p93 = scmp.eq.s32.totalorder %s31, 0
      %p94 = por %p92, %p93
      %p95 = scmp.ne.s32.totalorder %s81, %s82
      %p96 = scmp.eq.s32.totalorder %s32, 3
      %p97 = por %p95, %p96
      %p99 = scmp.ne.s32.totalorder %s82, %s98
      %p100 = scmp.eq.s32.totalorder %s32, 0
      %p101 = por %p99, %p100
      %s103 = sadd.s32 %s102, 1
      %p106 = scmp.eq.s32.totalorder %s26, 3
      %p107 = scmp.ne.s32.totalorder %s102, %s104
      %p108 = scmp.eq.s32.totalorder %s26, 0
      %p109 = por %p107, %p108
      %p110 = scmp.ne.s32.totalorder %s102, %s104
      %p111 = scmp.eq.s32.totalorder %s31, 3
      %p112 = por %p110, %p111
      %p113 = scmp.ne.s32.totalorder %s104, %s105
      %p114 = scmp.eq.s32.totalorder %s31, 0
      %p115 = por %p113, %p114
      %p116 = scmp.ne.s32.totalorder %s104, %s105
      %p117 = scmp.eq.s32.totalorder %s32, 3
      %p118 = por %p116, %p117
      %p120 = scmp.ne.s32.totalorder %s105, %s119
      %p121 = scmp.eq.s32.totalorder %s32, 0
      %p122 = por %p120, %p121
      %s124 = sadd.s32 %s123, 1
      %p127 = scmp.eq.s32.totalorder %s26, 3
      %p128 = scmp.ne.s32.totalorder %s123, %s125
      %p129 = scmp.eq.s32.totalorder %s26, 0
      %p130 = por %p128, %p129
      %p131 = scmp.ne.s32.totalorder %s123, %s125
      %p132 = scmp.eq.s32.totalorder %s31, 3
      %p133 = por %p131, %p132
      %p134 = scmp.ne.s32.totalorder %s125, %s126
      %p135 = scmp.eq.s32.totalorder %s31, 0
      %p136 = por %p134, %p135
      %p137 = scmp.ne.s32.totalorder %s125, %s126
      %p138 = scmp.eq.s32.totalorder %s32, 3
      %p139 = por %p137, %p138
      %p141 = scmp.ne.s32.totalorder %s126, %s140
      %p142 = scmp.eq.s32.totalorder %s32, 0
      %p143 = por %p141, %p142
      %s145 = sadd.s32 %s144, 1
      %p148 = scmp.eq.s32.totalorder %s26, 3
      %p149 = scmp.ne.s32.totalorder %s144, %s146
      %p150 = scmp.eq.s32.totalorder %s26, 0
      %p151 = por %p149, %p150
      %p152 = scmp.ne.s32.totalorder %s144, %s146
      %p153 = scmp.eq.s32.totalorder %s31, 3
      %p154 = por %p152, %p153
      %p155 = scmp.ne.s32.totalorder %s146, %s147
      %p156 = scmp.eq.s32.totalorder %s31, 0
      %p157 = por %p155, %p156
      %p158 = scmp.ne.s32.totalorder %s146, %s147
      %p159 = scmp.eq.s32.totalorder %s32, 3
      %p160 = por %p158, %p159
      %p162 = scmp.ne.s32.totalorder %s147, %s161
      %p163 = scmp.eq.s32.totalorder %s32, 0
      %p164 = por %p162, %p163
      %s166 = sadd.s32 %s165, 1
      %p169 = scmp.eq.s32.totalorder %s26, 3
      %p170 = scmp.ne.s32.totalorder %s165, %s167
      %p171 = scmp.eq.s32.totalorder %s26, 0
      %p172 = por %p170, %p171
      %p173 = scmp.ne.s32.totalorder %s165, %s167
      %p174 = scmp.eq.s32.totalorder %s31, 3
      %p175 = por %p173, %p174
      %p176 = scmp.ne.s32.totalorder %s167, %s168
      %p177 = scmp.eq.s32.totalorder %s31, 0
      %p178 = por %p176, %p177
      %p179 = scmp.ne.s32.totalorder %s167, %s168
      %p180 = scmp.eq.s32.totalorder %s32, 3
      %p181 = por %p179, %p180
      %p183 = scmp.ne.s32.totalorder %s168, %s182
      %p184 = scmp.eq.s32.totalorder %s32, 0
      %p185 = por %p183, %p184
      %s187 = sadd.s32 %s186, 1
      %p190 = scmp.eq.s32.totalorder %s26, 3
      %p191 = scmp.ne.s32.totalorder %s186, %s188
      %p192 = scmp.eq.s32.totalorder %s26, 0
      %p193 = por %p191, %p192
      %p194 = scmp.ne.s32.totalorder %s186, %s188
      %p195 = scmp.eq.s32.totalorder %s31, 3
      %p196 = por %p194, %p195
      %p197 = scmp.ne.s32.totalorder %s188, %s189
      %p198 = scmp.eq.s32.totalorder %s31, 0
      %p199 = por %p197, %p198
      %p200 = scmp.ne.s32.totalorder %s188, %s189
      %p201 = scmp.eq.s32.totalorder %s32, 3
      %p202 = por %p200, %p201
      %p204 = scmp.ne.s32.totalorder %s189, %s203
      %p205 = scmp.eq.s32.totalorder %s32, 0
      %p206 = por %p204, %p205
      %s208 = sadd.s32 %s207, 1
      %p211 = scmp.eq.s32.totalorder %s26, 3
      %p212 = scmp.ne.s32.totalorder %s207, %s209
      %p213 = scmp.eq.s32.totalorder %s26, 0
      %p214 = por %p212, %p213
      %p215 = scmp.ne.s32.totalorder %s207, %s209
      %p216 = scmp.eq.s32.totalorder %s31, 3
      %p217 = por %p215, %p216
      %p218 = scmp.ne.s32.totalorder %s209, %s210
      %p219 = scmp.eq.s32.totalorder %s31, 0
      %p220 = por %p218, %p219
      %p221 = scmp.ne.s32.totalorder %s209, %s210
      %p222 = scmp.eq.s32.totalorder %s32, 3
      %p223 = por %p221, %p222
      %p225 = scmp.ne.s32.totalorder %s210, %s224
      %p226 = scmp.eq.s32.totalorder %s32, 0
      %p227 = por %p225, %p226
      %s229 = sadd.s32 %s228, 1
      %p232 = scmp.eq.s32.totalorder %s26, 3
      %p233 = scmp.ne.s32.totalorder %s228, %s230
      %p234 = scmp.eq.s32.totalorder %s26, 0
      %p235 = por %p233, %p234
      %p236 = scmp.ne.s32.totalorder %s228, %s230
      %p237 = scmp.eq.s32.totalorder %s31, 3
      %p238 = por %p236, %p237
      %p239 = scmp.ne.s32.totalorder %s230, %s231
      %p240 = scmp.eq.s32.totalorder %s31, 0
      %p241 = por %p239, %p240
      %p242 = scmp.ne.s32.totalorder %s230, %s231
      %p243 = scmp.eq.s32.totalorder %s32, 3
      %p244 = por %p242, %p243
      %p246 = scmp.ne.s32.totalorder %s231, %s245
      %p247 = scmp.eq.s32.totalorder %s32, 0
      %p248 = por %p246, %p247
      %s250 = sadd.s32 %s249, 1
      %p253 = scmp.eq.s32.totalorder %s26, 3
      %p254 = scmp.ne.s32.totalorder %s249, %s251
      %p255 = scmp.eq.s32.totalorder %s26, 0
      %p256 = por %p254, %p255
      %p257 = scmp.ne.s32.totalorder %s249, %s251
      %p258 = scmp.eq.s32.totalorder %s31, 3
      %p259 = por %p257, %p258
      %p260 = scmp.ne.s32.totalorder %s251, %s252
      %p261 = scmp.eq.s32.totalorder %s31, 0
      %p262 = por %p260, %p261
      %p263 = scmp.ne.s32.totalorder %s251, %s252
      %p264 = scmp.eq.s32.totalorder %s32, 3
      %p265 = por %p263, %p264
      %p267 = scmp.ne.s32.totalorder %s252, %s266
      %p268 = scmp.eq.s32.totalorder %s32, 0
      %p269 = por %p267, %p268
      %s271 = sadd.s32 %s270, 1
      %p274 = scmp.eq.s32.totalorder %s26, 3
      %p275 = scmp.ne.s32.totalorder %s270, %s272
      %p276 = scmp.eq.s32.totalorder %s26, 0
      %p277 = por %p275, %p276
      %p278 = scmp.ne.s32.totalorder %s270, %s272
      %p279 = scmp.eq.s32.totalorder %s31, 3
      %p280 = por %p278, %p279
      %p281 = scmp.ne.s32.totalorder %s272, %s273
      %p282 = scmp.eq.s32.totalorder %s31, 0
      %p283 = por %p281, %p282
      %p284 = scmp.ne.s32.totalorder %s272, %s273
      %p285 = scmp.eq.s32.totalorder %s32, 3
      %p286 = por %p284, %p285
      %p288 = scmp.ne.s32.totalorder %s273, %s287
      %p289 = scmp.eq.s32.totalorder %s32, 0
      %p290 = por %p288, %p289
      %s291 = ssub.s32 %s33, %s45
      %s292 = ssub.s32 %s34, %s41
      %s293 = sor.u32 %s291, %s292
      %p294 = scmp.eq.s32.totalorder %s293, 0
      %s296 = sadd.s32 %s295, 1
      %s297 = scalar_select %p294, %s295, %s296
      %p300 = pneg %p294
      %p301 = scmp.eq.s32.totalorder %s26, 3
      %p302 = por %p300, %p301
      %p303 = scmp.ne.s32.totalorder %s295, %s298
      %p304 = scmp.eq.s32.totalorder %s26, 0
      %p305 = por %p303, %p304
      %p306 = scmp.ne.s32.totalorder %s295, %s298
      %p307 = scmp.eq.s32.totalorder %s31, 3
      %p308 = por %p306, %p307
      %p309 = scmp.ne.s32.totalorder %s298, %s299
      %p310 = scmp.eq.s32.totalorder %s31, 0
      %p311 = por %p309, %p310
      %p312 = scmp.ne.s32.totalorder %s298, %s299
      %p313 = scmp.eq.s32.totalorder %s32, 3
      %p314 = por %p312, %p313
      %p316 = scmp.ne.s32.totalorder %s299, %s315
      %p317 = scmp.eq.s32.totalorder %s32, 0
      %p318 = por %p316, %p317
      %p319 = scmp.le.s32.totalorder 1, %s26
      %p320 = scmp.lt.s32.totalorder %s26, 5
      %p321 = pnand %p319, %p320
      %p322 = pneg %p321
      // Predicated region
      $region9: #{tpu_custom_call.1} parent=5 // pred_check
        _
      $region10: #{tpu_custom_call.1} parent=5 // pred_check_branch
        %324 = sbr.rel (%p321) target = $region12
      $region11: #{tpu_custom_call.1} parent=5 // pred_region
        %s325 = ssub.s32 %s26, 1
        // Predicated region
        $region13: #{tpu_custom_call.1} parent=11 // pred_check
          %p326 = pneg %p115
        $region14: #{tpu_custom_call.1} parent=11 // pred_check_branch
          %328 = sbr.rel (%p326) target = $region16
        $region15: #{tpu_custom_call.1} parent=11 // pred_region
          _
        $region16: #{tpu_custom_call.1} parent=11 // pred_fallthru
          _
        // Predicated region
        $region17: #{tpu_custom_call.1} parent=11 // pred_check
          %p329 = pneg %p136
        $region18: #{tpu_custom_call.1} parent=11 // pred_check_branch
          %331 = sbr.rel (%p329) target = $region20
        $region19: #{tpu_custom_call.1} parent=11 // pred_region
          _
        $region20: #{tpu_custom_call.1} parent=11 // pred_fallthru
          _
        // Predicated region
        $region21: #{tpu_custom_call.1} parent=11 // pred_check
          %p332 = pneg %p157
        $region22: #{tpu_custom_call.1} parent=11 // pred_check_branch
          %334 = sbr.rel (%p332) target = $region24
        $region23: #{tpu_custom_call.1} parent=11 // pred_region
          _
        $region24: #{tpu_custom_call.1} parent=11 // pred_fallthru
          _
        // Predicated region
        $region25: #{tpu_custom_call.1} parent=11 // pred_check
          %p335 = pneg %p178
        $region26: #{tpu_custom_call.1} parent=11 // pred_check_branch
          %337 = sbr.rel (%p335) target = $region28
        $region27: #{tpu_custom_call.1} parent=11 // pred_region
          _
        $region28: #{tpu_custom_call.1} parent=11 // pred_fallthru
          _
        // Predicated region
        $region29: #{tpu_custom_call.1} parent=11 // pred_check
          %p338 = pneg %p199
        $region30: #{tpu_custom_call.1} parent=11 // pred_check_branch
          %340 = sbr.rel (%p338) target = $region32
        $region31: #{tpu_custom_call.1} parent=11 // pred_region
          _
        $region32: #{tpu_custom_call.1} parent=11 // pred_fallthru
          _
        // Predicated region
        $region33: #{tpu_custom_call.1} parent=11 // pred_check
          %p341 = pneg %p220
        $region34: #{tpu_custom_call.1} parent=11 // pred_check_branch
          %343 = sbr.rel (%p341) target = $region36
        $region35: #{tpu_custom_call.1} parent=11 // pred_region
          _
        $region36: #{tpu_custom_call.1} parent=11 // pred_fallthru
          _
        // Predicated region
        $region37: #{tpu_custom_call.1} parent=11 // pred_check
          %p344 = pneg %p241
        $region38: #{tpu_custom_call.1} parent=11 // pred_check_branch
          %346 = sbr.rel (%p344) target = $region40
        $region39: #{tpu_custom_call.1} parent=11 // pred_region
          _
        $region40: #{tpu_custom_call.1} parent=11 // pred_fallthru
          _
        // Predicated region
        $region41: #{tpu_custom_call.1} parent=11 // pred_check
          %p347 = pneg %p262
        $region42: #{tpu_custom_call.1} parent=11 // pred_check_branch
          %349 = sbr.rel (%p347) target = $region44
        $region43: #{tpu_custom_call.1} parent=11 // pred_region
          _
        $region44: #{tpu_custom_call.1} parent=11 // pred_fallthru
          _
        // Predicated region
        $region45: #{tpu_custom_call.1} parent=11 // pred_check
          %p350 = pneg %p283
        $region46: #{tpu_custom_call.1} parent=11 // pred_check_branch
          %352 = sbr.rel (%p350) target = $region48
        $region47: #{tpu_custom_call.1} parent=11 // pred_region
          _
        $region48: #{tpu_custom_call.1} parent=11 // pred_fallthru
          _
      $region12: #{tpu_custom_call.1} parent=5 // pred_fallthru
        _
      %p353 = scmp.lt.s32.totalorder %s26, 4
      // Predicated region
      $region49: #{tpu_custom_call.1} parent=5 // pred_check
        %p354 = pneg %p353
      $region50: #{tpu_custom_call.1} parent=5 // pred_check_branch
        %356 = sbr.rel (%p354) target = $region52
      $region51: #{tpu_custom_call.1} parent=5 // pred_region
        // Predicated region
        $region53: #{tpu_custom_call.1} parent=51 // pred_check
          %p357 = pneg %p60
        $region54: #{tpu_custom_call.1} parent=51 // pred_check_branch
          %359 = sbr.rel (%p357) target = $region56
        $region55: #{tpu_custom_call.1} parent=51 // pred_region
          %s360 = sand.u32 %s50, 1
          %s361 = scalar_lea.sflag [#allocation4], %s360
          %s362 = sand.u32 %s50, 1
          %s363 = smul.addr %s362, 128
          %s364 = scalar_lea.vmem [#allocation3], %s363
          %s365 = smul.u32 8, %s34
          %s367 = ssub.s32 2048, 2048
          %368 = vsyncadd %s361, %s367
          %s369 = smul.addr %s365, 2
          %s370 = smul.addr %s33, 32
          %s371 = sadd.s32 %s369, %s370
          %s372 = smul.addr %s371, 128
          %s373 = scalar_lea.hbm %s0, %s372
          %s374 = sshll.u32 %s364, 4
          %s375 = int_to_ptr.vmem [resolvable:$true] %s374
          %380 = dma.hbm_to_vmem [thread:$0]  %s373, 2048, %s375, %s361, 128, 128, 8
        $region56: #{tpu_custom_call.1} parent=51 // pred_fallthru
          _
        // Predicated region
        $region57: #{tpu_custom_call.1} parent=51 // pred_check
          %p381 = pneg %p88
        $region58: #{tpu_custom_call.1} parent=51 // pred_check_branch
          %383 = sbr.rel (%p381) target = $region60
        $region59: #{tpu_custom_call.1} parent=51 // pred_region
          %s384 = sand.u32 %s78, 1
          %s385 = scalar_lea.sflag [#allocation7], %s384
          %s386 = sand.u32 %s78, 1
          %s387 = smul.addr %s386, 32
          %s388 = scalar_lea.vmem [#allocation6], %s387
          %s390 = ssub.s32 512, 512
          %391 = vsyncadd %s385, %s390
          %s392 = smul.addr %s34, 4
          %s393 = smul.addr %s33, 8
          %s394 = sadd.s32 %s392, %s393
          %s395 = smul.addr %s394, 128
          %s396 = scalar_lea.hbm %s1, %s395
          %s397 = sshll.u32 %s388, 4
          %s398 = int_to_ptr.vmem [resolvable:$true] %s397
          %403 = dma.hbm_to_vmem [thread:$0]  %s396, 512, %s398, %s385, 128, 128, 8
        $region60: #{tpu_custom_call.1} parent=51 // pred_fallthru
          _
      $region52: #{tpu_custom_call.1} parent=5 // pred_fallthru
        _
      %p404 = scmp.le.s32.totalorder 1, %s26
      %p405 = scmp.lt.s32.totalorder %s26, 5
      %p406 = pnand %p404, %p405
      %p407 = pneg %p406
      // Predicated region
      $region61: #{tpu_custom_call.1} parent=5 // pred_check
        _
      $region62: #{tpu_custom_call.1} parent=5 // pred_check_branch
        %409 = sbr.rel (%p406) target = $region64
      $region63: #{tpu_custom_call.1} parent=5 // pred_region
        %s410 = ssub.s32 %s26, 1
        %s411 = sand.u32 %s53, 1
        %s412 = scalar_lea.sflag [#allocation4], %s411
        %s413 = sand.u32 %s53, 1
        %s414 = smul.addr %s413, 128
        %s415 = scalar_lea.vmem [#allocation3], %s414
        // Predicated region
        $region65: #{tpu_custom_call.1} parent=63 // pred_check
          %p416 = pneg %p66
        $region66: #{tpu_custom_call.1} parent=63 // pred_check_branch
          %418 = sbr.rel (%p416) target = $region68
        $region67: #{tpu_custom_call.1} parent=63 // pred_region
          %419 = dma.done %s412, 2048
        $region68: #{tpu_custom_call.1} parent=63 // pred_fallthru
          _
        %s420 = sand.u32 %s81, 1
        %s421 = scalar_lea.sflag [#allocation7], %s420
        %s422 = sand.u32 %s81, 1
        %s423 = smul.addr %s422, 32
        %s424 = scalar_lea.vmem [#allocation6], %s423
        // Predicated region
        $region69: #{tpu_custom_call.1} parent=63 // pred_check
          %p425 = pneg %p94
        $region70: #{tpu_custom_call.1} parent=63 // pred_check_branch
          %427 = sbr.rel (%p425) target = $region72
        $region71: #{tpu_custom_call.1} parent=63 // pred_region
          %428 = dma.done %s421, 512
        $region72: #{tpu_custom_call.1} parent=63 // pred_fallthru
          _
        %s429 = sand.u32 %s53, 1
        %s430 = scalar_lea.sflag [#allocation4], %s429
        %s431 = sand.u32 %s53, 1
        %s432 = smul.addr %s431, 128
        %s433 = scalar_lea.vmem [#allocation3], %s432
        %p434 = pneg %p66
        %p435 = pneg %p63
        %s436 = sand.u32 %s81, 1
        %s437 = scalar_lea.sflag [#allocation7], %s436
        %s438 = sand.u32 %s81, 1
        %s439 = smul.addr %s438, 32
        %s440 = scalar_lea.vmem [#allocation6], %s439
        %p441 = pneg %p94
        %p442 = pneg %p91
        %p443 = pneg %p115
        %p444 = pneg %p112
        %p445 = pneg %p136
        %p446 = pneg %p133
        %p447 = pneg %p157
        %p448 = pneg %p154
        %p449 = pneg %p178
        %p450 = pneg %p175
        %p451 = pneg %p199
        %p452 = pneg %p196
        %p453 = pneg %p220
        %p454 = pneg %p217
        %p455 = pneg %p241
        %p456 = pneg %p238
        %p457 = pneg %p262
        %p458 = pneg %p259
        %p459 = pneg %p283
        %p460 = pneg %p280
        %p461 = pneg %p311
        %p462 = pneg %p308
        %s463 = sand.u32 %s298, 1
        %s464 = scalar_lea.sflag [#allocation5], %s463
        %s465 = sand.u32 %s298, 1
        %s466 = smul.addr %s465, 128
        %s467 = scalar_lea.vmem [#allocation8], %s466
        %s468 = smul.u32 8, %s36
        %s469 = smul.u32 8, %s36
        %v471 = vld [vmem:[%s415] sm:$0xff]
        %v472 = vld [vmem:[%s415 + $0x8] sm:$0xff]
        %v473 = vld [vmem:[%s415 + $0x10] sm:$0xff]
        %v474 = vld [vmem:[%s415 + $0x18] sm:$0xff]
        %v475 = vld [vmem:[%s415 + $0x20] sm:$0xff]
        %v476 = vld [vmem:[%s415 + $0x28] sm:$0xff]
        %v477 = vld [vmem:[%s415 + $0x30] sm:$0xff]
        %v478 = vld [vmem:[%s415 + $0x38] sm:$0xff]
        %v479 = vld [vmem:[%s415 + $0x40] sm:$0xff]
        %v480 = vld [vmem:[%s415 + $0x48] sm:$0xff]
        %v481 = vld [vmem:[%s415 + $0x50] sm:$0xff]
        %v482 = vld [vmem:[%s415 + $0x58] sm:$0xff]
        %v483 = vld [vmem:[%s415 + $0x60] sm:$0xff]
        %v484 = vld [vmem:[%s415 + $0x68] sm:$0xff]
        %v485 = vld [vmem:[%s415 + $0x70] sm:$0xff]
        %v486 = vld [vmem:[%s415 + $0x78] sm:$0xff]
        %v487 = vpack.c.bf16 %v472, %v471
        %v488 = vpack.c.bf16 %v474, %v473
        %v489 = vpack.c.bf16 %v476, %v475
        %v490 = vpack.c.bf16 %v478, %v477
        %v491 = vpack.c.bf16 %v480, %v479
        %v492 = vpack.c.bf16 %v482, %v481
        %v493 = vpack.c.bf16 %v484, %v483
        %v494 = vpack.c.bf16 %v486, %v485
        %v495 = vld [vmem:[%s2] sm:$0xf]
        %v496 = vld [vmem:[%s2 + $0x4] sm:$0xf]
        %v499 = vunpack.c.l.b16 %v495
        %v500 = vunpack.c.l.b16 %v496
        %v501 = vpack.c.b16 %v500, %v499
        %vm503 = vcmask 130048
        %v505 = vsel %vm503, %v487, 0
        %v508 = vsel %vm503, %v488, 0
        %v511 = vsel %vm503, %v489, 0
        %v514 = vsel %vm503, %v490, 0
        %v517 = vsel %vm503, %v491, 0
        %v520 = vsel %vm503, %v492, 0
        %v523 = vsel %vm503, %v493, 0
        %v526 = vsel %vm503, %v494, 0
        %528 = vmatprep.subr.bf16.mxu0 0
        %529 = vmatpush1.bf16.msra.mxu0 %v501
        %530 = vmatprep.subr.bf16.mxu0 0
        %531 = vmatpush1.bf16.msra.mxu0 0
        %532 = vmatprep.subr.bf16.mxu0 0
        %533 = vmatpush1.bf16.msra.mxu0 0
        %534 = vmatprep.subr.bf16.mxu0 0
        %535 = vmatpush1.bf16.msra.mxu0 0
        %536 = vmatprep.subr.bf16.mxu0 0
        %537 = vmatpush1.bf16.msra.mxu0 0
        %538 = vmatprep.subr.bf16.mxu0 0
        %539 = vmatpush1.bf16.msra.mxu0 0
        %540 = vmatprep.subr.bf16.mxu0 0
        %541 = vmatpush1.bf16.msra.mxu0 0
        %542 = vmatprep.subr.bf16.mxu0 0
        %543 = vmatpush1.bf16.msra.mxu0 0
        %544 = vmatprep.subr.bf16.mxu0 0
        %545 = vmatpush1.bf16.msra.mxu0 0
        %546 = vmatprep.subr.bf16.mxu0 0
        %547 = vmatpush1.bf16.msra.mxu0 0
        %548 = vmatprep.subr.bf16.mxu0 0
        %549 = vmatpush1.bf16.msra.mxu0 0
        %550 = vmatprep.subr.bf16.mxu0 0
        %551 = vmatpush1.bf16.msra.mxu0 0
        %552 = vmatprep.subr.bf16.mxu0 0
        %553 = vmatpush1.bf16.msra.mxu0 0
        %554 = vmatprep.subr.bf16.mxu0 0
        %555 = vmatpush1.bf16.msra.mxu0 0
        %556 = vmatprep.subr.bf16.mxu0 0
        %557 = vmatpush1.bf16.msra.mxu0 0
        %558 = vmatprep.subr.bf16.mxu0 0
        %559 = vmatpush1.bf16.msra.mxu0 0
        %560 = vmatprep.mubr.bf16.mxu0 0
        %561 = vmatmul.mubr.bf16.gmra.mrb[0].mxu0 %v505
        %v562 = vpop.f32.mrb[0].mxu0
        %v563 = vadd.f32 0.0, %v562
        %v564 = vpop.f32.mrb[0].mxu0
        %v565 = vpop.f32.mrb[0].mxu0
        %v566 = vadd.f32 0.0, %v565
        %v567 = vpop.f32.mrb[0].mxu0
        %568 = vmatprep.mubr.bf16.mxu0 0
        %569 = vmatmul.mubr.bf16.gmra.mrb[0].mxu0 %v508
        %v570 = vpop.f32.mrb[0].mxu0
        %v571 = vadd.f32 0.0, %v570
        %v572 = vpop.f32.mrb[0].mxu0
        %v573 = vpop.f32.mrb[0].mxu0
        %v574 = vadd.f32 0.0, %v573
        %v575 = vpop.f32.mrb[0].mxu0
        %576 = vmatprep.mubr.bf16.mxu0 0
        %577 = vmatmul.mubr.bf16.gmra.mrb[0].mxu0 %v511
        %v578 = vpop.f32.mrb[0].mxu0
        %v579 = vadd.f32 0.0, %v578
        %v580 = vpop.f32.mrb[0].mxu0
        %v581 = vpop.f32.mrb[0].mxu0
        %v582 = vadd.f32 0.0, %v581
        %v583 = vpop.f32.mrb[0].mxu0
        %584 = vmatprep.mubr.bf16.mxu0 0
        %585 = vmatmul.mubr.bf16.gmra.mrb[0].mxu0 %v514
        %v586 = vpop.f32.mrb[0].mxu0
        %v587 = vadd.f32 0.0, %v586
        %v588 = vpop.f32.mrb[0].mxu0
        %v589 = vpop.f32.mrb[0].mxu0
        %v590 = vadd.f32 0.0, %v589
        %v591 = vpop.f32.mrb[0].mxu0
        %592 = vmatprep.mubr.bf16.mxu0 0
        %593 = vmatmul.mubr.bf16.gmra.mrb[0].mxu0 %v517
        %v594 = vpop.f32.mrb[0].mxu0
        %v595 = vadd.f32 0.0, %v594
        %v596 = vpop.f32.mrb[0].mxu0
        %v597 = vpop.f32.mrb[0].mxu0
        %v598 = vadd.f32 0.0, %v597
        %v599 = vpop.f32.mrb[0].mxu0
        %600 = vmatprep.mubr.bf16.mxu0 0
        %601 = vmatmul.mubr.bf16.gmra.mrb[0].mxu0 %v520
        %v602 = vpop.f32.mrb[0].mxu0
        %v603 = vadd.f32 0.0, %v602
        %v604 = vpop.f32.mrb[0].mxu0
        %v605 = vpop.f32.mrb[0].mxu0
        %v606 = vadd.f32 0.0, %v605
        %v607 = vpop.f32.mrb[0].mxu0
        %608 = vmatprep.mubr.bf16.mxu0 0
        %609 = vmatmul.mubr.bf16.gmra.mrb[0].mxu0 %v523
        %v610 = vpop.f32.mrb[0].mxu0
        %v611 = vadd.f32 0.0, %v610
        %v612 = vpop.f32.mrb[0].mxu0
        %v613 = vpop.f32.mrb[0].mxu0
        %v614 = vadd.f32 0.0, %v613
        %v615 = vpop.f32.mrb[0].mxu0
        %616 = vmatprep.mubr.bf16.mxu0 0
        %617 = vmatmul.mubr.bf16.gmra.mrb[0].mxu0 %v526
        %v618 = vpop.f32.mrb[0].mxu0
        %v619 = vadd.f32 0.0, %v618
        %v620 = vpop.f32.mrb[0].mxu0
        %v621 = vpop.f32.mrb[0].mxu0
        %v622 = vadd.f32 0.0, %v621
        %v623 = vpop.f32.mrb[0].mxu0
        %624 = vdwg.mxu0
        %v625 = vld [vmem:[%s3] sm:$0x1]
        %v627 = vlaneseq
        %v628 = vshrl.u32 %v627, 7
        %v629 = vsub.s32 0, %v628
        %v630 = vrot.slane %v625, %v629
        %v632 = vmul.f32 %v563, %v630
        %v633 = vmul.f32 %v566, %v630
        %v634 = vmul.f32 %v571, %v630
        %v635 = vmul.f32 %v574, %v630
        %v636 = vmul.f32 %v579, %v630
        %v637 = vmul.f32 %v582, %v630
        %v638 = vmul.f32 %v587, %v630
        %v639 = vmul.f32 %v590, %v630
        %v640 = vmul.f32 %v595, %v630
        %v641 = vmul.f32 %v598, %v630
        %v642 = vmul.f32 %v603, %v630
        %v643 = vmul.f32 %v606, %v630
        %v644 = vmul.f32 %v611, %v630
        %v645 = vmul.f32 %v614, %v630
        %v646 = vmul.f32 %v619, %v630
        %v647 = vmul.f32 %v622, %v630
        %v648 = vld [vmem:[%s4] sm:$0x1]
        %v650 = vlaneseq
        %v651 = vshrl.u32 %v650, 7
        %v652 = vsub.s32 0, %v651
        %v653 = vrot.slane %v648, %v652
        %v655 = vadd.f32 %v632, %v653
        %v656 = vadd.f32 %v633, %v653
        %v657 = vadd.f32 %v634, %v653
        %v658 = vadd.f32 %v635, %v653
        %v659 = vadd.f32 %v636, %v653
        %v660 = vadd.f32 %v637, %v653
        %v661 = vadd.f32 %v638, %v653
        %v662 = vadd.f32 %v639, %v653
        %v663 = vadd.f32 %v640, %v653
        %v664 = vadd.f32 %v641, %v653
        %v665 = vadd.f32 %v642, %v653
        %v666 = vadd.f32 %v643, %v653
        %v667 = vadd.f32 %v644, %v653
        %v668 = vadd.f32 %v645, %v653
        %v669 = vadd.f32 %v646, %v653
        %v670 = vadd.f32 %v647, %v653
        %v671 = vmax.f32 %v655, 0.0
        %v672 = vmax.f32 %v656, 0.0
        %v673 = vmax.f32 %v657, 0.0
        %v674 = vmax.f32 %v658, 0.0
        %v675 = vmax.f32 %v659, 0.0
        %v676 = vmax.f32 %v660, 0.0
        %v677 = vmax.f32 %v661, 0.0
        %v678 = vmax.f32 %v662, 0.0
        %v679 = vmax.f32 %v663, 0.0
        %v680 = vmax.f32 %v664, 0.0
        %v681 = vmax.f32 %v665, 0.0
        %v682 = vmax.f32 %v666, 0.0
        %v683 = vmax.f32 %v667, 0.0
        %v684 = vmax.f32 %v668, 0.0
        %v685 = vmax.f32 %v669, 0.0
        %v686 = vmax.f32 %v670, 0.0
        %v687 = vpack.c.bf16 %v672, %v671
        %v688 = vpack.c.bf16 %v674, %v673
        %v689 = vpack.c.bf16 %v676, %v675
        %v690 = vpack.c.bf16 %v678, %v677
        %v691 = vpack.c.bf16 %v680, %v679
        %v692 = vpack.c.bf16 %v682, %v681
        %v693 = vpack.c.bf16 %v684, %v683
        %v694 = vpack.c.bf16 %v686, %v685
        %s695 = scalar_lea.vmem [#allocation2], 8
        %vm696 = vcmask 31744
        %697 = vst.msk [vmem:[%s695] sm:$0xff] %vm696, %v687
        %698 = vst.msk [vmem:[%s695 + $0x8] sm:$0xff] %vm696, %v688
        %699 = vst.msk [vmem:[%s695 + $0x10] sm:$0xff] %vm696, %v689
        %700 = vst.msk [vmem:[%s695 + $0x18] sm:$0xff] %vm696, %v690
        %701 = vst.msk [vmem:[%s695 + $0x20] sm:$0xff] %vm696, %v691
        %702 = vst.msk [vmem:[%s695 + $0x28] sm:$0xff] %vm696, %v692
        %703 = vst.msk [vmem:[%s695 + $0x30] sm:$0xff] %vm696, %v693
        %704 = vst.msk [vmem:[%s695 + $0x38] sm:$0xff] %vm696, %v694
        %v705 = vld [vmem:[%s424] sm:$0xff]
        %v706 = vld [vmem:[%s424 + $0x8] sm:$0xff]
        %v707 = vld [vmem:[%s424 + $0x10] sm:$0xff]
        %v708 = vld [vmem:[%s424 + $0x18] sm:$0xff]
        %v709 = vpack.c.bf16 %v706, %v705
        %v710 = vpack.c.bf16 %v708, %v707
        %v711 = vld [vmem:[%s2] sm:$0xf]
        %v712 = vld [vmem:[%s2 + $0x4] sm:$0xf]
        %v715 = vunpack.c.l.b16 %v711
        %v716 = vunpack.c.l.b16 %v712
        %v717 = vpack.c.b16 %v716, %v715
        %v720 = vsel %vm503, %v709, 0
        %v723 = vsel %vm503, %v710, 0
        %725 = vmatprep.subr.bf16.mxu0 0
        %726 = vmatpush1.bf16.msra.mxu0 %v717
        %727 = vmatprep.subr.bf16.mxu0 0
        %728 = vmatpush1.bf16.msra.mxu0 0
        %729 = vmatprep.subr.bf16.mxu0 0
        %730 = vmatpush1.bf16.msra.mxu0 0
        %731 = vmatprep.subr.bf16.mxu0 0
        %732 = vmatpush1.bf16.msra.mxu0 0
        %733 = vmatprep.subr.bf16.mxu0 0
        %734 = vmatpush1.bf16.msra.mxu0 0
        %735 = vmatprep.subr.bf16.mxu0 0
        %736 = vmatpush1.bf16.msra.mxu0 0
        %737 = vmatprep.subr.bf16.mxu0 0
        %738 = vmatpush1.bf16.msra.mxu0 0
        %739 = vmatprep.subr.bf16.mxu0 0
        %740 = vmatpush1.bf16.msra.mxu0 0
        %741 = vmatprep.subr.bf16.mxu0 0
        %742 = vmatpush1.bf16.msra.mxu0 0
        %743 = vmatprep.subr.bf16.mxu0 0
        %744 = vmatpush1.bf16.msra.mxu0 0
        %745 = vmatprep.subr.bf16.mxu0 0
        %746 = vmatpush1.bf16.msra.mxu0 0
        %747 = vmatprep.subr.bf16.mxu0 0
        %748 = vmatpush1.bf16.msra.mxu0 0
        %749 = vmatprep.subr.bf16.mxu0 0
        %750 = vmatpush1.bf16.msra.mxu0 0
        %751 = vmatprep.subr.bf16.mxu0 0
        %752 = vmatpush1.bf16.msra.mxu0 0
        %753 = vmatprep.subr.bf16.mxu0 0
        %754 = vmatpush1.bf16.msra.mxu0 0
        %755 = vmatprep.subr.bf16.mxu0 0
        %756 = vmatpush1.bf16.msra.mxu0 0
        %757 = vmatprep.mubr.bf16.mxu0 0
        %758 = vmatmul.mubr.bf16.gmra.mrb[0].mxu0 %v720
        %v759 = vpop.f32.mrb[0].mxu0
        %v760 = vadd.f32 0.0, %v759
        %v761 = vpop.f32.mrb[0].mxu0
        %v762 = vpop.f32.mrb[0].mxu0
        %v763 = vadd.f32 0.0, %v762
        %v764 = vpop.f32.mrb[0].mxu0
        %765 = vmatprep.mubr.bf16.mxu0 0
        %766 = vmatmul.mubr.bf16.gmra.mrb[0].mxu0 %v723
        %v767 = vpop.f32.mrb[0].mxu0
        %v768 = vadd.f32 0.0, %v767
        %v769 = vpop.f32.mrb[0].mxu0
        %v770 = vpop.f32.mrb[0].mxu0
        %v771 = vadd.f32 0.0, %v770
        %v772 = vpop.f32.mrb[0].mxu0
        %773 = vdwg.mxu0
        %v774 = vld [vmem:[%s3] sm:$0x1]
        %v776 = vlaneseq
        %v777 = vshrl.u32 %v776, 7
        %v778 = vsub.s32 0, %v777
        %v779 = vrot.slane %v774, %v778
        %v781 = vmul.f32 %v760, %v779
        %v782 = vmul.f32 %v763, %v779
        %v783 = vmul.f32 %v768, %v779
        %v784 = vmul.f32 %v771, %v779
        %v785 = vld [vmem:[%s4] sm:$0x1]
        %v787 = vlaneseq
        %v788 = vshrl.u32 %v787, 7
        %v789 = vsub.s32 0, %v788
        %v790 = vrot.slane %v785, %v789
        %v792 = vadd.f32 %v781, %v790
        %v793 = vadd.f32 %v782, %v790
        %v794 = vadd.f32 %v783, %v790
        %v795 = vadd.f32 %v784, %v790
        %v796 = vmax.f32 %v792, 0.0
        %v797 = vmax.f32 %v793, 0.0
        %v798 = vmax.f32 %v794, 0.0
        %v799 = vmax.f32 %v795, 0.0
        %p800 = scmp.gt.s32.totalorder %s36, 0
        %s801 = scalar_select %p800, 1, 0
        %s802 = scvt.s32.f32 %s801
        %p803 = scmp.lt.s32.totalorder %s36, 1
        %s804 = scalar_select %p803, 1, 0
        %s805 = scvt.s32.f32 %s804
        %v806 = vstv %s802
        %v807 = vmul.f32 %v796, %v806
        %v808 = vmul.f32 %v797, %v806
        %v809 = vpack.c.bf16 %v808, %v807
        %810 = vst.msk [vmem:[#allocation2] sm:$0xff] %vm696, %v809
        %v811 = vstv %s805
        %v812 = vmul.f32 %v798, %v811
        %v813 = vmul.f32 %v799, %v811
        %v814 = vpack.c.bf16 %v813, %v812
        %s815 = scalar_lea.vmem [#allocation2], 72
        %816 = vst.msk [vmem:[%s815] sm:$0xff] %vm696, %v814
        %v817 = vld [vmem:[#allocation2] sm:$0xff]
        %v818 = vld [vmem:[#allocation2 + $0x8] sm:$0xff]
        %v819 = vld [vmem:[#allocation2 + $0x10] sm:$0xff]
        %v820 = vld [vmem:[#allocation2 + $0x18] sm:$0xff]
        %v821 = vld [vmem:[#allocation2 + $0x20] sm:$0xff]
        %v822 = vld [vmem:[#allocation2 + $0x28] sm:$0xff]
        %v823 = vld [vmem:[#allocation2 + $0x30] sm:$0xff]
        %v824 = vld [vmem:[#allocation2 + $0x38] sm:$0xff]
        %v825 = vld [vmem:[#allocation2 + $0x40] sm:$0xff]
        %v826 = vld [vmem:[#allocation2 + $0x48] sm:$0xff]
        %v828 = vshrl.u32 %v817, 16
        %v830 = vrot.slane %v828, 7
        %v831 = vshll.u32 %v817, 16
        %v833 = vor.u32 %v830, %v831
        %v835 = vshrl.u32 %v818, 16
        %v837 = vrot.slane %v835, 7
        %v838 = vshll.u32 %v818, 16
        %v840 = vor.u32 %v837, %v838
        %v842 = vshrl.u32 %v819, 16
        %v844 = vrot.slane %v842, 7
        %v845 = vshll.u32 %v819, 16
        %v847 = vor.u32 %v844, %v845
        %v849 = vshrl.u32 %v820, 16
        %v851 = vrot.slane %v849, 7
        %v852 = vshll.u32 %v820, 16
        %v854 = vor.u32 %v851, %v852
        %v856 = vshrl.u32 %v821, 16
        %v858 = vrot.slane %v856, 7
        %v859 = vshll.u32 %v821, 16
        %v861 = vor.u32 %v858, %v859
        %v863 = vshrl.u32 %v822, 16
        %v865 = vrot.slane %v863, 7
        %v866 = vshll.u32 %v822, 16
        %v868 = vor.u32 %v865, %v866
        %v870 = vshrl.u32 %v823, 16
        %v872 = vrot.slane %v870, 7
        %v873 = vshll.u32 %v823, 16
        %v875 = vor.u32 %v872, %v873
        %v877 = vshrl.u32 %v824, 16
        %v879 = vrot.slane %v877, 7
        %v880 = vshll.u32 %v824, 16
        %v882 = vor.u32 %v879, %v880
        %v884 = vshrl.u32 %v825, 16
        %v886 = vrot.slane %v884, 7
        %v887 = vshll.u32 %v825, 16
        %v889 = vor.u32 %v886, %v887
        %v891 = vshrl.u32 %v826, 16
        %v893 = vrot.slane %v891, 7
        %v894 = vshll.u32 %v826, 16
        %v896 = vor.u32 %v893, %v894
        %vm907 = vcmask 1040384
        %vm908 = vsmask.f32 256
        %vm909 = vmand %vm907, %vm908
        %v910 = vsel %vm909, 0, %v833
        %v911 = vsel %vm909, 0, %v840
        %v912 = vsel %vm909, 0, %v847
        %v913 = vsel %vm909, 0, %v854
        %v914 = vsel %vm909, 0, %v861
        %v915 = vsel %vm909, 0, %v868
        %v916 = vsel %vm909, 0, %v875
        %v917 = vsel %vm909, 0, %v882
        %v918 = vsel %vm909, 0, %v889
        %v919 = vsel %vm909, 0, %v896
        %v920 = vrot.slane %v831, 1
        %v921 = vor.u32 %v828, %v920
        %v922 = vrot.slane %v838, 1
        %v923 = vor.u32 %v835, %v922
        %v924 = vrot.slane %v845, 1
        %v925 = vor.u32 %v842, %v924
        %v926 = vrot.slane %v852, 1
        %v927 = vor.u32 %v849, %v926
        %v928 = vrot.slane %v859, 1
        %v929 = vor.u32 %v856, %v928
        %v930 = vrot.slane %v866, 1
        %v931 = vor.u32 %v863, %v930
        %v932 = vrot.slane %v873, 1
        %v933 = vor.u32 %v870, %v932
        %v934 = vrot.slane %v880, 1
        %v935 = vor.u32 %v877, %v934
        %v936 = vrot.slane %v887, 1
        %v937 = vor.u32 %v884, %v936
        %v938 = vrot.slane %v894, 1
        %v939 = vor.u32 %v891, %v938
        %vm950 = vcmask 1047552
        %vm951 = vsmask.f32 7424
        %vm952 = vmand %vm950, %vm951
        %v953 = vsel %vm952, %v921, 0
        %v954 = vsel %vm952, %v923, 0
        %v955 = vsel %vm952, %v925, 0
        %v956 = vsel %vm952, %v927, 0
        %v957 = vsel %vm952, %v929, 0
        %v958 = vsel %vm952, %v931, 0
        %v959 = vsel %vm952, %v933, 0
        %v960 = vsel %vm952, %v935, 0
        %v961 = vsel %vm952, %v937, 0
        %v962 = vsel %vm952, %v939, 0
        %v963 = vld [vmem:[%s5] sm:$0x3]
        %s964 = scalar_lea.vmem %s5, 2
        %v965 = vld [vmem:[%s964] sm:$0x3]
        %v966 = vsel %vm696, %v817, 0
        %v968 = vsel %vm696, %v818, 0
        %v970 = vsel %vm696, %v819, 0
        %v972 = vsel %vm696, %v820, 0
        %v974 = vsel %vm696, %v821, 0
        %v976 = vsel %vm696, %v822, 0
        %v978 = vsel %vm696, %v823, 0
        %v980 = vsel %vm696, %v824, 0
        %vm982 = vcmask 1041408
        %v984 = vsel %vm982, %v965, 0
        %986 = vmatprep.subr.bf16.mxu0 0
        %987 = vmatpush1.bf16.msra.mxu0 %v984
        %988 = vmatprep.subr.bf16.mxu0 0
        %989 = vmatpush1.bf16.msra.mxu0 0
        %990 = vmatprep.subr.bf16.mxu0 0
        %991 = vmatpush1.bf16.msra.mxu0 0
        %992 = vmatprep.subr.bf16.mxu0 0
        %993 = vmatpush1.bf16.msra.mxu0 0
        %994 = vmatprep.subr.bf16.mxu0 0
        %995 = vmatpush1.bf16.msra.mxu0 0
        %996 = vmatprep.subr.bf16.mxu0 0
        %997 = vmatpush1.bf16.msra.mxu0 0
        %998 = vmatprep.subr.bf16.mxu0 0
        %999 = vmatpush1.bf16.msra.mxu0 0
        %1000 = vmatprep.subr.bf16.mxu0 0
        %1001 = vmatpush1.bf16.msra.mxu0 0
        %1002 = vmatprep.subr.bf16.mxu0 0
        %1003 = vmatpush1.bf16.msra.mxu0 0
        %1004 = vmatprep.subr.bf16.mxu0 0
        %1005 = vmatpush1.bf16.msra.mxu0 0
        %1006 = vmatprep.subr.bf16.mxu0 0
        %1007 = vmatpush1.bf16.msra.mxu0 0
        %1008 = vmatprep.subr.bf16.mxu0 0
        %1009 = vmatpush1.bf16.msra.mxu0 0
        %1010 = vmatprep.subr.bf16.mxu0 0
        %1011 = vmatpush1.bf16.msra.mxu0 0
        %1012 = vmatprep.subr.bf16.mxu0 0
        %1013 = vmatpush1.bf16.msra.mxu0 0
        %1014 = vmatprep.subr.bf16.mxu0 0
        %1015 = vmatpush1.bf16.msra.mxu0 0
        %1016 = vmatprep.subr.bf16.mxu0 0
        %1017 = vmatpush1.bf16.msra.mxu0 0
        %1018 = vmatprep.mubr.bf16.mxu0 0
        %1019 = vmatmul.mubr.bf16.gmra.mrb[0].mxu0 %v966
        %v1020 = vpop.f32.mrb[0].mxu0
        %v1021 = vadd.f32 0.0, %v1020
        %v1022 = vpop.f32.mrb[0].mxu0
        %v1023 = vpop.f32.mrb[0].mxu0
        %v1024 = vadd.f32 0.0, %v1023
        %v1025 = vpop.f32.mrb[0].mxu0
        %1026 = vmatprep.mubr.bf16.mxu0 0
        %1027 = vmatmul.mubr.bf16.gmra.mrb[0].mxu0 %v968
        %v1028 = vpop.f32.mrb[0].mxu0
        %v1029 = vadd.f32 0.0, %v1028
        %v1030 = vpop.f32.mrb[0].mxu0
        %v1031 = vpop.f32.mrb[0].mxu0
        %v1032 = vadd.f32 0.0, %v1031
        %v1033 = vpop.f32.mrb[0].mxu0
        %1034 = vmatprep.mubr.bf16.mxu0 0
        %1035 = vmatmul.mubr.bf16.gmra.mrb[0].mxu0 %v970
        %v1036 = vpop.f32.mrb[0].mxu0
        %v1037 = vadd.f32 0.0, %v1036
        %v1038 = vpop.f32.mrb[0].mxu0
        %v1039 = vpop.f32.mrb[0].mxu0
        %v1040 = vadd.f32 0.0, %v1039
        %v1041 = vpop.f32.mrb[0].mxu0
        %1042 = vmatprep.mubr.bf16.mxu0 0
        %1043 = vmatmul.mubr.bf16.gmra.mrb[0].mxu0 %v972
        %v1044 = vpop.f32.mrb[0].mxu0
        %v1045 = vadd.f32 0.0, %v1044
        %v1046 = vpop.f32.mrb[0].mxu0
        %v1047 = vpop.f32.mrb[0].mxu0
        %v1048 = vadd.f32 0.0, %v1047
        %v1049 = vpop.f32.mrb[0].mxu0
        %1050 = vmatprep.mubr.bf16.mxu0 0
        %1051 = vmatmul.mubr.bf16.gmra.mrb[0].mxu0 %v974
        %v1052 = vpop.f32.mrb[0].mxu0
        %v1053 = vadd.f32 0.0, %v1052
        %v1054 = vpop.f32.mrb[0].mxu0
        %v1055 = vpop.f32.mrb[0].mxu0
        %v1056 = vadd.f32 0.0, %v1055
        %v1057 = vpop.f32.mrb[0].mxu0
        %1058 = vmatprep.mubr.bf16.mxu0 0
        %1059 = vmatmul.mubr.bf16.gmra.mrb[0].mxu0 %v976
        %v1060 = vpop.f32.mrb[0].mxu0
        %v1061 = vadd.f32 0.0, %v1060
        %v1062 = vpop.f32.mrb[0].mxu0
        %v1063 = vpop.f32.mrb[0].mxu0
        %v1064 = vadd.f32 0.0, %v1063
        %v1065 = vpop.f32.mrb[0].mxu0
        %1066 = vmatprep.mubr.bf16.mxu0 0
        %1067 = vmatmul.mubr.bf16.gmra.mrb[0].mxu0 %v978
        %v1068 = vpop.f32.mrb[0].mxu0
        %v1069 = vadd.f32 0.0, %v1068
        %v1070 = vpop.f32.mrb[0].mxu0
        %v1071 = vpop.f32.mrb[0].mxu0
        %v1072 = vadd.f32 0.0, %v1071
        %v1073 = vpop.f32.mrb[0].mxu0
        %1074 = vmatprep.mubr.bf16.mxu0 0
        %1075 = vmatmul.mubr.bf16.gmra.mrb[0].mxu0 %v980
        %v1076 = vpop.f32.mrb[0].mxu0
        %v1077 = vadd.f32 0.0, %v1076
        %v1078 = vpop.f32.mrb[0].mxu0
        %v1079 = vpop.f32.mrb[0].mxu0
        %v1080 = vadd.f32 0.0, %v1079
        %v1081 = vpop.f32.mrb[0].mxu0
        %1082 = vdwg.mxu0
        %v1084 = vsel %vm696, %v910, 0
        %v1087 = vsel %vm696, %v911, 0
        %v1090 = vsel %vm696, %v912, 0
        %v1093 = vsel %vm696, %v913, 0
        %v1096 = vsel %vm696, %v914, 0
        %v1099 = vsel %vm696, %v915, 0
        %v1102 = vsel %vm696, %v916, 0
        %v1105 = vsel %vm696, %v917, 0
        %v1108 = vsel %vm982, %v963, 0
        %1110 = vmatprep.subr.bf16.mxu0 0
        %1111 = vmatpush1.bf16.msra.mxu0 %v1108
        %1112 = vmatprep.subr.bf16.mxu0 0
        %1113 = vmatpush1.bf16.msra.mxu0 0
        %1114 = vmatprep.subr.bf16.mxu0 0
        %1115 = vmatpush1.bf16.msra.mxu0 0
        %1116 = vmatprep.subr.bf16.mxu0 0
        %1117 = vmatpush1.bf16.msra.mxu0 0
        %1118 = vmatprep.subr.bf16.mxu0 0
        %1119 = vmatpush1.bf16.msra.mxu0 0
        %1120 = vmatprep.subr.bf16.mxu0 0
        %1121 = vmatpush1.bf16.msra.mxu0 0
        %1122 = vmatprep.subr.bf16.mxu0 0
        %1123 = vmatpush1.bf16.msra.mxu0 0
        %1124 = vmatprep.subr.bf16.mxu0 0
        %1125 = vmatpush1.bf16.msra.mxu0 0
        %1126 = vmatprep.subr.bf16.mxu0 0
        %1127 = vmatpush1.bf16.msra.mxu0 0
        %1128 = vmatprep.subr.bf16.mxu0 0
        %1129 = vmatpush1.bf16.msra.mxu0 0
        %1130 = vmatprep.subr.bf16.mxu0 0
        %1131 = vmatpush1.bf16.msra.mxu0 0
        %1132 = vmatprep.subr.bf16.mxu0 0
        %1133 = vmatpush1.bf16.msra.mxu0 0
        %1134 = vmatprep.subr.bf16.mxu0 0
        %1135 = vmatpush1.bf16.msra.mxu0 0
        %1136 = vmatprep.subr.bf16.mxu0 0
        %1137 = vmatpush1.bf16.msra.mxu0 0
        %1138 = vmatprep.subr.bf16.mxu0 0
        %1139 = vmatpush1.bf16.msra.mxu0 0
        %1140 = vmatprep.subr.bf16.mxu0 0
        %1141 = vmatpush1.bf16.msra.mxu0 0
        %1142 = vmatprep.mubr.bf16.mxu0 0
        %1143 = vmatmul.mubr.bf16.gmra.mrb[0].mxu0 %v1084
        %v1144 = vpop.f32.mrb[0].mxu0
        %v1145 = vadd.f32 %v1021, %v1144
        %v1146 = vpop.f32.mrb[0].mxu0
        %v1147 = vpop.f32.mrb[0].mxu0
        %v1148 = vadd.f32 %v1024, %v1147
        %v1149 = vpop.f32.mrb[0].mxu0
        %1150 = vmatprep.mubr.bf16.mxu0 0
        %1151 = vmatmul.mubr.bf16.gmra.mrb[0].mxu0 %v1087
        %v1152 = vpop.f32.mrb[0].mxu0
        %v1153 = vadd.f32 %v1029, %v1152
        %v1154 = vpop.f32.mrb[0].mxu0
        %v1155 = vpop.f32.mrb[0].mxu0
        %v1156 = vadd.f32 %v1032, %v1155
        %v1157 = vpop.f32.mrb[0].mxu0
        %1158 = vmatprep.mubr.bf16.mxu0 0
        %1159 = vmatmul.mubr.bf16.gmra.mrb[0].mxu0 %v1090
        %v1160 = vpop.f32.mrb[0].mxu0
        %v1161 = vadd.f32 %v1037, %v1160
        %v1162 = vpop.f32.mrb[0].mxu0
        %v1163 = vpop.f32.mrb[0].mxu0
        %v1164 = vadd.f32 %v1040, %v1163
        %v1165 = vpop.f32.mrb[0].mxu0
        %1166 = vmatprep.mubr.bf16.mxu0 0
        %1167 = vmatmul.mubr.bf16.gmra.mrb[0].mxu0 %v1093
        %v1168 = vpop.f32.mrb[0].mxu0
        %v1169 = vadd.f32 %v1045, %v1168
        %v1170 = vpop.f32.mrb[0].mxu0
        %v1171 = vpop.f32.mrb[0].mxu0
        %v1172 = vadd.f32 %v1048, %v1171
        %v1173 = vpop.f32.mrb[0].mxu0
        %1174 = vmatprep.mubr.bf16.mxu0 0
        %1175 = vmatmul.mubr.bf16.gmra.mrb[0].mxu0 %v1096
        %v1176 = vpop.f32.mrb[0].mxu0
        %v1177 = vadd.f32 %v1053, %v1176
        %v1178 = vpop.f32.mrb[0].mxu0
        %v1179 = vpop.f32.mrb[0].mxu0
        %v1180 = vadd.f32 %v1056, %v1179
        %v1181 = vpop.f32.mrb[0].mxu0
        %1182 = vmatprep.mubr.bf16.mxu0 0
        %1183 = vmatmul.mubr.bf16.gmra.mrb[0].mxu0 %v1099
        %v1184 = vpop.f32.mrb[0].mxu0
        %v1185 = vadd.f32 %v1061, %v1184
        %v1186 = vpop.f32.mrb[0].mxu0
        %v1187 = vpop.f32.mrb[0].mxu0
        %v1188 = vadd.f32 %v1064, %v1187
        %v1189 = vpop.f32.mrb[0].mxu0
        %1190 = vmatprep.mubr.bf16.mxu0 0
        %1191 = vmatmul.mubr.bf16.gmra.mrb[0].mxu0 %v1102
        %v1192 = vpop.f32.mrb[0].mxu0
        %v1193 = vadd.f32 %v1069, %v1192
        %v1194 = vpop.f32.mrb[0].mxu0
        %v1195 = vpop.f32.mrb[0].mxu0
        %v1196 = vadd.f32 %v1072, %v1195
        %v1197 = vpop.f32.mrb[0].mxu0
        %1198 = vmatprep.mubr.bf16.mxu0 0
        %1199 = vmatmul.mubr.bf16.gmra.mrb[0].mxu0 %v1105
        %v1200 = vpop.f32.mrb[0].mxu0
        %v1201 = vadd.f32 %v1077, %v1200
        %v1202 = vpop.f32.mrb[0].mxu0
        %v1203 = vpop.f32.mrb[0].mxu0
        %v1204 = vadd.f32 %v1080, %v1203
        %v1205 = vpop.f32.mrb[0].mxu0
        %1206 = vdwg.mxu0
        %s1207 = scalar_lea.vmem %s5, 4
        %v1208 = vld [vmem:[%s1207] sm:$0x3]
        %v1210 = vsel %vm696, %v953, 0
        %v1213 = vsel %vm696, %v954, 0
        %v1216 = vsel %vm696, %v955, 0
        %v1219 = vsel %vm696, %v956, 0
        %v1222 = vsel %vm696, %v957, 0
        %v1225 = vsel %vm696, %v958, 0
        %v1228 = vsel %vm696, %v959, 0
        %v1231 = vsel %vm696, %v960, 0
        %v1234 = vsel %vm982, %v1208, 0
        %1236 = vmatprep.subr.bf16.mxu0 0
        %1237 = vmatpush1.bf16.msra.mxu0 %v1234
        %1238 = vmatprep.subr.bf16.mxu0 0
        %1239 = vmatpush1.bf16.msra.mxu0 0
        %1240 = vmatprep.subr.bf16.mxu0 0
        %1241 = vmatpush1.bf16.msra.mxu0 0
        %1242 = vmatprep.subr.bf16.mxu0 0
        %1243 = vmatpush1.bf16.msra.mxu0 0
        %1244 = vmatprep.subr.bf16.mxu0 0
        %1245 = vmatpush1.bf16.msra.mxu0 0
        %1246 = vmatprep.subr.bf16.mxu0 0
        %1247 = vmatpush1.bf16.msra.mxu0 0
        %1248 = vmatprep.subr.bf16.mxu0 0
        %1249 = vmatpush1.bf16.msra.mxu0 0
        %1250 = vmatprep.subr.bf16.mxu0 0
        %1251 = vmatpush1.bf16.msra.mxu0 0
        %1252 = vmatprep.subr.bf16.mxu0 0
        %1253 = vmatpush1.bf16.msra.mxu0 0
        %1254 = vmatprep.subr.bf16.mxu0 0
        %1255 = vmatpush1.bf16.msra.mxu0 0
        %1256 = vmatprep.subr.bf16.mxu0 0
        %1257 = vmatpush1.bf16.msra.mxu0 0
        %1258 = vmatprep.subr.bf16.mxu0 0
        %1259 = vmatpush1.bf16.msra.mxu0 0
        %1260 = vmatprep.subr.bf16.mxu0 0
        %1261 = vmatpush1.bf16.msra.mxu0 0
        %1262 = vmatprep.subr.bf16.mxu0 0
        %1263 = vmatpush1.bf16.msra.mxu0 0
        %1264 = vmatprep.subr.bf16.mxu0 0
        %1265 = vmatpush1.bf16.msra.mxu0 0
        %1266 = vmatprep.subr.bf16.mxu0 0
        %1267 = vmatpush1.bf16.msra.mxu0 0
        %1268 = vmatprep.mubr.bf16.mxu0 0
        %1269 = vmatmul.mubr.bf16.gmra.mrb[0].mxu0 %v1210
        %v1270 = vpop.f32.mrb[0].mxu0
        %v1271 = vadd.f32 0.0, %v1270
        %v1272 = vpop.f32.mrb[0].mxu0
        %v1273 = vpop.f32.mrb[0].mxu0
        %v1274 = vadd.f32 0.0, %v1273
        %v1275 = vpop.f32.mrb[0].mxu0
        %1276 = vmatprep.mubr.bf16.mxu0 0
        %1277 = vmatmul.mubr.bf16.gmra.mrb[0].mxu0 %v1213
        %v1278 = vpop.f32.mrb[0].mxu0
        %v1279 = vadd.f32 0.0, %v1278
        %v1280 = vpop.f32.mrb[0].mxu0
        %v1281 = vpop.f32.mrb[0].mxu0
        %v1282 = vadd.f32 0.0, %v1281
        %v1283 = vpop.f32.mrb[0].mxu0
        %1284 = vmatprep.mubr.bf16.mxu0 0
        %1285 = vmatmul.mubr.bf16.gmra.mrb[0].mxu0 %v1216
        %v1286 = vpop.f32.mrb[0].mxu0
        %v1287 = vadd.f32 0.0, %v1286
        %v1288 = vpop.f32.mrb[0].mxu0
        %v1289 = vpop.f32.mrb[0].mxu0
        %v1290 = vadd.f32 0.0, %v1289
        %v1291 = vpop.f32.mrb[0].mxu0
        %1292 = vmatprep.mubr.bf16.mxu0 0
        %1293 = vmatmul.mubr.bf16.gmra.mrb[0].mxu0 %v1219
        %v1294 = vpop.f32.mrb[0].mxu0
        %v1295 = vadd.f32 0.0, %v1294
        %v1296 = vpop.f32.mrb[0].mxu0
        %v1297 = vpop.f32.mrb[0].mxu0
        %v1298 = vadd.f32 0.0, %v1297
        %v1299 = vpop.f32.mrb[0].mxu0
        %1300 = vmatprep.mubr.bf16.mxu0 0
        %1301 = vmatmul.mubr.bf16.gmra.mrb[0].mxu0 %v1222
        %v1302 = vpop.f32.mrb[0].mxu0
        %v1303 = vadd.f32 0.0, %v1302
        %v1304 = vpop.f32.mrb[0].mxu0
        %v1305 = vpop.f32.mrb[0].mxu0
        %v1306 = vadd.f32 0.0, %v1305
        %v1307 = vpop.f32.mrb[0].mxu0
        %1308 = vmatprep.mubr.bf16.mxu0 0
        %1309 = vmatmul.mubr.bf16.gmra.mrb[0].mxu0 %v1225
        %v1310 = vpop.f32.mrb[0].mxu0
        %v1311 = vadd.f32 0.0, %v1310
        %v1312 = vpop.f32.mrb[0].mxu0
        %v1313 = vpop.f32.mrb[0].mxu0
        %v1314 = vadd.f32 0.0, %v1313
        %v1315 = vpop.f32.mrb[0].mxu0
        %1316 = vmatprep.mubr.bf16.mxu0 0
        %1317 = vmatmul.mubr.bf16.gmra.mrb[0].mxu0 %v1228
        %v1318 = vpop.f32.mrb[0].mxu0
        %v1319 = vadd.f32 0.0, %v1318
        %v1320 = vpop.f32.mrb[0].mxu0
        %v1321 = vpop.f32.mrb[0].mxu0
        %v1322 = vadd.f32 0.0, %v1321
        %v1323 = vpop.f32.mrb[0].mxu0
        %1324 = vmatprep.mubr.bf16.mxu0 0
        %1325 = vmatmul.mubr.bf16.gmra.mrb[0].mxu0 %v1231
        %v1326 = vpop.f32.mrb[0].mxu0
        %v1327 = vadd.f32 0.0, %v1326
        %v1328 = vpop.f32.mrb[0].mxu0
        %v1329 = vpop.f32.mrb[0].mxu0
        %v1330 = vadd.f32 0.0, %v1329
        %v1331 = vpop.f32.mrb[0].mxu0
        %1332 = vdwg.mxu0
        %v1333 = vadd.f32 %v1145, %v1271
        %v1334 = vadd.f32 %v1148, %v1274
        %v1335 = vadd.f32 %v1153, %v1279
        %v1336 = vadd.f32 %v1156, %v1282
        %v1337 = vadd.f32 %v1161, %v1287
        %v1338 = vadd.f32 %v1164, %v1290
        %v1339 = vadd.f32 %v1169, %v1295
        %v1340 = vadd.f32 %v1172, %v1298
        %v1341 = vadd.f32 %v1177, %v1303
        %v1342 = vadd.f32 %v1180, %v1306
        %v1343 = vadd.f32 %v1185, %v1311
        %v1344 = vadd.f32 %v1188, %v1314
        %v1345 = vadd.f32 %v1193, %v1319
        %v1346 = vadd.f32 %v1196, %v1322
        %v1347 = vadd.f32 %v1201, %v1327
        %v1348 = vadd.f32 %v1204, %v1330
        %s1349 = scalar_lea.vmem %s5, 6
        %v1350 = vld [vmem:[%s1349] sm:$0x3]
        %v1352 = vsel %vm696, %v918, 0
        %v1355 = vsel %vm982, %v1350, 0
        %1357 = vmatprep.subr.bf16.mxu0 0
        %1358 = vmatpush1.bf16.msra.mxu0 %v1355
        %1359 = vmatprep.subr.bf16.mxu0 0
        %1360 = vmatpush1.bf16.msra.mxu0 0
        %1361 = vmatprep.subr.bf16.mxu0 0
        %1362 = vmatpush1.bf16.msra.mxu0 0
        %1363 = vmatprep.subr.bf16.mxu0 0
        %1364 = vmatpush1.bf16.msra.mxu0 0
        %1365 = vmatprep.subr.bf16.mxu0 0
        %1366 = vmatpush1.bf16.msra.mxu0 0
        %1367 = vmatprep.subr.bf16.mxu0 0
        %1368 = vmatpush1.bf16.msra.mxu0 0
        %1369 = vmatprep.subr.bf16.mxu0 0
        %1370 = vmatpush1.bf16.msra.mxu0 0
        %1371 = vmatprep.subr.bf16.mxu0 0
        %1372 = vmatpush1.bf16.msra.mxu0 0
        %1373 = vmatprep.subr.bf16.mxu0 0
        %1374 = vmatpush1.bf16.msra.mxu0 0
        %1375 = vmatprep.subr.bf16.mxu0 0
        %1376 = vmatpush1.bf16.msra.mxu0 0
        %1377 = vmatprep.subr.bf16.mxu0 0
        %1378 = vmatpush1.bf16.msra.mxu0 0
        %1379 = vmatprep.subr.bf16.mxu0 0
        %1380 = vmatpush1.bf16.msra.mxu0 0
        %1381 = vmatprep.subr.bf16.mxu0 0
        %1382 = vmatpush1.bf16.msra.mxu0 0
        %1383 = vmatprep.subr.bf16.mxu0 0
        %1384 = vmatpush1.bf16.msra.mxu0 0
        %1385 = vmatprep.subr.bf16.mxu0 0
        %1386 = vmatpush1.bf16.msra.mxu0 0
        %1387 = vmatprep.subr.bf16.mxu0 0
        %1388 = vmatpush1.bf16.msra.mxu0 0
        %1389 = vmatprep.mubr.bf16.mxu0 0
        %1390 = vmatmul.mubr.bf16.gmra.mrb[0].mxu0 %v1087
        %v1391 = vpop.f32.mrb[0].mxu0
        %v1392 = vadd.f32 0.0, %v1391
        %v1393 = vpop.f32.mrb[0].mxu0
        %v1394 = vpop.f32.mrb[0].mxu0
        %v1395 = vadd.f32 0.0, %v1394
        %v1396 = vpop.f32.mrb[0].mxu0
        %1397 = vmatprep.mubr.bf16.mxu0 0
        %1398 = vmatmul.mubr.bf16.gmra.mrb[0].mxu0 %v1090
        %v1399 = vpop.f32.mrb[0].mxu0
        %v1400 = vadd.f32 0.0, %v1399
        %v1401 = vpop.f32.mrb[0].mxu0
        %v1402 = vpop.f32.mrb[0].mxu0
        %v1403 = vadd.f32 0.0, %v1402
        %v1404 = vpop.f32.mrb[0].mxu0
        %1405 = vmatprep.mubr.bf16.mxu0 0
        %1406 = vmatmul.mubr.bf16.gmra.mrb[0].mxu0 %v1093
        %v1407 = vpop.f32.mrb[0].mxu0
        %v1408 = vadd.f32 0.0, %v1407
        %v1409 = vpop.f32.mrb[0].mxu0
        %v1410 = vpop.f32.mrb[0].mxu0
        %v1411 = vadd.f32 0.0, %v1410
        %v1412 = vpop.f32.mrb[0].mxu0
        %1413 = vmatprep.mubr.bf16.mxu0 0
        %1414 = vmatmul.mubr.bf16.gmra.mrb[0].mxu0 %v1096
        %v1415 = vpop.f32.mrb[0].mxu0
        %v1416 = vadd.f32 0.0, %v1415
        %v1417 = vpop.f32.mrb[0].mxu0
        %v1418 = vpop.f32.mrb[0].mxu0
        %v1419 = vadd.f32 0.0, %v1418
        %v1420 = vpop.f32.mrb[0].mxu0
        %1421 = vmatprep.mubr.bf16.mxu0 0
        %1422 = vmatmul.mubr.bf16.gmra.mrb[0].mxu0 %v1099
        %v1423 = vpop.f32.mrb[0].mxu0
        %v1424 = vadd.f32 0.0, %v1423
        %v1425 = vpop.f32.mrb[0].mxu0
        %v1426 = vpop.f32.mrb[0].mxu0
        %v1427 = vadd.f32 0.0, %v1426
        %v1428 = vpop.f32.mrb[0].mxu0
        %1429 = vmatprep.mubr.bf16.mxu0 0
        %1430 = vmatmul.mubr.bf16.gmra.mrb[0].mxu0 %v1102
        %v1431 = vpop.f32.mrb[0].mxu0
        %v1432 = vadd.f32 0.0, %v1431
        %v1433 = vpop.f32.mrb[0].mxu0
        %v1434 = vpop.f32.mrb[0].mxu0
        %v1435 = vadd.f32 0.0, %v1434
        %v1436 = vpop.f32.mrb[0].mxu0
        %1437 = vmatprep.mubr.bf16.mxu0 0
        %1438 = vmatmul.mubr.bf16.gmra.mrb[0].mxu0 %v1105
        %v1439 = vpop.f32.mrb[0].mxu0
        %v1440 = vadd.f32 0.0, %v1439
        %v1441 = vpop.f32.mrb[0].mxu0
        %v1442 = vpop.f32.mrb[0].mxu0
        %v1443 = vadd.f32 0.0, %v1442
        %v1444 = vpop.f32.mrb[0].mxu0
        %1445 = vmatprep.mubr.bf16.mxu0 0
        %1446 = vmatmul.mubr.bf16.gmra.mrb[0].mxu0 %v1352
        %v1447 = vpop.f32.mrb[0].mxu0
        %v1448 = vadd.f32 0.0, %v1447
        %v1449 = vpop.f32.mrb[0].mxu0
        %v1450 = vpop.f32.mrb[0].mxu0
        %v1451 = vadd.f32 0.0, %v1450
        %v1452 = vpop.f32.mrb[0].mxu0
        %1453 = vdwg.mxu0
        %v1454 = vadd.f32 %v1333, %v1392
        %v1455 = vadd.f32 %v1334, %v1395
        %v1456 = vadd.f32 %v1335, %v1400
        %v1457 = vadd.f32 %v1336, %v1403
        %v1458 = vadd.f32 %v1337, %v1408
        %v1459 = vadd.f32 %v1338, %v1411
        %v1460 = vadd.f32 %v1339, %v1416
        %v1461 = vadd.f32 %v1340, %v1419
        %v1462 = vadd.f32 %v1341, %v1424
        %v1463 = vadd.f32 %v1342, %v1427
        %v1464 = vadd.f32 %v1343, %v1432
        %v1465 = vadd.f32 %v1344, %v1435
        %v1466 = vadd.f32 %v1345, %v1440
        %v1467 = vadd.f32 %v1346, %v1443
        %v1468 = vadd.f32 %v1347, %v1448
        %v1469 = vadd.f32 %v1348, %v1451
        %s1470 = scalar_lea.vmem %s5, 8
        %v1471 = vld [vmem:[%s1470] sm:$0x3]
        %v1472 = vsel %vm696, %v825, 0
        %v1475 = vsel %vm982, %v1471, 0
        %1477 = vmatprep.subr.bf16.mxu0 0
        %1478 = vmatpush1.bf16.msra.mxu0 %v1475
        %1479 = vmatprep.subr.bf16.mxu0 0
        %1480 = vmatpush1.bf16.msra.mxu0 0
        %1481 = vmatprep.subr.bf16.mxu0 0
        %1482 = vmatpush1.bf16.msra.mxu0 0
        %1483 = vmatprep.subr.bf16.mxu0 0
        %1484 = vmatpush1.bf16.msra.mxu0 0
        %1485 = vmatprep.subr.bf16.mxu0 0
        %1486 = vmatpush1.bf16.msra.mxu0 0
        %1487 = vmatprep.subr.bf16.mxu0 0
        %1488 = vmatpush1.bf16.msra.mxu0 0
        %1489 = vmatprep.subr.bf16.mxu0 0
        %1490 = vmatpush1.bf16.msra.mxu0 0
        %1491 = vmatprep.subr.bf16.mxu0 0
        %1492 = vmatpush1.bf16.msra.mxu0 0
        %1493 = vmatprep.subr.bf16.mxu0 0
        %1494 = vmatpush1.bf16.msra.mxu0 0
        %1495 = vmatprep.subr.bf16.mxu0 0
        %1496 = vmatpush1.bf16.msra.mxu0 0
        %1497 = vmatprep.subr.bf16.mxu0 0
        %1498 = vmatpush1.bf16.msra.mxu0 0
        %1499 = vmatprep.subr.bf16.mxu0 0
        %1500 = vmatpush1.bf16.msra.mxu0 0
        %1501 = vmatprep.subr.bf16.mxu0 0
        %1502 = vmatpush1.bf16.msra.mxu0 0
        %1503 = vmatprep.subr.bf16.mxu0 0
        %1504 = vmatpush1.bf16.msra.mxu0 0
        %1505 = vmatprep.subr.bf16.mxu0 0
        %1506 = vmatpush1.bf16.msra.mxu0 0
        %1507 = vmatprep.subr.bf16.mxu0 0
        %1508 = vmatpush1.bf16.msra.mxu0 0
        %1509 = vmatprep.mubr.bf16.mxu0 0
        %1510 = vmatmul.mubr.bf16.gmra.mrb[0].mxu0 %v968
        %v1511 = vpop.f32.mrb[0].mxu0
        %v1512 = vadd.f32 0.0, %v1511
        %v1513 = vpop.f32.mrb[0].mxu0
        %v1514 = vpop.f32.mrb[0].mxu0
        %v1515 = vadd.f32 0.0, %v1514
        %v1516 = vpop.f32.mrb[0].mxu0
        %1517 = vmatprep.mubr.bf16.mxu0 0
        %1518 = vmatmul.mubr.bf16.gmra.mrb[0].mxu0 %v970
        %v1519 = vpop.f32.mrb[0].mxu0
        %v1520 = vadd.f32 0.0, %v1519
        %v1521 = vpop.f32.mrb[0].mxu0
        %v1522 = vpop.f32.mrb[0].mxu0
        %v1523 = vadd.f32 0.0, %v1522
        %v1524 = vpop.f32.mrb[0].mxu0
        %1525 = vmatprep.mubr.bf16.mxu0 0
        %1526 = vmatmul.mubr.bf16.gmra.mrb[0].mxu0 %v972
        %v1527 = vpop.f32.mrb[0].mxu0
        %v1528 = vadd.f32 0.0, %v1527
        %v1529 = vpop.f32.mrb[0].mxu0
        %v1530 = vpop.f32.mrb[0].mxu0
        %v1531 = vadd.f32 0.0, %v1530
        %v1532 = vpop.f32.mrb[0].mxu0
        %1533 = vmatprep.mubr.bf16.mxu0 0
        %1534 = vmatmul.mubr.bf16.gmra.mrb[0].mxu0 %v974
        %v1535 = vpop.f32.mrb[0].mxu0
        %v1536 = vadd.f32 0.0, %v1535
        %v1537 = vpop.f32.mrb[0].mxu0
        %v1538 = vpop.f32.mrb[0].mxu0
        %v1539 = vadd.f32 0.0, %v1538
        %v1540 = vpop.f32.mrb[0].mxu0
        %1541 = vmatprep.mubr.bf16.mxu0 0
        %1542 = vmatmul.mubr.bf16.gmra.mrb[0].mxu0 %v976
        %v1543 = vpop.f32.mrb[0].mxu0
        %v1544 = vadd.f32 0.0, %v1543
        %v1545 = vpop.f32.mrb[0].mxu0
        %v1546 = vpop.f32.mrb[0].mxu0
        %v1547 = vadd.f32 0.0, %v1546
        %v1548 = vpop.f32.mrb[0].mxu0
        %1549 = vmatprep.mubr.bf16.mxu0 0
        %1550 = vmatmul.mubr.bf16.gmra.mrb[0].mxu0 %v978
        %v1551 = vpop.f32.mrb[0].mxu0
        %v1552 = vadd.f32 0.0, %v1551
        %v1553 = vpop.f32.mrb[0].mxu0
        %v1554 = vpop.f32.mrb[0].mxu0
        %v1555 = vadd.f32 0.0, %v1554
        %v1556 = vpop.f32.mrb[0].mxu0
        %1557 = vmatprep.mubr.bf16.mxu0 0
        %1558 = vmatmul.mubr.bf16.gmra.mrb[0].mxu0 %v980
        %v1559 = vpop.f32.mrb[0].mxu0
        %v1560 = vadd.f32 0.0, %v1559
        %v1561 = vpop.f32.mrb[0].mxu0
        %v1562 = vpop.f32.mrb[0].mxu0
        %v1563 = vadd.f32 0.0, %v1562
        %v1564 = vpop.f32.mrb[0].mxu0
        %1565 = vmatprep.mubr.bf16.mxu0 0
        %1566 = vmatmul.mubr.bf16.gmra.mrb[0].mxu0 %v1472
        %v1567 = vpop.f32.mrb[0].mxu0
        %v1568 = vadd.f32 0.0, %v1567
        %v1569 = vpop.f32.mrb[0].mxu0
        %v1570 = vpop.f32.mrb[0].mxu0
        %v1571 = vadd.f32 0.0, %v1570
        %v1572 = vpop.f32.mrb[0].mxu0
        %1573 = vdwg.mxu0
        %v1574 = vadd.f32 %v1454, %v1512
        %v1575 = vadd.f32 %v1455, %v1515
        %v1576 = vadd.f32 %v1456, %v1520
        %v1577 = vadd.f32 %v1457, %v1523
        %v1578 = vadd.f32 %v1458, %v1528
        %v1579 = vadd.f32 %v1459, %v1531
        %v1580 = vadd.f32 %v1460, %v1536
        %v1581 = vadd.f32 %v1461, %v1539
        %v1582 = vadd.f32 %v1462, %v1544
        %v1583 = vadd.f32 %v1463, %v1547
        %v1584 = vadd.f32 %v1464, %v1552
        %v1585 = vadd.f32 %v1465, %v1555
        %v1586 = vadd.f32 %v1466, %v1560
        %v1587 = vadd.f32 %v1467, %v1563
        %v1588 = vadd.f32 %v1468, %v1568
        %v1589 = vadd.f32 %v1469, %v1571
        %s1590 = scalar_lea.vmem %s5, 10
        %v1591 = vld [vmem:[%s1590] sm:$0x3]
        %v1593 = vsel %vm696, %v961, 0
        %v1596 = vsel %vm982, %v1591, 0
        %1598 = vmatprep.subr.bf16.mxu0 0
        %1599 = vmatpush1.bf16.msra.mxu0 %v1596
        %1600 = vmatprep.subr.bf16.mxu0 0
        %1601 = vmatpush1.bf16.msra.mxu0 0
        %1602 = vmatprep.subr.bf16.mxu0 0
        %1603 = vmatpush1.bf16.msra.mxu0 0
        %1604 = vmatprep.subr.bf16.mxu0 0
        %1605 = vmatpush1.bf16.msra.mxu0 0
        %1606 = vmatprep.subr.bf16.mxu0 0
        %1607 = vmatpush1.bf16.msra.mxu0 0
        %1608 = vmatprep.subr.bf16.mxu0 0
        %1609 = vmatpush1.bf16.msra.mxu0 0
        %1610 = vmatprep.subr.bf16.mxu0 0
        %1611 = vmatpush1.bf16.msra.mxu0 0
        %1612 = vmatprep.subr.bf16.mxu0 0
        %1613 = vmatpush1.bf16.msra.mxu0 0
        %1614 = vmatprep.subr.bf16.mxu0 0
        %1615 = vmatpush1.bf16.msra.mxu0 0
        %1616 = vmatprep.subr.bf16.mxu0 0
        %1617 = vmatpush1.bf16.msra.mxu0 0
        %1618 = vmatprep.subr.bf16.mxu0 0
        %1619 = vmatpush1.bf16.msra.mxu0 0
        %1620 = vmatprep.subr.bf16.mxu0 0
        %1621 = vmatpush1.bf16.msra.mxu0 0
        %1622 = vmatprep.subr.bf16.mxu0 0
        %1623 = vmatpush1.bf16.msra.mxu0 0
        %1624 = vmatprep.subr.bf16.mxu0 0
        %1625 = vmatpush1.bf16.msra.mxu0 0
        %1626 = vmatprep.subr.bf16.mxu0 0
        %1627 = vmatpush1.bf16.msra.mxu0 0
        %1628 = vmatprep.subr.bf16.mxu0 0
        %1629 = vmatpush1.bf16.msra.mxu0 0
        %1630 = vmatprep.mubr.bf16.mxu0 0
        %1631 = vmatmul.mubr.bf16.gmra.mrb[0].mxu0 %v1213
        %v1632 = vpop.f32.mrb[0].mxu0
        %v1633 = vadd.f32 0.0, %v1632
        %v1634 = vpop.f32.mrb[0].mxu0
        %v1635 = vpop.f32.mrb[0].mxu0
        %v1636 = vadd.f32 0.0, %v1635
        %v1637 = vpop.f32.mrb[0].mxu0
        %1638 = vmatprep.mubr.bf16.mxu0 0
        %1639 = vmatmul.mubr.bf16.gmra.mrb[0].mxu0 %v1216
        %v1640 = vpop.f32.mrb[0].mxu0
        %v1641 = vadd.f32 0.0, %v1640
        %v1642 = vpop.f32.mrb[0].mxu0
        %v1643 = vpop.f32.mrb[0].mxu0
        %v1644 = vadd.f32 0.0, %v1643
        %v1645 = vpop.f32.mrb[0].mxu0
        %1646 = vmatprep.mubr.bf16.mxu0 0
        %1647 = vmatmul.mubr.bf16.gmra.mrb[0].mxu0 %v1219
        %v1648 = vpop.f32.mrb[0].mxu0
        %v1649 = vadd.f32 0.0, %v1648
        %v1650 = vpop.f32.mrb[0].mxu0
        %v1651 = vpop.f32.mrb[0].mxu0
        %v1652 = vadd.f32 0.0, %v1651
        %v1653 = vpop.f32.mrb[0].mxu0
        %1654 = vmatprep.mubr.bf16.mxu0 0
        %1655 = vmatmul.mubr.bf16.gmra.mrb[0].mxu0 %v1222
        %v1656 = vpop.f32.mrb[0].mxu0
        %v1657 = vadd.f32 0.0, %v1656
        %v1658 = vpop.f32.mrb[0].mxu0
        %v1659 = vpop.f32.mrb[0].mxu0
        %v1660 = vadd.f32 0.0, %v1659
        %v1661 = vpop.f32.mrb[0].mxu0
        %1662 = vmatprep.mubr.bf16.mxu0 0
        %1663 = vmatmul.mubr.bf16.gmra.mrb[0].mxu0 %v1225
        %v1664 = vpop.f32.mrb[0].mxu0
        %v1665 = vadd.f32 0.0, %v1664
        %v1666 = vpop.f32.mrb[0].mxu0
        %v1667 = vpop.f32.mrb[0].mxu0
        %v1668 = vadd.f32 0.0, %v1667
        %v1669 = vpop.f32.mrb[0].mxu0
        %1670 = vmatprep.mubr.bf16.mxu0 0
        %1671 = vmatmul.mubr.bf16.gmra.mrb[0].mxu0 %v1228
        %v1672 = vpop.f32.mrb[0].mxu0
        %v1673 = vadd.f32 0.0, %v1672
        %v1674 = vpop.f32.mrb[0].mxu0
        %v1675 = vpop.f32.mrb[0].mxu0
        %v1676 = vadd.f32 0.0, %v1675
        %v1677 = vpop.f32.mrb[0].mxu0
        %1678 = vmatprep.mubr.bf16.mxu0 0
        %1679 = vmatmul.mubr.bf16.gmra.mrb[0].mxu0 %v1231
        %v1680 = vpop.f32.mrb[0].mxu0
        %v1681 = vadd.f32 0.0, %v1680
        %v1682 = vpop.f32.mrb[0].mxu0
        %v1683 = vpop.f32.mrb[0].mxu0
        %v1684 = vadd.f32 0.0, %v1683
        %v1685 = vpop.f32.mrb[0].mxu0
        %1686 = vmatprep.mubr.bf16.mxu0 0
        %1687 = vmatmul.mubr.bf16.gmra.mrb[0].mxu0 %v1593
        %v1688 = vpop.f32.mrb[0].mxu0
        %v1689 = vadd.f32 0.0, %v1688
        %v1690 = vpop.f32.mrb[0].mxu0
        %v1691 = vpop.f32.mrb[0].mxu0
        %v1692 = vadd.f32 0.0, %v1691
        %v1693 = vpop.f32.mrb[0].mxu0
        %1694 = vdwg.mxu0
        %v1695 = vadd.f32 %v1574, %v1633
        %v1696 = vadd.f32 %v1575, %v1636
        %v1697 = vadd.f32 %v1576, %v1641
        %v1698 = vadd.f32 %v1577, %v1644
        %v1699 = vadd.f32 %v1578, %v1649
        %v1700 = vadd.f32 %v1579, %v1652
        %v1701 = vadd.f32 %v1580, %v1657
        %v1702 = vadd.f32 %v1581, %v1660
        %v1703 = vadd.f32 %v1582, %v1665
        %v1704 = vadd.f32 %v1583, %v1668
        %v1705 = vadd.f32 %v1584, %v1673
        %v1706 = vadd.f32 %v1585, %v1676
        %v1707 = vadd.f32 %v1586, %v1681
        %v1708 = vadd.f32 %v1587, %v1684
        %v1709 = vadd.f32 %v1588, %v1689
        %v1710 = vadd.f32 %v1589, %v1692
        %s1711 = scalar_lea.vmem %s5, 12
        %v1712 = vld [vmem:[%s1711] sm:$0x3]
        %v1714 = vsel %vm696, %v919, 0
        %v1717 = vsel %vm982, %v1712, 0
        %1719 = vmatprep.subr.bf16.mxu0 0
        %1720 = vmatpush1.bf16.msra.mxu0 %v1717
        %1721 = vmatprep.subr.bf16.mxu0 0
        %1722 = vmatpush1.bf16.msra.mxu0 0
        %1723 = vmatprep.subr.bf16.mxu0 0
        %1724 = vmatpush1.bf16.msra.mxu0 0
        %1725 = vmatprep.subr.bf16.mxu0 0
        %1726 = vmatpush1.bf16.msra.mxu0 0
        %1727 = vmatprep.subr.bf16.mxu0 0
        %1728 = vmatpush1.bf16.msra.mxu0 0
        %1729 = vmatprep.subr.bf16.mxu0 0
        %1730 = vmatpush1.bf16.msra.mxu0 0
        %1731 = vmatprep.subr.bf16.mxu0 0
        %1732 = vmatpush1.bf16.msra.mxu0 0
        %1733 = vmatprep.subr.bf16.mxu0 0
        %1734 = vmatpush1.bf16.msra.mxu0 0
        %1735 = vmatprep.subr.bf16.mxu0 0
        %1736 = vmatpush1.bf16.msra.mxu0 0
        %1737 = vmatprep.subr.bf16.mxu0 0
        %1738 = vmatpush1.bf16.msra.mxu0 0
        %1739 = vmatprep.subr.bf16.mxu0 0
        %1740 = vmatpush1.bf16.msra.mxu0 0
        %1741 = vmatprep.subr.bf16.mxu0 0
        %1742 = vmatpush1.bf16.msra.mxu0 0
        %1743 = vmatprep.subr.bf16.mxu0 0
        %1744 = vmatpush1.bf16.msra.mxu0 0
        %1745 = vmatprep.subr.bf16.mxu0 0
        %1746 = vmatpush1.bf16.msra.mxu0 0
        %1747 = vmatprep.subr.bf16.mxu0 0
        %1748 = vmatpush1.bf16.msra.mxu0 0
        %1749 = vmatprep.subr.bf16.mxu0 0
        %1750 = vmatpush1.bf16.msra.mxu0 0
        %1751 = vmatprep.mubr.bf16.mxu0 0
        %1752 = vmatmul.mubr.bf16.gmra.mrb[0].mxu0 %v1090
        %v1753 = vpop.f32.mrb[0].mxu0
        %v1754 = vadd.f32 0.0, %v1753
        %v1755 = vpop.f32.mrb[0].mxu0
        %v1756 = vpop.f32.mrb[0].mxu0
        %v1757 = vadd.f32 0.0, %v1756
        %v1758 = vpop.f32.mrb[0].mxu0
        %1759 = vmatprep.mubr.bf16.mxu0 0
        %1760 = vmatmul.mubr.bf16.gmra.mrb[0].mxu0 %v1093
        %v1761 = vpop.f32.mrb[0].mxu0
        %v1762 = vadd.f32 0.0, %v1761
        %v1763 = vpop.f32.mrb[0].mxu0
        %v1764 = vpop.f32.mrb[0].mxu0
        %v1765 = vadd.f32 0.0, %v1764
        %v1766 = vpop.f32.mrb[0].mxu0
        %1767 = vmatprep.mubr.bf16.mxu0 0
        %1768 = vmatmul.mubr.bf16.gmra.mrb[0].mxu0 %v1096
        %v1769 = vpop.f32.mrb[0].mxu0
        %v1770 = vadd.f32 0.0, %v1769
        %v1771 = vpop.f32.mrb[0].mxu0
        %v1772 = vpop.f32.mrb[0].mxu0
        %v1773 = vadd.f32 0.0, %v1772
        %v1774 = vpop.f32.mrb[0].mxu0
        %1775 = vmatprep.mubr.bf16.mxu0 0
        %1776 = vmatmul.mubr.bf16.gmra.mrb[0].mxu0 %v1099
        %v1777 = vpop.f32.mrb[0].mxu0
        %v1778 = vadd.f32 0.0, %v1777
        %v1779 = vpop.f32.mrb[0].mxu0
        %v1780 = vpop.f32.mrb[0].mxu0
        %v1781 = vadd.f32 0.0, %v1780
        %v1782 = vpop.f32.mrb[0].mxu0
        %1783 = vmatprep.mubr.bf16.mxu0 0
        %1784 = vmatmul.mubr.bf16.gmra.mrb[0].mxu0 %v1102
        %v1785 = vpop.f32.mrb[0].mxu0
        %v1786 = vadd.f32 0.0, %v1785
        %v1787 = vpop.f32.mrb[0].mxu0
        %v1788 = vpop.f32.mrb[0].mxu0
        %v1789 = vadd.f32 0.0, %v1788
        %v1790 = vpop.f32.mrb[0].mxu0
        %1791 = vmatprep.mubr.bf16.mxu0 0
        %1792 = vmatmul.mubr.bf16.gmra.mrb[0].mxu0 %v1105
        %v1793 = vpop.f32.mrb[0].mxu0
        %v1794 = vadd.f32 0.0, %v1793
        %v1795 = vpop.f32.mrb[0].mxu0
        %v1796 = vpop.f32.mrb[0].mxu0
        %v1797 = vadd.f32 0.0, %v1796
        %v1798 = vpop.f32.mrb[0].mxu0
        %1799 = vmatprep.mubr.bf16.mxu0 0
        %1800 = vmatmul.mubr.bf16.gmra.mrb[0].mxu0 %v1352
        %v1801 = vpop.f32.mrb[0].mxu0
        %v1802 = vadd.f32 0.0, %v1801
        %v1803 = vpop.f32.mrb[0].mxu0
        %v1804 = vpop.f32.mrb[0].mxu0
        %v1805 = vadd.f32 0.0, %v1804
        %v1806 = vpop.f32.mrb[0].mxu0
        %1807 = vmatprep.mubr.bf16.mxu0 0
        %1808 = vmatmul.mubr.bf16.gmra.mrb[0].mxu0 %v1714
        %v1809 = vpop.f32.mrb[0].mxu0
        %v1810 = vadd.f32 0.0, %v1809
        %v1811 = vpop.f32.mrb[0].mxu0
        %v1812 = vpop.f32.mrb[0].mxu0
        %v1813 = vadd.f32 0.0, %v1812
        %v1814 = vpop.f32.mrb[0].mxu0
        %1815 = vdwg.mxu0
        %v1816 = vadd.f32 %v1695, %v1754
        %v1817 = vadd.f32 %v1696, %v1757
        %v1818 = vadd.f32 %v1697, %v1762
        %v1819 = vadd.f32 %v1698, %v1765
        %v1820 = vadd.f32 %v1699, %v1770
        %v1821 = vadd.f32 %v1700, %v1773
        %v1822 = vadd.f32 %v1701, %v1778
        %v1823 = vadd.f32 %v1702, %v1781
        %v1824 = vadd.f32 %v1703, %v1786
        %v1825 = vadd.f32 %v1704, %v1789
        %v1826 = vadd.f32 %v1705, %v1794
        %v1827 = vadd.f32 %v1706, %v1797
        %v1828 = vadd.f32 %v1707, %v1802
        %v1829 = vadd.f32 %v1708, %v1805
        %v1830 = vadd.f32 %v1709, %v1810
        %v1831 = vadd.f32 %v1710, %v1813
        %s1832 = scalar_lea.vmem %s5, 14
        %v1833 = vld [vmem:[%s1832] sm:$0x3]
        %v1834 = vsel %vm696, %v826, 0
        %v1837 = vsel %vm982, %v1833, 0
        %1839 = vmatprep.subr.bf16.mxu0 0
        %1840 = vmatpush1.bf16.msra.mxu0 %v1837
        %1841 = vmatprep.subr.bf16.mxu0 0
        %1842 = vmatpush1.bf16.msra.mxu0 0
        %1843 = vmatprep.subr.bf16.mxu0 0
        %1844 = vmatpush1.bf16.msra.mxu0 0
        %1845 = vmatprep.subr.bf16.mxu0 0
        %1846 = vmatpush1.bf16.msra.mxu0 0
        %1847 = vmatprep.subr.bf16.mxu0 0
        %1848 = vmatpush1.bf16.msra.mxu0 0
        %1849 = vmatprep.subr.bf16.mxu0 0
        %1850 = vmatpush1.bf16.msra.mxu0 0
        %1851 = vmatprep.subr.bf16.mxu0 0
        %1852 = vmatpush1.bf16.msra.mxu0 0
        %1853 = vmatprep.subr.bf16.mxu0 0
        %1854 = vmatpush1.bf16.msra.mxu0 0
        %1855 = vmatprep.subr.bf16.mxu0 0
        %1856 = vmatpush1.bf16.msra.mxu0 0
        %1857 = vmatprep.subr.bf16.mxu0 0
        %1858 = vmatpush1.bf16.msra.mxu0 0
        %1859 = vmatprep.subr.bf16.mxu0 0
        %1860 = vmatpush1.bf16.msra.mxu0 0
        %1861 = vmatprep.subr.bf16.mxu0 0
        %1862 = vmatpush1.bf16.msra.mxu0 0
        %1863 = vmatprep.subr.bf16.mxu0 0
        %1864 = vmatpush1.bf16.msra.mxu0 0
        %1865 = vmatprep.subr.bf16.mxu0 0
        %1866 = vmatpush1.bf16.msra.mxu0 0
        %1867 = vmatprep.subr.bf16.mxu0 0
        %1868 = vmatpush1.bf16.msra.mxu0 0
        %1869 = vmatprep.subr.bf16.mxu0 0
        %1870 = vmatpush1.bf16.msra.mxu0 0
        %1871 = vmatprep.mubr.bf16.mxu0 0
        %1872 = vmatmul.mubr.bf16.gmra.mrb[0].mxu0 %v970
        %v1873 = vpop.f32.mrb[0].mxu0
        %v1874 = vadd.f32 0.0, %v1873
        %v1875 = vpop.f32.mrb[0].mxu0
        %v1876 = vpop.f32.mrb[0].mxu0
        %v1877 = vadd.f32 0.0, %v1876
        %v1878 = vpop.f32.mrb[0].mxu0
        %1879 = vmatprep.mubr.bf16.mxu0 0
        %1880 = vmatmul.mubr.bf16.gmra.mrb[0].mxu0 %v972
        %v1881 = vpop.f32.mrb[0].mxu0
        %v1882 = vadd.f32 0.0, %v1881
        %v1883 = vpop.f32.mrb[0].mxu0
        %v1884 = vpop.f32.mrb[0].mxu0
        %v1885 = vadd.f32 0.0, %v1884
        %v1886 = vpop.f32.mrb[0].mxu0
        %1887 = vmatprep.mubr.bf16.mxu0 0
        %1888 = vmatmul.mubr.bf16.gmra.mrb[0].mxu0 %v974
        %v1889 = vpop.f32.mrb[0].mxu0
        %v1890 = vadd.f32 0.0, %v1889
        %v1891 = vpop.f32.mrb[0].mxu0
        %v1892 = vpop.f32.mrb[0].mxu0
        %v1893 = vadd.f32 0.0, %v1892
        %v1894 = vpop.f32.mrb[0].mxu0
        %1895 = vmatprep.mubr.bf16.mxu0 0
        %1896 = vmatmul.mubr.bf16.gmra.mrb[0].mxu0 %v976
        %v1897 = vpop.f32.mrb[0].mxu0
        %v1898 = vadd.f32 0.0, %v1897
        %v1899 = vpop.f32.mrb[0].mxu0
        %v1900 = vpop.f32.mrb[0].mxu0
        %v1901 = vadd.f32 0.0, %v1900
        %v1902 = vpop.f32.mrb[0].mxu0
        %1903 = vmatprep.mubr.bf16.mxu0 0
        %1904 = vmatmul.mubr.bf16.gmra.mrb[0].mxu0 %v978
        %v1905 = vpop.f32.mrb[0].mxu0
        %v1906 = vadd.f32 0.0, %v1905
        %v1907 = vpop.f32.mrb[0].mxu0
        %v1908 = vpop.f32.mrb[0].mxu0
        %v1909 = vadd.f32 0.0, %v1908
        %v1910 = vpop.f32.mrb[0].mxu0
        %1911 = vmatprep.mubr.bf16.mxu0 0
        %1912 = vmatmul.mubr.bf16.gmra.mrb[0].mxu0 %v980
        %v1913 = vpop.f32.mrb[0].mxu0
        %v1914 = vadd.f32 0.0, %v1913
        %v1915 = vpop.f32.mrb[0].mxu0
        %v1916 = vpop.f32.mrb[0].mxu0
        %v1917 = vadd.f32 0.0, %v1916
        %v1918 = vpop.f32.mrb[0].mxu0
        %1919 = vmatprep.mubr.bf16.mxu0 0
        %1920 = vmatmul.mubr.bf16.gmra.mrb[0].mxu0 %v1472
        %v1921 = vpop.f32.mrb[0].mxu0
        %v1922 = vadd.f32 0.0, %v1921
        %v1923 = vpop.f32.mrb[0].mxu0
        %v1924 = vpop.f32.mrb[0].mxu0
        %v1925 = vadd.f32 0.0, %v1924
        %v1926 = vpop.f32.mrb[0].mxu0
        %1927 = vmatprep.mubr.bf16.mxu0 0
        %1928 = vmatmul.mubr.bf16.gmra.mrb[0].mxu0 %v1834
        %v1929 = vpop.f32.mrb[0].mxu0
        %v1930 = vadd.f32 0.0, %v1929
        %v1931 = vpop.f32.mrb[0].mxu0
        %v1932 = vpop.f32.mrb[0].mxu0
        %v1933 = vadd.f32 0.0, %v1932
        %v1934 = vpop.f32.mrb[0].mxu0
        %1935 = vdwg.mxu0
        %v1936 = vadd.f32 %v1816, %v1874
        %v1937 = vadd.f32 %v1817, %v1877
        %v1938 = vadd.f32 %v1818, %v1882
        %v1939 = vadd.f32 %v1819, %v1885
        %v1940 = vadd.f32 %v1820, %v1890
        %v1941 = vadd.f32 %v1821, %v1893
        %v1942 = vadd.f32 %v1822, %v1898
        %v1943 = vadd.f32 %v1823, %v1901
        %v1944 = vadd.f32 %v1824, %v1906
        %v1945 = vadd.f32 %v1825, %v1909
        %v1946 = vadd.f32 %v1826, %v1914
        %v1947 = vadd.f32 %v1827, %v1917
        %v1948 = vadd.f32 %v1828, %v1922
        %v1949 = vadd.f32 %v1829, %v1925
        %v1950 = vadd.f32 %v1830, %v1930
        %v1951 = vadd.f32 %v1831, %v1933
        %s1952 = scalar_lea.vmem %s5, 16
        %v1953 = vld [vmem:[%s1952] sm:$0x3]
        %v1955 = vsel %vm696, %v962, 0
        %v1958 = vsel %vm982, %v1953, 0
        %1960 = vmatprep.subr.bf16.mxu0 0
        %1961 = vmatpush1.bf16.msra.mxu0 %v1958
        %1962 = vmatprep.subr.bf16.mxu0 0
        %1963 = vmatpush1.bf16.msra.mxu0 0
        %1964 = vmatprep.subr.bf16.mxu0 0
        %1965 = vmatpush1.bf16.msra.mxu0 0
        %1966 = vmatprep.subr.bf16.mxu0 0
        %1967 = vmatpush1.bf16.msra.mxu0 0
        %1968 = vmatprep.subr.bf16.mxu0 0
        %1969 = vmatpush1.bf16.msra.mxu0 0
        %1970 = vmatprep.subr.bf16.mxu0 0
        %1971 = vmatpush1.bf16.msra.mxu0 0
        %1972 = vmatprep.subr.bf16.mxu0 0
        %1973 = vmatpush1.bf16.msra.mxu0 0
        %1974 = vmatprep.subr.bf16.mxu0 0
        %1975 = vmatpush1.bf16.msra.mxu0 0
        %1976 = vmatprep.subr.bf16.mxu0 0
        %1977 = vmatpush1.bf16.msra.mxu0 0
        %1978 = vmatprep.subr.bf16.mxu0 0
        %1979 = vmatpush1.bf16.msra.mxu0 0
        %1980 = vmatprep.subr.bf16.mxu0 0
        %1981 = vmatpush1.bf16.msra.mxu0 0
        %1982 = vmatprep.subr.bf16.mxu0 0
        %1983 = vmatpush1.bf16.msra.mxu0 0
        %1984 = vmatprep.subr.bf16.mxu0 0
        %1985 = vmatpush1.bf16.msra.mxu0 0
        %1986 = vmatprep.subr.bf16.mxu0 0
        %1987 = vmatpush1.bf16.msra.mxu0 0
        %1988 = vmatprep.subr.bf16.mxu0 0
        %1989 = vmatpush1.bf16.msra.mxu0 0
        %1990 = vmatprep.subr.bf16.mxu0 0
        %1991 = vmatpush1.bf16.msra.mxu0 0
        %1992 = vmatprep.mubr.bf16.mxu0 0
        %1993 = vmatmul.mubr.bf16.gmra.mrb[0].mxu0 %v1216
        %v1994 = vpop.f32.mrb[0].mxu0
        %v1995 = vadd.f32 0.0, %v1994
        %v1996 = vpop.f32.mrb[0].mxu0
        %v1997 = vpop.f32.mrb[0].mxu0
        %v1998 = vadd.f32 0.0, %v1997
        %v1999 = vpop.f32.mrb[0].mxu0
        %2000 = vmatprep.mubr.bf16.mxu0 0
        %2001 = vmatmul.mubr.bf16.gmra.mrb[0].mxu0 %v1219
        %v2002 = vpop.f32.mrb[0].mxu0
        %v2003 = vadd.f32 0.0, %v2002
        %v2004 = vpop.f32.mrb[0].mxu0
        %v2005 = vpop.f32.mrb[0].mxu0
        %v2006 = vadd.f32 0.0, %v2005
        %v2007 = vpop.f32.mrb[0].mxu0
        %2008 = vmatprep.mubr.bf16.mxu0 0
        %2009 = vmatmul.mubr.bf16.gmra.mrb[0].mxu0 %v1222
        %v2010 = vpop.f32.mrb[0].mxu0
        %v2011 = vadd.f32 0.0, %v2010
        %v2012 = vpop.f32.mrb[0].mxu0
        %v2013 = vpop.f32.mrb[0].mxu0
        %v2014 = vadd.f32 0.0, %v2013
        %v2015 = vpop.f32.mrb[0].mxu0
        %2016 = vmatprep.mubr.bf16.mxu0 0
        %2017 = vmatmul.mubr.bf16.gmra.mrb[0].mxu0 %v1225
        %v2018 = vpop.f32.mrb[0].mxu0
        %v2019 = vadd.f32 0.0, %v2018
        %v2020 = vpop.f32.mrb[0].mxu0
        %v2021 = vpop.f32.mrb[0].mxu0
        %v2022 = vadd.f32 0.0, %v2021
        %v2023 = vpop.f32.mrb[0].mxu0
        %2024 = vmatprep.mubr.bf16.mxu0 0
        %2025 = vmatmul.mubr.bf16.gmra.mrb[0].mxu0 %v1228
        %v2026 = vpop.f32.mrb[0].mxu0
        %v2027 = vadd.f32 0.0, %v2026
        %v2028 = vpop.f32.mrb[0].mxu0
        %v2029 = vpop.f32.mrb[0].mxu0
        %v2030 = vadd.f32 0.0, %v2029
        %v2031 = vpop.f32.mrb[0].mxu0
        %2032 = vmatprep.mubr.bf16.mxu0 0
        %2033 = vmatmul.mubr.bf16.gmra.mrb[0].mxu0 %v1231
        %v2034 = vpop.f32.mrb[0].mxu0
        %v2035 = vadd.f32 0.0, %v2034
        %v2036 = vpop.f32.mrb[0].mxu0
        %v2037 = vpop.f32.mrb[0].mxu0
        %v2038 = vadd.f32 0.0, %v2037
        %v2039 = vpop.f32.mrb[0].mxu0
        %2040 = vmatprep.mubr.bf16.mxu0 0
        %2041 = vmatmul.mubr.bf16.gmra.mrb[0].mxu0 %v1593
        %v2042 = vpop.f32.mrb[0].mxu0
        %v2043 = vadd.f32 0.0, %v2042
        %v2044 = vpop.f32.mrb[0].mxu0
        %v2045 = vpop.f32.mrb[0].mxu0
        %v2046 = vadd.f32 0.0, %v2045
        %v2047 = vpop.f32.mrb[0].mxu0
        %2048 = vmatprep.mubr.bf16.mxu0 0
        %2049 = vmatmul.mubr.bf16.gmra.mrb[0].mxu0 %v1955
        %v2050 = vpop.f32.mrb[0].mxu0
        %v2051 = vadd.f32 0.0, %v2050
        %v2052 = vpop.f32.mrb[0].mxu0
        %v2053 = vpop.f32.mrb[0].mxu0
        %v2054 = vadd.f32 0.0, %v2053
        %v2055 = vpop.f32.mrb[0].mxu0
        %2056 = vdwg.mxu0
        %v2057 = vadd.f32 %v1936, %v1995
        %v2058 = vadd.f32 %v1937, %v1998
        %v2059 = vadd.f32 %v1938, %v2003
        %v2060 = vadd.f32 %v1939, %v2006
        %v2061 = vadd.f32 %v1940, %v2011
        %v2062 = vadd.f32 %v1941, %v2014
        %v2063 = vadd.f32 %v1942, %v2019
        %v2064 = vadd.f32 %v1943, %v2022
        %v2065 = vadd.f32 %v1944, %v2027
        %v2066 = vadd.f32 %v1945, %v2030
        %v2067 = vadd.f32 %v1946, %v2035
        %v2068 = vadd.f32 %v1947, %v2038
        %v2069 = vadd.f32 %v1948, %v2043
        %v2070 = vadd.f32 %v1949, %v2046
        %v2071 = vadd.f32 %v1950, %v2051
        %v2072 = vadd.f32 %v1951, %v2054
        %v2073 = vld [vmem:[%s6] sm:$0x1]
        %v2075 = vlaneseq
        %v2076 = vshrl.u32 %v2075, 7
        %v2077 = vsub.s32 0, %v2076
        %v2078 = vrot.slane %v2073, %v2077
        %v2080 = vmul.f32 %v2057, %v2078
        %v2081 = vmul.f32 %v2058, %v2078
        %v2082 = vmul.f32 %v2059, %v2078
        %v2083 = vmul.f32 %v2060, %v2078
        %v2084 = vmul.f32 %v2061, %v2078
        %v2085 = vmul.f32 %v2062, %v2078
        %v2086 = vmul.f32 %v2063, %v2078
        %v2087 = vmul.f32 %v2064, %v2078
        %v2088 = vmul.f32 %v2065, %v2078
        %v2089 = vmul.f32 %v2066, %v2078
        %v2090 = vmul.f32 %v2067, %v2078
        %v2091 = vmul.f32 %v2068, %v2078
        %v2092 = vmul.f32 %v2069, %v2078
        %v2093 = vmul.f32 %v2070, %v2078
        %v2094 = vmul.f32 %v2071, %v2078
        %v2095 = vmul.f32 %v2072, %v2078
        %v2096 = vld [vmem:[%s7] sm:$0x1]
        %v2098 = vlaneseq
        %v2099 = vshrl.u32 %v2098, 7
        %v2100 = vsub.s32 0, %v2099
        %v2101 = vrot.slane %v2096, %v2100
        %v2103 = vadd.f32 %v2080, %v2101
        %v2104 = vadd.f32 %v2081, %v2101
        %v2105 = vadd.f32 %v2082, %v2101
        %v2106 = vadd.f32 %v2083, %v2101
        %v2107 = vadd.f32 %v2084, %v2101
        %v2108 = vadd.f32 %v2085, %v2101
        %v2109 = vadd.f32 %v2086, %v2101
        %v2110 = vadd.f32 %v2087, %v2101
        %v2111 = vadd.f32 %v2088, %v2101
        %v2112 = vadd.f32 %v2089, %v2101
        %v2113 = vadd.f32 %v2090, %v2101
        %v2114 = vadd.f32 %v2091, %v2101
        %v2115 = vadd.f32 %v2092, %v2101
        %v2116 = vadd.f32 %v2093, %v2101
        %v2117 = vadd.f32 %v2094, %v2101
        %v2118 = vadd.f32 %v2095, %v2101
        %v2119 = vmax.f32 %v2103, 0.0
        %v2120 = vmax.f32 %v2104, 0.0
        %v2121 = vmax.f32 %v2105, 0.0
        %v2122 = vmax.f32 %v2106, 0.0
        %v2123 = vmax.f32 %v2107, 0.0
        %v2124 = vmax.f32 %v2108, 0.0
        %v2125 = vmax.f32 %v2109, 0.0
        %v2126 = vmax.f32 %v2110, 0.0
        %v2127 = vmax.f32 %v2111, 0.0
        %v2128 = vmax.f32 %v2112, 0.0
        %v2129 = vmax.f32 %v2113, 0.0
        %v2130 = vmax.f32 %v2114, 0.0
        %v2131 = vmax.f32 %v2115, 0.0
        %v2132 = vmax.f32 %v2116, 0.0
        %v2133 = vmax.f32 %v2117, 0.0
        %v2134 = vmax.f32 %v2118, 0.0
        %v2135 = vpack.c.bf16 %v2120, %v2119
        %v2136 = vpack.c.bf16 %v2122, %v2121
        %v2137 = vpack.c.bf16 %v2124, %v2123
        %v2138 = vpack.c.bf16 %v2126, %v2125
        %v2139 = vpack.c.bf16 %v2128, %v2127
        %v2140 = vpack.c.bf16 %v2130, %v2129
        %v2141 = vpack.c.bf16 %v2132, %v2131
        %v2142 = vpack.c.bf16 %v2134, %v2133
        %v2143 = vld [vmem:[%s8] sm:$0x3]
        %v2145 = vsel %vm696, %v2135, 0
        %v2148 = vsel %vm696, %v2136, 0
        %v2151 = vsel %vm696, %v2137, 0
        %v2154 = vsel %vm696, %v2138, 0
        %v2157 = vsel %vm696, %v2139, 0
        %v2160 = vsel %vm696, %v2140, 0
        %v2163 = vsel %vm696, %v2141, 0
        %v2166 = vsel %vm696, %v2142, 0
        %v2169 = vsel %vm982, %v2143, 0
        %2171 = vmatprep.subr.bf16.mxu0 0
        %2172 = vmatpush1.bf16.msra.mxu0 %v2169
        %2173 = vmatprep.subr.bf16.mxu0 0
        %2174 = vmatpush1.bf16.msra.mxu0 0
        %2175 = vmatprep.subr.bf16.mxu0 0
        %2176 = vmatpush1.bf16.msra.mxu0 0
        %2177 = vmatprep.subr.bf16.mxu0 0
        %2178 = vmatpush1.bf16.msra.mxu0 0
        %2179 = vmatprep.subr.bf16.mxu0 0
        %2180 = vmatpush1.bf16.msra.mxu0 0
        %2181 = vmatprep.subr.bf16.mxu0 0
        %2182 = vmatpush1.bf16.msra.mxu0 0
        %2183 = vmatprep.subr.bf16.mxu0 0
        %2184 = vmatpush1.bf16.msra.mxu0 0
        %2185 = vmatprep.subr.bf16.mxu0 0
        %2186 = vmatpush1.bf16.msra.mxu0 0
        %2187 = vmatprep.subr.bf16.mxu0 0
        %2188 = vmatpush1.bf16.msra.mxu0 0
        %2189 = vmatprep.subr.bf16.mxu0 0
        %2190 = vmatpush1.bf16.msra.mxu0 0
        %2191 = vmatprep.subr.bf16.mxu0 0
        %2192 = vmatpush1.bf16.msra.mxu0 0
        %2193 = vmatprep.subr.bf16.mxu0 0
        %2194 = vmatpush1.bf16.msra.mxu0 0
        %2195 = vmatprep.subr.bf16.mxu0 0
        %2196 = vmatpush1.bf16.msra.mxu0 0
        %2197 = vmatprep.subr.bf16.mxu0 0
        %2198 = vmatpush1.bf16.msra.mxu0 0
        %2199 = vmatprep.subr.bf16.mxu0 0
        %2200 = vmatpush1.bf16.msra.mxu0 0
        %2201 = vmatprep.subr.bf16.mxu0 0
        %2202 = vmatpush1.bf16.msra.mxu0 0
        %2203 = vmatprep.mubr.bf16.mxu0 0
        %2204 = vmatmul.mubr.bf16.gmra.mrb[0].mxu0 %v2145
        %v2205 = vpop.f32.mrb[0].mxu0
        %v2206 = vadd.f32 0.0, %v2205
        %v2207 = vpop.f32.mrb[0].mxu0
        %v2208 = vpop.f32.mrb[0].mxu0
        %v2209 = vadd.f32 0.0, %v2208
        %v2210 = vpop.f32.mrb[0].mxu0
        %2211 = vmatprep.mubr.bf16.mxu0 0
        %2212 = vmatmul.mubr.bf16.gmra.mrb[0].mxu0 %v2148
        %v2213 = vpop.f32.mrb[0].mxu0
        %v2214 = vadd.f32 0.0, %v2213
        %v2215 = vpop.f32.mrb[0].mxu0
        %v2216 = vpop.f32.mrb[0].mxu0
        %v2217 = vadd.f32 0.0, %v2216
        %v2218 = vpop.f32.mrb[0].mxu0
        %2219 = vmatprep.mubr.bf16.mxu0 0
        %2220 = vmatmul.mubr.bf16.gmra.mrb[0].mxu0 %v2151
        %v2221 = vpop.f32.mrb[0].mxu0
        %v2222 = vadd.f32 0.0, %v2221
        %v2223 = vpop.f32.mrb[0].mxu0
        %v2224 = vpop.f32.mrb[0].mxu0
        %v2225 = vadd.f32 0.0, %v2224
        %v2226 = vpop.f32.mrb[0].mxu0
        %2227 = vmatprep.mubr.bf16.mxu0 0
        %2228 = vmatmul.mubr.bf16.gmra.mrb[0].mxu0 %v2154
        %v2229 = vpop.f32.mrb[0].mxu0
        %v2230 = vadd.f32 0.0, %v2229
        %v2231 = vpop.f32.mrb[0].mxu0
        %v2232 = vpop.f32.mrb[0].mxu0
        %v2233 = vadd.f32 0.0, %v2232
        %v2234 = vpop.f32.mrb[0].mxu0
        %2235 = vmatprep.mubr.bf16.mxu0 0
        %2236 = vmatmul.mubr.bf16.gmra.mrb[0].mxu0 %v2157
        %v2237 = vpop.f32.mrb[0].mxu0
        %v2238 = vadd.f32 0.0, %v2237
        %v2239 = vpop.f32.mrb[0].mxu0
        %v2240 = vpop.f32.mrb[0].mxu0
        %v2241 = vadd.f32 0.0, %v2240
        %v2242 = vpop.f32.mrb[0].mxu0
        %2243 = vmatprep.mubr.bf16.mxu0 0
        %2244 = vmatmul.mubr.bf16.gmra.mrb[0].mxu0 %v2160
        %v2245 = vpop.f32.mrb[0].mxu0
        %v2246 = vadd.f32 0.0, %v2245
        %v2247 = vpop.f32.mrb[0].mxu0
        %v2248 = vpop.f32.mrb[0].mxu0
        %v2249 = vadd.f32 0.0, %v2248
        %v2250 = vpop.f32.mrb[0].mxu0
        %2251 = vmatprep.mubr.bf16.mxu0 0
        %2252 = vmatmul.mubr.bf16.gmra.mrb[0].mxu0 %v2163
        %v2253 = vpop.f32.mrb[0].mxu0
        %v2254 = vadd.f32 0.0, %v2253
        %v2255 = vpop.f32.mrb[0].mxu0
        %v2256 = vpop.f32.mrb[0].mxu0
        %v2257 = vadd.f32 0.0, %v2256
        %v2258 = vpop.f32.mrb[0].mxu0
        %2259 = vmatprep.mubr.bf16.mxu0 0
        %2260 = vmatmul.mubr.bf16.gmra.mrb[0].mxu0 %v2166
        %v2261 = vpop.f32.mrb[0].mxu0
        %v2262 = vadd.f32 0.0, %v2261
        %v2263 = vpop.f32.mrb[0].mxu0
        %v2264 = vpop.f32.mrb[0].mxu0
        %v2265 = vadd.f32 0.0, %v2264
        %v2266 = vpop.f32.mrb[0].mxu0
        %2267 = vdwg.mxu0
        %v2268 = vld [vmem:[%s9] sm:$0x1]
        %v2270 = vlaneseq
        %v2271 = vshrl.u32 %v2270, 7
        %v2272 = vsub.s32 0, %v2271
        %v2273 = vrot.slane %v2268, %v2272
        %v2275 = vmul.f32 %v2206, %v2273
        %v2276 = vmul.f32 %v2209, %v2273
        %v2277 = vmul.f32 %v2214, %v2273
        %v2278 = vmul.f32 %v2217, %v2273
        %v2279 = vmul.f32 %v2222, %v2273
        %v2280 = vmul.f32 %v2225, %v2273
        %v2281 = vmul.f32 %v2230, %v2273
        %v2282 = vmul.f32 %v2233, %v2273
        %v2283 = vmul.f32 %v2238, %v2273
        %v2284 = vmul.f32 %v2241, %v2273
        %v2285 = vmul.f32 %v2246, %v2273
        %v2286 = vmul.f32 %v2249, %v2273
        %v2287 = vmul.f32 %v2254, %v2273
        %v2288 = vmul.f32 %v2257, %v2273
        %v2289 = vmul.f32 %v2262, %v2273
        %v2290 = vmul.f32 %v2265, %v2273
        %v2291 = vld [vmem:[%s10] sm:$0x1]
        %v2293 = vlaneseq
        %v2294 = vshrl.u32 %v2293, 7
        %v2295 = vsub.s32 0, %v2294
        %v2296 = vrot.slane %v2291, %v2295
        %v2298 = vadd.f32 %v2275, %v2296
        %v2299 = vadd.f32 %v2276, %v2296
        %v2300 = vadd.f32 %v2277, %v2296
        %v2301 = vadd.f32 %v2278, %v2296
        %v2302 = vadd.f32 %v2279, %v2296
        %v2303 = vadd.f32 %v2280, %v2296
        %v2304 = vadd.f32 %v2281, %v2296
        %v2305 = vadd.f32 %v2282, %v2296
        %v2306 = vadd.f32 %v2283, %v2296
        %v2307 = vadd.f32 %v2284, %v2296
        %v2308 = vadd.f32 %v2285, %v2296
        %v2309 = vadd.f32 %v2286, %v2296
        %v2310 = vadd.f32 %v2287, %v2296
        %v2311 = vadd.f32 %v2288, %v2296
        %v2312 = vadd.f32 %v2289, %v2296
        %v2313 = vadd.f32 %v2290, %v2296
        %v2314 = vld [vmem:[%s415] sm:$0xff]
        %v2315 = vld [vmem:[%s415 + $0x8] sm:$0xff]
        %v2316 = vld [vmem:[%s415 + $0x10] sm:$0xff]
        %v2317 = vld [vmem:[%s415 + $0x18] sm:$0xff]
        %v2318 = vld [vmem:[%s415 + $0x20] sm:$0xff]
        %v2319 = vld [vmem:[%s415 + $0x28] sm:$0xff]
        %v2320 = vld [vmem:[%s415 + $0x30] sm:$0xff]
        %v2321 = vld [vmem:[%s415 + $0x38] sm:$0xff]
        %v2322 = vld [vmem:[%s415 + $0x40] sm:$0xff]
        %v2323 = vld [vmem:[%s415 + $0x48] sm:$0xff]
        %v2324 = vld [vmem:[%s415 + $0x50] sm:$0xff]
        %v2325 = vld [vmem:[%s415 + $0x58] sm:$0xff]
        %v2326 = vld [vmem:[%s415 + $0x60] sm:$0xff]
        %v2327 = vld [vmem:[%s415 + $0x68] sm:$0xff]
        %v2328 = vld [vmem:[%s415 + $0x70] sm:$0xff]
        %v2329 = vld [vmem:[%s415 + $0x78] sm:$0xff]
        %v2330 = vadd.f32 %v2298, %v2314
        %v2331 = vadd.f32 %v2299, %v2315
        %v2332 = vadd.f32 %v2300, %v2316
        %v2333 = vadd.f32 %v2301, %v2317
        %v2334 = vadd.f32 %v2302, %v2318
        %v2335 = vadd.f32 %v2303, %v2319
        %v2336 = vadd.f32 %v2304, %v2320
        %v2337 = vadd.f32 %v2305, %v2321
        %v2338 = vadd.f32 %v2306, %v2322
        %v2339 = vadd.f32 %v2307, %v2323
        %v2340 = vadd.f32 %v2308, %v2324
        %v2341 = vadd.f32 %v2309, %v2325
        %v2342 = vadd.f32 %v2310, %v2326
        %v2343 = vadd.f32 %v2311, %v2327
        %v2344 = vadd.f32 %v2312, %v2328
        %v2345 = vadd.f32 %v2313, %v2329
        %v2346 = vmax.f32 %v2330, 0.0
        %v2347 = vmax.f32 %v2331, 0.0
        %v2348 = vmax.f32 %v2332, 0.0
        %v2349 = vmax.f32 %v2333, 0.0
        %v2350 = vmax.f32 %v2334, 0.0
        %v2351 = vmax.f32 %v2335, 0.0
        %v2352 = vmax.f32 %v2336, 0.0
        %v2353 = vmax.f32 %v2337, 0.0
        %v2354 = vmax.f32 %v2338, 0.0
        %v2355 = vmax.f32 %v2339, 0.0
        %v2356 = vmax.f32 %v2340, 0.0
        %v2357 = vmax.f32 %v2341, 0.0
        %v2358 = vmax.f32 %v2342, 0.0
        %v2359 = vmax.f32 %v2343, 0.0
        %v2360 = vmax.f32 %v2344, 0.0
        %v2361 = vmax.f32 %v2345, 0.0
        %2362 = vst.msk [vmem:[%s467] sm:$0xff] %vm503, %v2346
        %2363 = vst.msk [vmem:[%s467 + $0x8] sm:$0xff] %vm503, %v2347
        %2364 = vst.msk [vmem:[%s467 + $0x10] sm:$0xff] %vm503, %v2348
        %2365 = vst.msk [vmem:[%s467 + $0x18] sm:$0xff] %vm503, %v2349
        %2366 = vst.msk [vmem:[%s467 + $0x20] sm:$0xff] %vm503, %v2350
        %2367 = vst.msk [vmem:[%s467 + $0x28] sm:$0xff] %vm503, %v2351
        %2368 = vst.msk [vmem:[%s467 + $0x30] sm:$0xff] %vm503, %v2352
        %2369 = vst.msk [vmem:[%s467 + $0x38] sm:$0xff] %vm503, %v2353
        %2370 = vst.msk [vmem:[%s467 + $0x40] sm:$0xff] %vm503, %v2354
        %2371 = vst.msk [vmem:[%s467 + $0x48] sm:$0xff] %vm503, %v2355
        %2372 = vst.msk [vmem:[%s467 + $0x50] sm:$0xff] %vm503, %v2356
        %2373 = vst.msk [vmem:[%s467 + $0x58] sm:$0xff] %vm503, %v2357
        %2374 = vst.msk [vmem:[%s467 + $0x60] sm:$0xff] %vm503, %v2358
        %2375 = vst.msk [vmem:[%s467 + $0x68] sm:$0xff] %vm503, %v2359
        %2376 = vst.msk [vmem:[%s467 + $0x70] sm:$0xff] %vm503, %v2360
        %2377 = vst.msk [vmem:[%s467 + $0x78] sm:$0xff] %vm503, %v2361
        %s2378 = sand.u32 %s298, 1
        %s2379 = scalar_lea.sflag [#allocation5], %s2378
        %s2380 = sand.u32 %s298, 1
        %s2381 = smul.addr %s2380, 128
        %s2382 = scalar_lea.vmem [#allocation8], %s2381
        // Predicated region
        $region73: #{tpu_custom_call.1} parent=63 // pred_check
          %p2383 = pneg %p308
        $region74: #{tpu_custom_call.1} parent=63 // pred_check_branch
          %2385 = sbr.rel (%p2383) target = $region76
        $region75: #{tpu_custom_call.1} parent=63 // pred_region
          %s2386 = smul.u32 8, %s36
          %s2388 = ssub.s32 2048, 2048
          %2389 = vsyncadd %s2379, %s2388
          %s2390 = smul.addr %s2386, 2
          %s2391 = smul.addr %s35, 32
          %s2392 = sadd.s32 %s2390, %s2391
          %s2393 = smul.addr %s2392, 128
          %s2394 = scalar_lea.hbm %s11, %s2393
          %s2395 = sshll.u32 %s2382, 4
          %s2396 = int_to_ptr.vmem [resolvable:$true] %s2395
          %2401 = dma.vmem_to_hbm [thread:$0]  %s2396, 2048, %s2394, %s2379, 128, 128, 8
        $region76: #{tpu_custom_call.1} parent=63 // pred_fallthru
          _
      $region64: #{tpu_custom_call.1} parent=5 // pred_fallthru
        _
      %p2402 = scmp.le.s32.totalorder 2, %s26
      // Predicated region
      $region77: #{tpu_custom_call.1} parent=5 // pred_check
        %p2403 = pneg %p2402
      $region78: #{tpu_custom_call.1} parent=5 // pred_check_branch
        %2405 = sbr.rel (%p2403) target = $region80
      $region79: #{tpu_custom_call.1} parent=5 // pred_region
        %s2406 = ssub.s32 %s26, 2
        // Predicated region
        $region81: #{tpu_custom_call.1} parent=79 // pred_check
          %p2407 = pneg %p314
        $region82: #{tpu_custom_call.1} parent=79 // pred_check_branch
          %2409 = sbr.rel (%p2407) target = $region84
        $region83: #{tpu_custom_call.1} parent=79 // pred_region
          %s2410 = sand.u32 %s299, 1
          %s2411 = scalar_lea.sflag [#allocation5], %s2410
          %s2412 = sand.u32 %s299, 1
          %s2413 = smul.addr %s2412, 128
          %s2414 = scalar_lea.vmem [#allocation8], %s2413
          %2415 = dma.done %s2411, 2048
        $region84: #{tpu_custom_call.1} parent=79 // pred_fallthru
          _
      $region80: #{tpu_custom_call.1} parent=5 // pred_fallthru
        _
    $region6: #{tpu_custom_call.1} parent=1 // loop_footer
      %s30 = sadd.s32 1, %s26
    $region7: #{tpu_custom_call.1} parent=1 // loop_footer_branch
      %25 = sbr.rel target = $region3
    $region8: #{tpu_custom_call.1} parent=1 // loop_exit
      _
    %2416 = vsyncpa [#allocation4], 1
    %s2417 = scalar_lea.sflag [#allocation4], 1
    %2418 = vsyncpa %s2417, 1
    %2419 = vsyncpa [#allocation7], 1
    %s2420 = scalar_lea.sflag [#allocation7], 1
    %2421 = vsyncpa %s2420, 1
    %2422 = vsyncpa [#allocation5], 1
    %s2423 = scalar_lea.sflag [#allocation5], 1
    %2424 = vsyncpa %s2423, 1

</llo_original>
